<compile_context>
chip_gen: v7x
topology: tpu7x:2x2x1
jax: 0.10.0
libtpu: 0.0.40
codegen_flags: <defaults>
</compile_context>

<pallas_src>
from functools import partial

import jax
import jax.numpy as jnp
from jax.experimental import pallas as pl
from jax.experimental.pallas import tpu as pltpu

LANES = 128      # TPU vreg lane width; Cout is zero-padded up to a multiple of this
EPS = 1e-5       # BatchNorm2d default eps


# ----------------------------- Pallas kernels -------------------------------
def _conv1_shortcut_kernel(p_ref, xs_ref, w1_ref, we_ref,
                           y1_ref, ye_ref, s1_ref, q1_ref, se_ref, qe_ref):
    """Fused: conv1 (3x3 as matmul) + 1x1 shortcut conv on the same row tile,
    with per-channel sum / sum-of-squares accumulated for both BatchNorms."""
    @pl.when(pl.program_id(0) == 0)
    def _():
        s1_ref[...] = jnp.zeros_like(s1_ref)
        q1_ref[...] = jnp.zeros_like(q1_ref)
        se_ref[...] = jnp.zeros_like(se_ref)
        qe_ref[...] = jnp.zeros_like(qe_ref)

    y1 = jnp.dot(p_ref[...], w1_ref[...], preferred_element_type=jnp.float32)
    ye = jnp.dot(xs_ref[...], we_ref[...], preferred_element_type=jnp.float32)
    y1_ref[...] = y1
    ye_ref[...] = ye
    s1_ref[...] += jnp.sum(y1, axis=0, keepdims=True)
    q1_ref[...] += jnp.sum(y1 * y1, axis=0, keepdims=True)
    se_ref[...] += jnp.sum(ye, axis=0, keepdims=True)
    qe_ref[...] += jnp.sum(ye * ye, axis=0, keepdims=True)


def _conv_stats_kernel(p_ref, w_ref, y_ref, s_ref, q_ref):
    """conv2 (3x3 as matmul) with fused per-channel BN statistics."""
    @pl.when(pl.program_id(0) == 0)
    def _():
        s_ref[...] = jnp.zeros_like(s_ref)
        q_ref[...] = jnp.zeros_like(q_ref)

    y = jnp.dot(p_ref[...], w_ref[...], preferred_element_type=jnp.float32)
    y_ref[...] = y
    s_ref[...] += jnp.sum(y, axis=0, keepdims=True)
    q_ref[...] += jnp.sum(y * y, axis=0, keepdims=True)


def _affine_relu_kernel(x_ref, s_ref, t_ref, o_ref):
    # folded BN1 + ReLU: relu(x * scale + shift), lane-dense [TM, 128]
    o_ref[...] = jnp.maximum(x_ref[...] * s_ref[...] + t_ref[...], 0.0)


def _residual_kernel(a_ref, sa_ref, ta_ref, b_ref, sb_ref, tb_ref, o_ref):
    # relu( bn2(conv2_out) + bn_e(shortcut_out) ) with both BNs folded
    o_ref[...] = jnp.maximum(
        a_ref[...] * sa_ref[...] + ta_ref[...]
        + b_ref[...] * sb_ref[...] + tb_ref[...], 0.0)


# ------------------------------ kernel wrappers ------------------------------
def _pick_tm(m):
    # largest row tile (<= 1024) that divides M; for the toy M=512 this gives a
    # single grid step, removing per-step pipeline overhead.
    for tm in (1024, 512, 256, 128, 64, 32, 16, 8):
        if m % tm == 0:
            return tm
    raise ValueError(f"row count {m} must be a multiple of 8")


def _row_spec(tm, c):
    return pl.BlockSpec((tm, c), lambda i: (i, 0))


def _const_spec(r, c):
    return pl.BlockSpec((r, c), lambda i: (0, 0))


def conv1_and_shortcut(p1, xs, w1, we):
    M, K1 = p1.shape
    Cin = xs.shape[1]
    Cp = w1.shape[1]
    tm = _pick_tm(M)
    return pl.pallas_call(
        _conv1_shortcut_kernel,
        out_shape=(jax.ShapeDtypeStruct((M, Cp), jnp.float32),   # y1
                   jax.ShapeDtypeStruct((M, Cp), jnp.float32),   # ye (shortcut)
                   jax.ShapeDtypeStruct((1, Cp), jnp.float32),   # sum(y1)
                   jax.ShapeDtypeStruct((1, Cp), jnp.float32),   # sum(y1^2)
                   jax.ShapeDtypeStruct((1, Cp), jnp.float32),   # sum(ye)
                   jax.ShapeDtypeStruct((1, Cp), jnp.float32)),  # sum(ye^2)
        grid=(M // tm,),
        in_specs=[_row_spec(tm, K1), _row_spec(tm, Cin),
                  _const_spec(K1, Cp), _const_spec(Cin, Cp)],
        out_specs=(_row_spec(tm, Cp), _row_spec(tm, Cp),
                   _const_spec(1, Cp), _const_spec(1, Cp),
                   _const_spec(1, Cp), _const_spec(1, Cp)),
        compiler_params=pltpu.CompilerParams(
            dimension_semantics=("arbitrary",)),   # stats accumulate across row tiles
    )(p1, xs, w1, we)


def conv_with_stats(p, w):
    M, K = p.shape
    Cp = w.shape[1]
    tm = _pick_tm(M)
    return pl.pallas_call(
        _conv_stats_kernel,
        out_shape=(jax.ShapeDtypeStruct((M, Cp), jnp.float32),
                   jax.ShapeDtypeStruct((1, Cp), jnp.float32),
                   jax.ShapeDtypeStruct((1, Cp), jnp.float32)),
        grid=(M // tm,),
        in_specs=[_row_spec(tm, K), _const_spec(K, Cp)],
        out_specs=(_row_spec(tm, Cp), _const_spec(1, Cp), _const_spec(1, Cp)),
        compiler_params=pltpu.CompilerParams(
            dimension_semantics=("arbitrary",)),
    )(p, w)


def affine_relu(x, scale, shift):
    M, C = x.shape
    tm = _pick_tm(M)
    return pl.pallas_call(
        _affine_relu_kernel,
        out_shape=jax.ShapeDtypeStruct((M, C), jnp.float32),
        grid=(M // tm,),
        in_specs=[_row_spec(tm, C), _const_spec(1, C), _const_spec(1, C)],
        out_specs=_row_spec(tm, C),
        compiler_params=pltpu.CompilerParams(
            dimension_semantics=("parallel",)),
    )(x, scale, shift)


def residual_add_relu(a, sa, ta, b, sb, tb):
    M, C = a.shape
    tm = _pick_tm(M)
    return pl.pallas_call(
        _residual_kernel,
        out_shape=jax.ShapeDtypeStruct((M, C), jnp.float32),
        grid=(M // tm,),
        in_specs=[_row_spec(tm, C), _const_spec(1, C), _const_spec(1, C),
                  _row_spec(tm, C), _const_spec(1, C), _const_spec(1, C)],
        out_specs=_row_spec(tm, C),
        compiler_params=pltpu.CompilerParams(
            dimension_semantics=("parallel",)),
    )(a, sa, ta, b, sb, tb)


# --------------------------------- glue --------------------------------------
def im2col(x, ksize, stride, pad):
    """NHWC -> [N*Ho*Wo, ksize*ksize*C] patches, ordered (kh, kw, c)."""
    # TODO(synk): for large feature maps, replace this XLA im2col with an
    # in-kernel halo-DMA conv (9 shifted matmuls into a VMEM accumulator) to
    # cut conv input HBM traffic ~9x.
    N, H, W, C = x.shape
    xp = jnp.pad(x, ((0, 0), (pad, pad), (pad, pad), (0, 0)))
    Ho = (H + 2 * pad - ksize) // stride + 1
    Wo = (W + 2 * pad - ksize) // stride + 1
    cols = []
    for kh in range(ksize):
        for kw in range(ksize):
            cols.append(xp[:, kh:kh + stride * Ho:stride,
                           kw:kw + stride * Wo:stride, :])
    patches = jnp.stack(cols, axis=3)                 # [N, Ho, Wo, k*k, C]
    return patches.reshape(N * Ho * Wo, ksize * ksize * C), Ho, Wo


def _pad_lanes(a, cp):
    pad = cp - a.shape[-1]
    assert pad >= 0
    return jnp.pad(a, [(0, 0)] * (a.ndim - 1) + [(0, pad)])


def _fold_bn(s, q, count, gamma, beta):
    # Batch-stats BN folded to per-channel scale/shift applied to the bias-free
    # conv output y:  BN(y + bias) == scale*y + shift exactly, since the mean
    # subtraction cancels the bias.  (E[y^2]-mean^2 in f32 is adequate here;
    # use a shifted/two-pass scheme if activations have a huge mean.)
    mean = s / count
    var = q / count - mean * mean      # biased variance (training-mode BN)
    scale = gamma * jax.lax.rsqrt(var + EPS)
    shift = beta - mean * scale
    return scale, shift


@partial(jax.jit, static_argnums=2)
def resblk_forward(x_nchw, params, stride):
    x = jnp.transpose(x_nchw, (0, 2, 3, 1)).astype(jnp.float32)   # NHWC
    N, H, W, Cin = x.shape
    Cout = params["w1"].shape[-1]
    Cp = ((Cout + LANES - 1) // LANES) * LANES        # lane-dense channel pad

    # conv1 patches (3x3, pad 1, stride s) and the strided taps for the 1x1
    # shortcut conv share the same output-row space M = N*Ho*Wo.
    p1, Ho, Wo = im2col(x, 3, stride, 1)
    M = N * Ho * Wo
    xs = x[:, ::stride, ::stride, :].reshape(M, Cin)

    # weights -> matmul form, output channels zero-padded to 128 lanes,
    # MXU operands cast to bf16 (f32 accumulate in-kernel).
    w1 = _pad_lanes(params["w1"].reshape(9 * Cin, Cout), Cp).astype(jnp.bfloat16)
    we = _pad_lanes(params["we"], Cp).astype(jnp.bfloat16)
    w2 = _pad_lanes(params["w2"].reshape(9 * Cout, Cout), Cp).astype(jnp.bfloat16)
    g1 = _pad_lanes(params["g1"].reshape(1, -1), Cp)
    bt1 = _pad_lanes(params["bt1"].reshape(1, -1), Cp)
    g2 = _pad_lanes(params["g2"].reshape(1, -1), Cp)
    bt2 = _pad_lanes(params["bt2"].reshape(1, -1), Cp)
    ge = _pad_lanes(params["ge"].reshape(1, -1), Cp)
    bte = _pad_lanes(params["bte"].reshape(1, -1), Cp)
    # NOTE: conv biases b1/b2/be cancel exactly inside training-mode BN and are
    # therefore not applied anywhere (exact, not an approximation).

    # --- conv1 + 1x1 shortcut conv (single launch), BN stats fused ---
    y1, ye, s1, q1, se, qe = conv1_and_shortcut(
        p1.astype(jnp.bfloat16), xs.astype(jnp.bfloat16), w1, we)
    sc1, sh1 = _fold_bn(s1, q1, M, g1, bt1)
    sce, she = _fold_bn(se, qe, M, ge, bte)

    # --- h1 = relu(bn1(conv1(x))) : lane-dense elementwise pass ---
    h1 = affine_relu(y1, sc1, sh1)

    # --- conv2(h1), BN stats fused ---
    p2, _, _ = im2col(h1[:, :Cout].reshape(N, Ho, Wo, Cout), 3, 1, 1)
    y2, s2, q2 = conv_with_stats(p2.astype(jnp.bfloat16), w2)
    sc2, sh2 = _fold_bn(s2, q2, M, g2, bt2)

    # --- out = relu(bn2(conv2) + bn_e(shortcut)) ---
    out = residual_add_relu(y2, sc2, sh2, ye, sce, she)
    out = out[:, :Cout].reshape(N, Ho, Wo, Cout)
    return jnp.transpose(out, (0, 3, 1, 2))           # back to NCHW


# ---------------------------- pure-JAX reference ------------------------------
def resblk_reference(x_nchw, params, stride):
    x = jnp.transpose(x_nchw, (0, 2, 3, 1)).astype(jnp.float32)
    Cin = x.shape[-1]
    Cout = params["w1"].shape[-1]

    def conv(inp, w, b, s, pad):
        y = jax.lax.conv_general_dilated(
            inp, w, (s, s), [(pad, pad), (pad, pad)],
            dimension_numbers=("NHWC", "HWIO", "NHWC"))
        return y + b

    def bn(y, g, bt):
        m = jnp.mean(y, axis=(0, 1, 2))
        v = jnp.mean((y - m) ** 2, axis=(0, 1, 2))
        return (y - m) * jax.lax.rsqrt(v + EPS) * g + bt

    h = jax.nn.relu(bn(conv(x, params["w1"], params["b1"], stride, 1),
                       params["g1"], params["bt1"]))
    h = bn(conv(h, params["w2"], params["b2"], 1, 1), params["g2"], params["bt2"])
    e = bn(conv(x, params["we"].reshape(1, 1, Cin, Cout), params["be"], stride, 0),
           params["ge"], params["bte"])
    out = jax.nn.relu(h + e)
    return jnp.transpose(out, (0, 3, 1, 2))


# ----------------------------------- main -------------------------------------
if __name__ == "__main__":
    N, Cin, Cout, H, W, stride = 2, 4, 8, 16, 16, 1   # M = 2*16*16 = 512

    key = jax.random.PRNGKey(0)
    ks = jax.random.split(key, 13)
    params = {
        "w1": jax.random.normal(ks[0], (3, 3, Cin, Cout), jnp.float32) * 0.2,
        "b1": jax.random.normal(ks[1], (Cout,), jnp.float32) * 0.1,
        "g1": 1.0 + 0.1 * jax.random.normal(ks[2], (Cout,), jnp.float32),
        "bt1": 0.1 * jax.random.normal(ks[3], (Cout,), jnp.float32),
        "w2": jax.random.normal(ks[4], (3, 3, Cout, Cout), jnp.float32) * 0.15,
        "b2": jax.random.normal(ks[5], (Cout,), jnp.float32) * 0.1,
        "g2": 1.0 + 0.1 * jax.random.normal(ks[6], (Cout,), jnp.float32),
        "bt2": 0.1 * jax.random.normal(ks[7], (Cout,), jnp.float32),
        "we": jax.random.normal(ks[8], (Cin, Cout), jnp.float32) * 0.3,
        "be": jax.random.normal(ks[9], (Cout,), jnp.float32) * 0.1,
        "ge": 1.0 + 0.1 * jax.random.normal(ks[10], (Cout,), jnp.float32),
        "bte": 0.1 * jax.random.normal(ks[11], (Cout,), jnp.float32),
    }
    x = jax.random.normal(ks[12], (N, Cin, H, W), jnp.float32)

    out = resblk_forward(x, params, stride)
    out = jax.block_until_ready(out)

    ref = resblk_reference(x, params, stride)
    assert out.shape == (N, Cout, H // stride, W // stride), out.shape
    assert jnp.all(jnp.isfinite(out))
    err = jnp.abs(out - ref)
    # bf16 MXU inputs -> slightly looser max tolerance, plus a tight mean check
    assert jnp.allclose(out, ref, atol=1e-1, rtol=5e-2), float(jnp.max(err))
    assert float(jnp.mean(err)) < 2e-2, float(jnp.mean(err))

    print("KERNEL_OK")
</pallas_src>

<mosaic_0001>
module attributes {stable_mosaic.version = 11 : i64} {
  func.func @_conv1_shortcut_kernel(%arg0: i32, %arg1: memref<512x36xbf16, #tpu.memory_space<vmem>>, %arg2: memref<512x4xbf16, #tpu.memory_space<vmem>>, %arg3: memref<36x128xbf16, #tpu.memory_space<vmem>>, %arg4: memref<4x128xbf16, #tpu.memory_space<vmem>>, %arg5: memref<512x128xf32, #tpu.memory_space<vmem>>, %arg6: memref<512x128xf32, #tpu.memory_space<vmem>>, %arg7: memref<1x128xf32, #tpu.memory_space<vmem>>, %arg8: memref<1x128xf32, #tpu.memory_space<vmem>>, %arg9: memref<1x128xf32, #tpu.memory_space<vmem>>, %arg10: memref<1x128xf32, #tpu.memory_space<vmem>>) attributes {dimension_semantics = [#tpu.dimension_semantics<arbitrary>], iteration_bounds = array<i64: 1>, scalar_prefetch = 0 : i64, scratch_operands = 0 : i64, tpu.core_type = #tpu.core_type<tc>, window_params = [{transform_indices = @transform_0, window_bounds = array<i64: 512, 36>}, {transform_indices = @transform_1, window_bounds = array<i64: 512, 4>}, {pipeline_mode = #tpu.pipeline_mode<synchronous>, transform_indices = @transform_2, window_bounds = array<i64: 36, 128>}, {pipeline_mode = #tpu.pipeline_mode<synchronous>, transform_indices = @transform_3, window_bounds = array<i64: 4, 128>}, {transform_indices = @transform_4, window_bounds = array<i64: 512, 128>}, {transform_indices = @transform_5, window_bounds = array<i64: 512, 128>}, {pipeline_mode = #tpu.pipeline_mode<synchronous>, transform_indices = @transform_6, window_bounds = array<i64: 1, 128>}, {pipeline_mode = #tpu.pipeline_mode<synchronous>, transform_indices = @transform_7, window_bounds = array<i64: 1, 128>}, {pipeline_mode = #tpu.pipeline_mode<synchronous>, transform_indices = @transform_8, window_bounds = array<i64: 1, 128>}, {pipeline_mode = #tpu.pipeline_mode<synchronous>, transform_indices = @transform_9, window_bounds = array<i64: 1, 128>}]} {
    %c0_i32 = arith.constant 0 : i32
    %0 = arith.cmpi eq, %arg0, %c0_i32 : i32
    %1 = arith.extui %0 : i1 to i32
    %c0_i32_0 = arith.constant 0 : i32
    %2 = arith.cmpi ne, %1, %c0_i32_0 : i32
    scf.if %2 {
      %cst_33 = arith.constant 0.000000e+00 : f32
      %33 = vector.broadcast %cst_33 : f32 to vector<1x128xf32>
      %c0_34 = arith.constant 0 : index
      %c0_35 = arith.constant 0 : index
      %34 = vector.load %arg7[%c0_34, %c0_35] : memref<1x128xf32, #tpu.memory_space<vmem>>, vector<1x128xf32>
      tpu.vector_store %arg7[%c0_34, %c0_35], %33 {strides = array<i32>} : memref<1x128xf32, #tpu.memory_space<vmem>>, vector<1x128xf32>,
      %cst_36 = arith.constant 0.000000e+00 : f32
      %35 = vector.broadcast %cst_36 : f32 to vector<1x128xf32>
      %c0_37 = arith.constant 0 : index
      %c0_38 = arith.constant 0 : index
      %36 = vector.load %arg8[%c0_37, %c0_38] : memref<1x128xf32, #tpu.memory_space<vmem>>, vector<1x128xf32>
      tpu.vector_store %arg8[%c0_37, %c0_38], %35 {strides = array<i32>} : memref<1x128xf32, #tpu.memory_space<vmem>>, vector<1x128xf32>,
      %cst_39 = arith.constant 0.000000e+00 : f32
      %37 = vector.broadcast %cst_39 : f32 to vector<1x128xf32>
      %c0_40 = arith.constant 0 : index
      %c0_41 = arith.constant 0 : index
      %38 = vector.load %arg9[%c0_40, %c0_41] : memref<1x128xf32, #tpu.memory_space<vmem>>, vector<1x128xf32>
      tpu.vector_store %arg9[%c0_40, %c0_41], %37 {strides = array<i32>} : memref<1x128xf32, #tpu.memory_space<vmem>>, vector<1x128xf32>,
      %cst_42 = arith.constant 0.000000e+00 : f32
      %39 = vector.broadcast %cst_42 : f32 to vector<1x128xf32>
      %c0_43 = arith.constant 0 : index
      %c0_44 = arith.constant 0 : index
      %40 = vector.load %arg10[%c0_43, %c0_44] : memref<1x128xf32, #tpu.memory_space<vmem>>, vector<1x128xf32>
      tpu.vector_store %arg10[%c0_43, %c0_44], %39 {strides = array<i32>} : memref<1x128xf32, #tpu.memory_space<vmem>>, vector<1x128xf32>,
    } else {
    }
    %c0 = arith.constant 0 : index
    %c0_1 = arith.constant 0 : index
    %3 = vector.load %arg1[%c0, %c0_1] : memref<512x36xbf16, #tpu.memory_space<vmem>>, vector<512x36xbf16>
    %c0_2 = arith.constant 0 : index
    %c0_3 = arith.constant 0 : index
    %4 = vector.load %arg3[%c0_2, %c0_3] : memref<36x128xbf16, #tpu.memory_space<vmem>>, vector<36x128xbf16>
    %cst = arith.constant dense<0.000000e+00> : vector<512x128xf32>
    %5 = tpu.matmul %3, %4, %cst {dimension_numbers = #tpu.dot_dimension_numbers<[1], [0], [0], [1], [0, 0, 1, 1], [], []>} : vector<512x36xbf16>, vector<36x128xbf16>, vector<512x128xf32> -> vector<512x128xf32>
    %c0_4 = arith.constant 0 : index
    %c0_5 = arith.constant 0 : index
    %6 = vector.load %arg2[%c0_4, %c0_5] : memref<512x4xbf16, #tpu.memory_space<vmem>>, vector<512x4xbf16>
    %c0_6 = arith.constant 0 : index
    %c0_7 = arith.constant 0 : index
    %7 = vector.load %arg4[%c0_6, %c0_7] : memref<4x128xbf16, #tpu.memory_space<vmem>>, vector<4x128xbf16>
    %cst_8 = arith.constant dense<0.000000e+00> : vector<512x128xf32>
    %8 = tpu.matmul %6, %7, %cst_8 {dimension_numbers = #tpu.dot_dimension_numbers<[1], [0], [0], [1], [0, 0, 1, 1], [], []>} : vector<512x4xbf16>, vector<4x128xbf16>, vector<512x128xf32> -> vector<512x128xf32>
    %c0_9 = arith.constant 0 : index
    %c0_10 = arith.constant 0 : index
    %9 = vector.load %arg5[%c0_9, %c0_10] : memref<512x128xf32, #tpu.memory_space<vmem>>, vector<512x128xf32>
    tpu.vector_store %arg5[%c0_9, %c0_10], %5 {strides = array<i32>} : memref<512x128xf32, #tpu.memory_space<vmem>>, vector<512x128xf32>,
    %c0_11 = arith.constant 0 : index
    %c0_12 = arith.constant 0 : index
    %10 = vector.load %arg6[%c0_11, %c0_12] : memref<512x128xf32, #tpu.memory_space<vmem>>, vector<512x128xf32>
    tpu.vector_store %arg6[%c0_11, %c0_12], %8 {strides = array<i32>} : memref<512x128xf32, #tpu.memory_space<vmem>>, vector<512x128xf32>,
    %c0_13 = arith.constant 0 : index
    %c0_14 = arith.constant 0 : index
    %11 = vector.load %arg7[%c0_13, %c0_14] : memref<1x128xf32, #tpu.memory_space<vmem>>, vector<1x128xf32>
    %cst_15 = arith.constant dense<0.000000e+00> : vector<128xf32>
    %12 = vector.multi_reduction <add>, %5, %cst_15 [0] : vector<512x128xf32> to vector<128xf32>
    %13 = vector.shape_cast %12 : vector<128xf32> to vector<1x128xf32>
    %14 = arith.addf %11, %13 : vector<1x128xf32>
    %c0_16 = arith.constant 0 : index
    %c0_17 = arith.constant 0 : index
    %15 = vector.load %arg7[%c0_16, %c0_17] : memref<1x128xf32, #tpu.memory_space<vmem>>, vector<1x128xf32>
    tpu.vector_store %arg7[%c0_16, %c0_17], %14 {strides = array<i32>} : memref<1x128xf32, #tpu.memory_space<vmem>>, vector<1x128xf32>,
    %c0_18 = arith.constant 0 : index
    %c0_19 = arith.constant 0 : index
    %16 = vector.load %arg8[%c0_18, %c0_19] : memref<1x128xf32, #tpu.memory_space<vmem>>, vector<1x128xf32>
    %17 = arith.mulf %5, %5 : vector<512x128xf32>
    %cst_20 = arith.constant dense<0.000000e+00> : vector<128xf32>
    %18 = vector.multi_reduction <add>, %17, %cst_20 [0] : vector<512x128xf32> to vector<128xf32>
    %19 = vector.shape_cast %18 : vector<128xf32> to vector<1x128xf32>
    %20 = arith.addf %16, %19 : vector<1x128xf32>
    %c0_21 = arith.constant 0 : index
    %c0_22 = arith.constant 0 : index
    %21 = vector.load %arg8[%c0_21, %c0_22] : memref<1x128xf32, #tpu.memory_space<vmem>>, vector<1x128xf32>
    tpu.vector_store %arg8[%c0_21, %c0_22], %20 {strides = array<i32>} : memref<1x128xf32, #tpu.memory_space<vmem>>, vector<1x128xf32>,
    %c0_23 = arith.constant 0 : index
    %c0_24 = arith.constant 0 : index
    %22 = vector.load %arg9[%c0_23, %c0_24] : memref<1x128xf32, #tpu.memory_space<vmem>>, vector<1x128xf32>
    %cst_25 = arith.constant dense<0.000000e+00> : vector<128xf32>
    %23 = vector.multi_reduction <add>, %8, %cst_25 [0] : vector<512x128xf32> to vector<128xf32>
    %24 = vector.shape_cast %23 : vector<128xf32> to vector<1x128xf32>
    %25 = arith.addf %22, %24 : vector<1x128xf32>
    %c0_26 = arith.constant 0 : index
    %c0_27 = arith.constant 0 : index
    %26 = vector.load %arg9[%c0_26, %c0_27] : memref<1x128xf32, #tpu.memory_space<vmem>>, vector<1x128xf32>
    tpu.vector_store %arg9[%c0_26, %c0_27], %25 {strides = array<i32>} : memref<1x128xf32, #tpu.memory_space<vmem>>, vector<1x128xf32>,
    %c0_28 = arith.constant 0 : index
    %c0_29 = arith.constant 0 : index
    %27 = vector.load %arg10[%c0_28, %c0_29] : memref<1x128xf32, #tpu.memory_space<vmem>>, vector<1x128xf32>
    %28 = arith.mulf %8, %8 : vector<512x128xf32>
    %cst_30 = arith.constant dense<0.000000e+00> : vector<128xf32>
    %29 = vector.multi_reduction <add>, %28, %cst_30 [0] : vector<512x128xf32> to vector<128xf32>
    %30 = vector.shape_cast %29 : vector<128xf32> to vector<1x128xf32>
    %31 = arith.addf %27, %30 : vector<1x128xf32>
    %c0_31 = arith.constant 0 : index
    %c0_32 = arith.constant 0 : index
    %32 = vector.load %arg10[%c0_31, %c0_32] : memref<1x128xf32, #tpu.memory_space<vmem>>, vector<1x128xf32>
    tpu.vector_store %arg10[%c0_31, %c0_32], %31 {strides = array<i32>} : memref<1x128xf32, #tpu.memory_space<vmem>>, vector<1x128xf32>,
    return
  }
  func.func @transform_0(%arg0: i32) -> (i32, i32) {
    %c0_i32 = arith.constant 0 : i32
    %c0_i32_0 = arith.constant 0 : i32
    return %arg0, %c0_i32 : i32, i32
  }
  func.func @transform_1(%arg0: i32) -> (i32, i32) {
    %c0_i32 = arith.constant 0 : i32
    %c0_i32_0 = arith.constant 0 : i32
    return %arg0, %c0_i32 : i32, i32
  }
  func.func @transform_2(%arg0: i32) -> (i32, i32) {
    %c0_i32 = arith.constant 0 : i32
    %c0_i32_0 = arith.constant 0 : i32
    %c0_i32_1 = arith.constant 0 : i32
    return %c0_i32, %c0_i32_0 : i32, i32
  }
  func.func @transform_3(%arg0: i32) -> (i32, i32) {
    %c0_i32 = arith.constant 0 : i32
    %c0_i32_0 = arith.constant 0 : i32
    %c0_i32_1 = arith.constant 0 : i32
    return %c0_i32, %c0_i32_0 : i32, i32
  }
  func.func @transform_4(%arg0: i32) -> (i32, i32) {
    %c0_i32 = arith.constant 0 : i32
    %c0_i32_0 = arith.constant 0 : i32
    return %arg0, %c0_i32 : i32, i32
  }
  func.func @transform_5(%arg0: i32) -> (i32, i32) {
    %c0_i32 = arith.constant 0 : i32
    %c0_i32_0 = arith.constant 0 : i32
    return %arg0, %c0_i32 : i32, i32
  }
  func.func @transform_6(%arg0: i32) -> (i32, i32) {
    %c0_i32 = arith.constant 0 : i32
    %c0_i32_0 = arith.constant 0 : i32
    %c0_i32_1 = arith.constant 0 : i32
    return %c0_i32, %c0_i32_0 : i32, i32
  }
  func.func @transform_7(%arg0: i32) -> (i32, i32) {
    %c0_i32 = arith.constant 0 : i32
    %c0_i32_0 = arith.constant 0 : i32
    %c0_i32_1 = arith.constant 0 : i32
    return %c0_i32, %c0_i32_0 : i32, i32
  }
  func.func @transform_8(%arg0: i32) -> (i32, i32) {
    %c0_i32 = arith.constant 0 : i32
    %c0_i32_0 = arith.constant 0 : i32
    %c0_i32_1 = arith.constant 0 : i32
    return %c0_i32, %c0_i32_0 : i32, i32
  }
  func.func @transform_9(%arg0: i32) -> (i32, i32) {
    %c0_i32 = arith.constant 0 : i32
    %c0_i32_0 = arith.constant 0 : i32
    %c0_i32_1 = arith.constant 0 : i32
    return %c0_i32, %c0_i32_0 : i32, i32
  }
}

module attributes {stable_mosaic.version = 11 : i64} {
  func.func @_affine_relu_kernel(%arg0: i32, %arg1: memref<512x128xf32, #tpu.memory_space<vmem>>, %arg2: memref<1x128xf32, #tpu.memory_space<vmem>>, %arg3: memref<1x128xf32, #tpu.memory_space<vmem>>, %arg4: memref<512x128xf32, #tpu.memory_space<vmem>>) attributes {dimension_semantics = [#tpu.dimension_semantics<parallel>], iteration_bounds = array<i64: 1>, scalar_prefetch = 0 : i64, scratch_operands = 0 : i64, tpu.core_type = #tpu.core_type<tc>, window_params = [{transform_indices = @transform_0, window_bounds = array<i64: 512, 128>}, {pipeline_mode = #tpu.pipeline_mode<synchronous>, transform_indices = @transform_1, window_bounds = array<i64: 1, 128>}, {pipeline_mode = #tpu.pipeline_mode<synchronous>, transform_indices = @transform_2, window_bounds = array<i64: 1, 128>}, {transform_indices = @transform_3, window_bounds = array<i64: 512, 128>}]} {
    %c0 = arith.constant 0 : index
    %c0_0 = arith.constant 0 : index
    %0 = vector.load %arg1[%c0, %c0_0] : memref<512x128xf32, #tpu.memory_space<vmem>>, vector<512x128xf32>
    %c0_1 = arith.constant 0 : index
    %c0_2 = arith.constant 0 : index
    %1 = vector.load %arg2[%c0_1, %c0_2] : memref<1x128xf32, #tpu.memory_space<vmem>>, vector<1x128xf32>
    %2 = vector.broadcast %1 : vector<1x128xf32> to vector<512x128xf32>
    %3 = arith.mulf %0, %2 : vector<512x128xf32>
    %c0_3 = arith.constant 0 : index
    %c0_4 = arith.constant 0 : index
    %4 = vector.load %arg3[%c0_3, %c0_4] : memref<1x128xf32, #tpu.memory_space<vmem>>, vector<1x128xf32>
    %5 = vector.broadcast %4 : vector<1x128xf32> to vector<512x128xf32>
    %6 = arith.addf %3, %5 : vector<512x128xf32>
    %cst = arith.constant 0.000000e+00 : f32
    %7 = vector.broadcast %cst : f32 to vector<512x128xf32>
    %8 = arith.maximumf %6, %7 : vector<512x128xf32>
    %c0_5 = arith.constant 0 : index
    %c0_6 = arith.constant 0 : index
    %9 = vector.load %arg4[%c0_5, %c0_6] : memref<512x128xf32, #tpu.memory_space<vmem>>, vector<512x128xf32>
    tpu.vector_store %arg4[%c0_5, %c0_6], %8 {strides = array<i32>} : memref<512x128xf32, #tpu.memory_space<vmem>>, vector<512x128xf32>,
    return
  }
  func.func @transform_0(%arg0: i32) -> (i32, i32) {
    %c0_i32 = arith.constant 0 : i32
    %c0_i32_0 = arith.constant 0 : i32
    return %arg0, %c0_i32 : i32, i32
  }
  func.func @transform_1(%arg0: i32) -> (i32, i32) {
    %c0_i32 = arith.constant 0 : i32
    %c0_i32_0 = arith.constant 0 : i32
    %c0_i32_1 = arith.constant 0 : i32
    return %c0_i32, %c0_i32_0 : i32, i32
  }
  func.func @transform_2(%arg0: i32) -> (i32, i32) {
    %c0_i32 = arith.constant 0 : i32
    %c0_i32_0 = arith.constant 0 : i32
    %c0_i32_1 = arith.constant 0 : i32
    return %c0_i32, %c0_i32_0 : i32, i32
  }
  func.func @transform_3(%arg0: i32) -> (i32, i32) {
    %c0_i32 = arith.constant 0 : i32
    %c0_i32_0 = arith.constant 0 : i32
    return %arg0, %c0_i32 : i32, i32
  }
}

module attributes {stable_mosaic.version = 11 : i64} {
  func.func @_conv_stats_kernel(%arg0: i32, %arg1: memref<512x72xbf16, #tpu.memory_space<vmem>>, %arg2: memref<72x128xbf16, #tpu.memory_space<vmem>>, %arg3: memref<512x128xf32, #tpu.memory_space<vmem>>, %arg4: memref<1x128xf32, #tpu.memory_space<vmem>>, %arg5: memref<1x128xf32, #tpu.memory_space<vmem>>) attributes {dimension_semantics = [#tpu.dimension_semantics<arbitrary>], iteration_bounds = array<i64: 1>, scalar_prefetch = 0 : i64, scratch_operands = 0 : i64, tpu.core_type = #tpu.core_type<tc>, window_params = [{transform_indices = @transform_0, window_bounds = array<i64: 512, 72>}, {pipeline_mode = #tpu.pipeline_mode<synchronous>, transform_indices = @transform_1, window_bounds = array<i64: 72, 128>}, {transform_indices = @transform_2, window_bounds = array<i64: 512, 128>}, {pipeline_mode = #tpu.pipeline_mode<synchronous>, transform_indices = @transform_3, window_bounds = array<i64: 1, 128>}, {pipeline_mode = #tpu.pipeline_mode<synchronous>, transform_indices = @transform_4, window_bounds = array<i64: 1, 128>}]} {
    %c0_i32 = arith.constant 0 : i32
    %0 = arith.cmpi eq, %arg0, %c0_i32 : i32
    %1 = arith.extui %0 : i1 to i32
    %c0_i32_0 = arith.constant 0 : i32
    %2 = arith.cmpi ne, %1, %c0_i32_0 : i32
    scf.if %2 {
      %cst_16 = arith.constant 0.000000e+00 : f32
      %18 = vector.broadcast %cst_16 : f32 to vector<1x128xf32>
      %c0_17 = arith.constant 0 : index
      %c0_18 = arith.constant 0 : index
      %19 = vector.load %arg4[%c0_17, %c0_18] : memref<1x128xf32, #tpu.memory_space<vmem>>, vector<1x128xf32>
      tpu.vector_store %arg4[%c0_17, %c0_18], %18 {strides = array<i32>} : memref<1x128xf32, #tpu.memory_space<vmem>>, vector<1x128xf32>,
      %cst_19 = arith.constant 0.000000e+00 : f32
      %20 = vector.broadcast %cst_19 : f32 to vector<1x128xf32>
      %c0_20 = arith.constant 0 : index
      %c0_21 = arith.constant 0 : index
      %21 = vector.load %arg5[%c0_20, %c0_21] : memref<1x128xf32, #tpu.memory_space<vmem>>, vector<1x128xf32>
      tpu.vector_store %arg5[%c0_20, %c0_21], %20 {strides = array<i32>} : memref<1x128xf32, #tpu.memory_space<vmem>>, vector<1x128xf32>,
    } else {
    }
    %c0 = arith.constant 0 : index
    %c0_1 = arith.constant 0 : index
    %3 = vector.load %arg1[%c0, %c0_1] : memref<512x72xbf16, #tpu.memory_space<vmem>>, vector<512x72xbf16>
    %c0_2 = arith.constant 0 : index
    %c0_3 = arith.constant 0 : index
    %4 = vector.load %arg2[%c0_2, %c0_3] : memref<72x128xbf16, #tpu.memory_space<vmem>>, vector<72x128xbf16>
    %cst = arith.constant dense<0.000000e+00> : vector<512x128xf32>
    %5 = tpu.matmul %3, %4, %cst {dimension_numbers = #tpu.dot_dimension_numbers<[1], [0], [0], [1], [0, 0, 1, 1], [], []>} : vector<512x72xbf16>, vector<72x128xbf16>, vector<512x128xf32> -> vector<512x128xf32>
    %c0_4 = arith.constant 0 : index
    %c0_5 = arith.constant 0 : index
    %6 = vector.load %arg3[%c0_4, %c0_5] : memref<512x128xf32, #tpu.memory_space<vmem>>, vector<512x128xf32>
    tpu.vector_store %arg3[%c0_4, %c0_5], %5 {strides = array<i32>} : memref<512x128xf32, #tpu.memory_space<vmem>>, vector<512x128xf32>,
    %c0_6 = arith.constant 0 : index
    %c0_7 = arith.constant 0 : index
    %7 = vector.load %arg4[%c0_6, %c0_7] : memref<1x128xf32, #tpu.memory_space<vmem>>, vector<1x128xf32>
    %cst_8 = arith.constant dense<0.000000e+00> : vector<128xf32>
    %8 = vector.multi_reduction <add>, %5, %cst_8 [0] : vector<512x128xf32> to vector<128xf32>
    %9 = vector.shape_cast %8 : vector<128xf32> to vector<1x128xf32>
    %10 = arith.addf %7, %9 : vector<1x128xf32>
    %c0_9 = arith.constant 0 : index
    %c0_10 = arith.constant 0 : index
    %11 = vector.load %arg4[%c0_9, %c0_10] : memref<1x128xf32, #tpu.memory_space<vmem>>, vector<1x128xf32>
    tpu.vector_store %arg4[%c0_9, %c0_10], %10 {strides = array<i32>} : memref<1x128xf32, #tpu.memory_space<vmem>>, vector<1x128xf32>,
    %c0_11 = arith.constant 0 : index
    %c0_12 = arith.constant 0 : index
    %12 = vector.load %arg5[%c0_11, %c0_12] : memref<1x128xf32, #tpu.memory_space<vmem>>, vector<1x128xf32>
    %13 = arith.mulf %5, %5 : vector<512x128xf32>
    %cst_13 = arith.constant dense<0.000000e+00> : vector<128xf32>
    %14 = vector.multi_reduction <add>, %13, %cst_13 [0] : vector<512x128xf32> to vector<128xf32>
    %15 = vector.shape_cast %14 : vector<128xf32> to vector<1x128xf32>
    %16 = arith.addf %12, %15 : vector<1x128xf32>
    %c0_14 = arith.constant 0 : index
    %c0_15 = arith.constant 0 : index
    %17 = vector.load %arg5[%c0_14, %c0_15] : memref<1x128xf32, #tpu.memory_space<vmem>>, vector<1x128xf32>
    tpu.vector_store %arg5[%c0_14, %c0_15], %16 {strides = array<i32>} : memref<1x128xf32, #tpu.memory_space<vmem>>, vector<1x128xf32>,
    return
  }
  func.func @transform_0(%arg0: i32) -> (i32, i32) {
    %c0_i32 = arith.constant 0 : i32
    %c0_i32_0 = arith.constant 0 : i32
    return %arg0, %c0_i32 : i32, i32
  }
  func.func @transform_1(%arg0: i32) -> (i32, i32) {
    %c0_i32 = arith.constant 0 : i32
    %c0_i32_0 = arith.constant 0 : i32
    %c0_i32_1 = arith.constant 0 : i32
    return %c0_i32, %c0_i32_0 : i32, i32
  }
  func.func @transform_2(%arg0: i32) -> (i32, i32) {
    %c0_i32 = arith.constant 0 : i32
    %c0_i32_0 = arith.constant 0 : i32
    return %arg0, %c0_i32 : i32, i32
  }
  func.func @transform_3(%arg0: i32) -> (i32, i32) {
    %c0_i32 = arith.constant 0 : i32
    %c0_i32_0 = arith.constant 0 : i32
    %c0_i32_1 = arith.constant 0 : i32
    return %c0_i32, %c0_i32_0 : i32, i32
  }
  func.func @transform_4(%arg0: i32) -> (i32, i32) {
    %c0_i32 = arith.constant 0 : i32
    %c0_i32_0 = arith.constant 0 : i32
    %c0_i32_1 = arith.constant 0 : i32
    return %c0_i32, %c0_i32_0 : i32, i32
  }
}

module attributes {stable_mosaic.version = 11 : i64} {
  func.func @_residual_kernel(%arg0: i32, %arg1: memref<512x128xf32, #tpu.memory_space<vmem>>, %arg2: memref<1x128xf32, #tpu.memory_space<vmem>>, %arg3: memref<1x128xf32, #tpu.memory_space<vmem>>, %arg4: memref<512x128xf32, #tpu.memory_space<vmem>>, %arg5: memref<1x128xf32, #tpu.memory_space<vmem>>, %arg6: memref<1x128xf32, #tpu.memory_space<vmem>>, %arg7: memref<512x128xf32, #tpu.memory_space<vmem>>) attributes {dimension_semantics = [#tpu.dimension_semantics<parallel>], iteration_bounds = array<i64: 1>, scalar_prefetch = 0 : i64, scratch_operands = 0 : i64, tpu.core_type = #tpu.core_type<tc>, window_params = [{transform_indices = @transform_0, window_bounds = array<i64: 512, 128>}, {pipeline_mode = #tpu.pipeline_mode<synchronous>, transform_indices = @transform_1, window_bounds = array<i64: 1, 128>}, {pipeline_mode = #tpu.pipeline_mode<synchronous>, transform_indices = @transform_2, window_bounds = array<i64: 1, 128>}, {transform_indices = @transform_3, window_bounds = array<i64: 512, 128>}, {pipeline_mode = #tpu.pipeline_mode<synchronous>, transform_indices = @transform_4, window_bounds = array<i64: 1, 128>}, {pipeline_mode = #tpu.pipeline_mode<synchronous>, transform_indices = @transform_5, window_bounds = array<i64: 1, 128>}, {transform_indices = @transform_6, window_bounds = array<i64: 512, 128>}]} {
    %c0 = arith.constant 0 : index
    %c0_0 = arith.constant 0 : index
    %0 = vector.load %arg1[%c0, %c0_0] : memref<512x128xf32, #tpu.memory_space<vmem>>, vector<512x128xf32>
    %c0_1 = arith.constant 0 : index
    %c0_2 = arith.constant 0 : index
    %1 = vector.load %arg2[%c0_1, %c0_2] : memref<1x128xf32, #tpu.memory_space<vmem>>, vector<1x128xf32>
    %2 = vector.broadcast %1 : vector<1x128xf32> to vector<512x128xf32>
    %3 = arith.mulf %0, %2 : vector<512x128xf32>
    %c0_3 = arith.constant 0 : index
    %c0_4 = arith.constant 0 : index
    %4 = vector.load %arg3[%c0_3, %c0_4] : memref<1x128xf32, #tpu.memory_space<vmem>>, vector<1x128xf32>
    %5 = vector.broadcast %4 : vector<1x128xf32> to vector<512x128xf32>
    %6 = arith.addf %3, %5 : vector<512x128xf32>
    %c0_5 = arith.constant 0 : index
    %c0_6 = arith.constant 0 : index
    %7 = vector.load %arg4[%c0_5, %c0_6] : memref<512x128xf32, #tpu.memory_space<vmem>>, vector<512x128xf32>
    %c0_7 = arith.constant 0 : index
    %c0_8 = arith.constant 0 : index
    %8 = vector.load %arg5[%c0_7, %c0_8] : memref<1x128xf32, #tpu.memory_space<vmem>>, vector<1x128xf32>
    %9 = vector.broadcast %8 : vector<1x128xf32> to vector<512x128xf32>
    %10 = arith.mulf %7, %9 : vector<512x128xf32>
    %11 = arith.addf %6, %10 : vector<512x128xf32>
    %c0_9 = arith.constant 0 : index
    %c0_10 = arith.constant 0 : index
    %12 = vector.load %arg6[%c0_9, %c0_10] : memref<1x128xf32, #tpu.memory_space<vmem>>, vector<1x128xf32>
    %13 = vector.broadcast %12 : vector<1x128xf32> to vector<512x128xf32>
    %14 = arith.addf %11, %13 : vector<512x128xf32>
    %cst = arith.constant 0.000000e+00 : f32
    %15 = vector.broadcast %cst : f32 to vector<512x128xf32>
    %16 = arith.maximumf %14, %15 : vector<512x128xf32>
    %c0_11 = arith.constant 0 : index
    %c0_12 = arith.constant 0 : index
    %17 = vector.load %arg7[%c0_11, %c0_12] : memref<512x128xf32, #tpu.memory_space<vmem>>, vector<512x128xf32>
    tpu.vector_store %arg7[%c0_11, %c0_12], %16 {strides = array<i32>} : memref<512x128xf32, #tpu.memory_space<vmem>>, vector<512x128xf32>,
    return
  }
  func.func @transform_0(%arg0: i32) -> (i32, i32) {
    %c0_i32 = arith.constant 0 : i32
    %c0_i32_0 = arith.constant 0 : i32
    return %arg0, %c0_i32 : i32, i32
  }
  func.func @transform_1(%arg0: i32) -> (i32, i32) {
    %c0_i32 = arith.constant 0 : i32
    %c0_i32_0 = arith.constant 0 : i32
    %c0_i32_1 = arith.constant 0 : i32
    return %c0_i32, %c0_i32_0 : i32, i32
  }
  func.func @transform_2(%arg0: i32) -> (i32, i32) {
    %c0_i32 = arith.constant 0 : i32
    %c0_i32_0 = arith.constant 0 : i32
    %c0_i32_1 = arith.constant 0 : i32
    return %c0_i32, %c0_i32_0 : i32, i32
  }
  func.func @transform_3(%arg0: i32) -> (i32, i32) {
    %c0_i32 = arith.constant 0 : i32
    %c0_i32_0 = arith.constant 0 : i32
    return %arg0, %c0_i32 : i32, i32
  }
  func.func @transform_4(%arg0: i32) -> (i32, i32) {
    %c0_i32 = arith.constant 0 : i32
    %c0_i32_0 = arith.constant 0 : i32
    %c0_i32_1 = arith.constant 0 : i32
    return %c0_i32, %c0_i32_0 : i32, i32
  }
  func.func @transform_5(%arg0: i32) -> (i32, i32) {
    %c0_i32 = arith.constant 0 : i32
    %c0_i32_0 = arith.constant 0 : i32
    %c0_i32_1 = arith.constant 0 : i32
    return %c0_i32, %c0_i32_0 : i32, i32
  }
  func.func @transform_6(%arg0: i32) -> (i32, i32) {
    %c0_i32 = arith.constant 0 : i32
    %c0_i32_0 = arith.constant 0 : i32
    return %arg0, %c0_i32 : i32, i32
  }
}

</mosaic_0001>

<llo_original>
// kernel: resblk_forward.5
$region0: #{resblk_forward.5}
  #allocation0 [shape = 'u32[]', space=smem, size = 0x4, offset = 0x4, fixed_abs, tag = 'smem constant byte address 0x4 - core index']
  #allocation1 [shape = 'u32[144,128]{1,0:T(1,128)}', space=vmem, size = 0x12000, scoped, tag = 'internal scratch']
  %s0 = inlined_call_operand.vmem [shape: f32[512,128], index: 0, kind: input, shape index: {}]
  %s1 = inlined_call_operand.vmem [shape: f32[1,128], index: 1, kind: input, shape index: {}]
  %s2 = inlined_call_operand.vmem [shape: f32[1,128], index: 2, kind: input, shape index: {}]
  %s3 = inlined_call_operand.vmem [shape: f32[512,128], index: 3, kind: output, shape index: {}]
  %s4 = sld [smem:[#allocation0]]
  $region22: #{resblk_forward.5} parent=0
    _
  %s6 = ssub.s32 1, %s4
  %s7 = scalar_select 0, %s6, %s4
  // Predicated region
  $region2: #{resblk_forward.5} parent=0 // pred_check
    _
  $region3: #{resblk_forward.5} parent=0 // pred_check_branch
    %9 = sbr.rel (0) target = $region5
  $region4: #{resblk_forward.5} parent=0 // pred_region
    _
  $region5: #{resblk_forward.5} parent=0 // pred_fallthru
    _
  // Predicated region
  $region6: #{resblk_forward.5} parent=0 // pred_check
    _
  $region7: #{resblk_forward.5} parent=0 // pred_check_branch
    %11 = sbr.rel (0) target = $region9
  $region8: #{resblk_forward.5} parent=0 // pred_region
    _
  $region9: #{resblk_forward.5} parent=0 // pred_fallthru
    _
  // Predicated region
  $region10: #{resblk_forward.5} parent=0 // pred_check
    _
  $region11: #{resblk_forward.5} parent=0 // pred_check_branch
    %13 = sbr.rel (0) target = $region13
  $region12: #{resblk_forward.5} parent=0 // pred_region
    _
  $region13: #{resblk_forward.5} parent=0 // pred_fallthru
    _
  %v14 = vld [vmem:[%s0] sm:$0xff]
  %v15 = vld [vmem:[%s0 + $0x8] sm:$0xff]
  %v16 = vld [vmem:[%s0 + $0x10] sm:$0xff]
  %v17 = vld [vmem:[%s0 + $0x18] sm:$0xff]
  %v18 = vld [vmem:[%s0 + $0x20] sm:$0xff]
  %v19 = vld [vmem:[%s0 + $0x28] sm:$0xff]
  %v20 = vld [vmem:[%s0 + $0x30] sm:$0xff]
  %v21 = vld [vmem:[%s0 + $0x38] sm:$0xff]
  %v22 = vld [vmem:[%s0 + $0x40] sm:$0xff]
  %v23 = vld [vmem:[%s0 + $0x48] sm:$0xff]
  %v24 = vld [vmem:[%s0 + $0x50] sm:$0xff]
  %v25 = vld [vmem:[%s0 + $0x58] sm:$0xff]
  %v26 = vld [vmem:[%s0 + $0x60] sm:$0xff]
  %v27 = vld [vmem:[%s0 + $0x68] sm:$0xff]
  %v28 = vld [vmem:[%s0 + $0x70] sm:$0xff]
  %v29 = vld [vmem:[%s0 + $0x78] sm:$0xff]
  %v30 = vld [vmem:[%s0 + $0x80] sm:$0xff]
  %v31 = vld [vmem:[%s0 + $0x88] sm:$0xff]
  %v32 = vld [vmem:[%s0 + $0x90] sm:$0xff]
  %v33 = vld [vmem:[%s0 + $0x98] sm:$0xff]
  %v34 = vld [vmem:[%s0 + $0xa0] sm:$0xff]
  %v35 = vld [vmem:[%s0 + $0xa8] sm:$0xff]
  %v36 = vld [vmem:[%s0 + $0xb0] sm:$0xff]
  %v37 = vld [vmem:[%s0 + $0xb8] sm:$0xff]
  %v38 = vld [vmem:[%s0 + $0xc0] sm:$0xff]
  %v39 = vld [vmem:[%s0 + $0xc8] sm:$0xff]
  %v40 = vld [vmem:[%s0 + $0xd0] sm:$0xff]
  %v41 = vld [vmem:[%s0 + $0xd8] sm:$0xff]
  %v42 = vld [vmem:[%s0 + $0xe0] sm:$0xff]
  %v43 = vld [vmem:[%s0 + $0xe8] sm:$0xff]
  %v44 = vld [vmem:[%s0 + $0xf0] sm:$0xff]
  %v45 = vld [vmem:[%s0 + $0xf8] sm:$0xff]
  %v46 = vld [vmem:[%s0 + $0x100] sm:$0xff]
  %v47 = vld [vmem:[%s0 + $0x108] sm:$0xff]
  %v48 = vld [vmem:[%s0 + $0x110] sm:$0xff]
  %v49 = vld [vmem:[%s0 + $0x118] sm:$0xff]
  %v50 = vld [vmem:[%s0 + $0x120] sm:$0xff]
  %v51 = vld [vmem:[%s0 + $0x128] sm:$0xff]
  %v52 = vld [vmem:[%s0 + $0x130] sm:$0xff]
  %v53 = vld [vmem:[%s0 + $0x138] sm:$0xff]
  %v54 = vld [vmem:[%s0 + $0x140] sm:$0xff]
  %v55 = vld [vmem:[%s0 + $0x148] sm:$0xff]
  %v56 = vld [vmem:[%s0 + $0x150] sm:$0xff]
  %v57 = vld [vmem:[%s0 + $0x158] sm:$0xff]
  %v58 = vld [vmem:[%s0 + $0x160] sm:$0xff]
  %v59 = vld [vmem:[%s0 + $0x168] sm:$0xff]
  %v60 = vld [vmem:[%s0 + $0x170] sm:$0xff]
  %v61 = vld [vmem:[%s0 + $0x178] sm:$0xff]
  %v62 = vld [vmem:[%s0 + $0x180] sm:$0xff]
  %v63 = vld [vmem:[%s0 + $0x188] sm:$0xff]
  %v64 = vld [vmem:[%s0 + $0x190] sm:$0xff]
  %v65 = vld [vmem:[%s0 + $0x198] sm:$0xff]
  %v66 = vld [vmem:[%s0 + $0x1a0] sm:$0xff]
  %v67 = vld [vmem:[%s0 + $0x1a8] sm:$0xff]
  %v68 = vld [vmem:[%s0 + $0x1b0] sm:$0xff]
  %v69 = vld [vmem:[%s0 + $0x1b8] sm:$0xff]
  %v70 = vld [vmem:[%s0 + $0x1c0] sm:$0xff]
  %v71 = vld [vmem:[%s0 + $0x1c8] sm:$0xff]
  %v72 = vld [vmem:[%s0 + $0x1d0] sm:$0xff]
  %v73 = vld [vmem:[%s0 + $0x1d8] sm:$0xff]
  %v74 = vld [vmem:[%s0 + $0x1e0] sm:$0xff]
  %v75 = vld [vmem:[%s0 + $0x1e8] sm:$0xff]
  %v76 = vld [vmem:[%s0 + $0x1f0] sm:$0xff]
  %v77 = vld [vmem:[%s0 + $0x1f8] sm:$0xff]
  %v78 = vld [vmem:[%s1] sm:$0x1]
  %v80 = vlaneseq
  %v81 = vshrl.u32 %v80, 7
  %v82 = vsub.s32 0, %v81
  %v83 = vrot.slane %v78, %v82
  %v85 = vmul.f32 %v14, %v83
  %v86 = vmul.f32 %v15, %v83
  %v87 = vmul.f32 %v16, %v83
  %v88 = vmul.f32 %v17, %v83
  %v89 = vmul.f32 %v18, %v83
  %v90 = vmul.f32 %v19, %v83
  %v91 = vmul.f32 %v20, %v83
  %v92 = vmul.f32 %v21, %v83
  %v93 = vmul.f32 %v22, %v83
  %v94 = vmul.f32 %v23, %v83
  %v95 = vmul.f32 %v24, %v83
  %v96 = vmul.f32 %v25, %v83
  %v97 = vmul.f32 %v26, %v83
  %v98 = vmul.f32 %v27, %v83
  %v99 = vmul.f32 %v28, %v83
  %v100 = vmul.f32 %v29, %v83
  %v101 = vmul.f32 %v30, %v83
  %v102 = vmul.f32 %v31, %v83
  %v103 = vmul.f32 %v32, %v83
  %v104 = vmul.f32 %v33, %v83
  %v105 = vmul.f32 %v34, %v83
  %v106 = vmul.f32 %v35, %v83
  %v107 = vmul.f32 %v36, %v83
  %v108 = vmul.f32 %v37, %v83
  %v109 = vmul.f32 %v38, %v83
  %v110 = vmul.f32 %v39, %v83
  %v111 = vmul.f32 %v40, %v83
  %v112 = vmul.f32 %v41, %v83
  %v113 = vmul.f32 %v42, %v83
  %v114 = vmul.f32 %v43, %v83
  %v115 = vmul.f32 %v44, %v83
  %v116 = vmul.f32 %v45, %v83
  %v117 = vmul.f32 %v46, %v83
  %v118 = vmul.f32 %v47, %v83
  %v119 = vmul.f32 %v48, %v83
  %v120 = vmul.f32 %v49, %v83
  %v121 = vmul.f32 %v50, %v83
  %v122 = vmul.f32 %v51, %v83
  %v123 = vmul.f32 %v52, %v83
  %v124 = vmul.f32 %v53, %v83
  %v125 = vmul.f32 %v54, %v83
  %v126 = vmul.f32 %v55, %v83
  %v127 = vmul.f32 %v56, %v83
  %v128 = vmul.f32 %v57, %v83
  %v129 = vmul.f32 %v58, %v83
  %v130 = vmul.f32 %v59, %v83
  %v131 = vmul.f32 %v60, %v83
  %v132 = vmul.f32 %v61, %v83
  %v133 = vmul.f32 %v62, %v83
  %v134 = vmul.f32 %v63, %v83
  %v135 = vmul.f32 %v64, %v83
  %v136 = vmul.f32 %v65, %v83
  %v137 = vmul.f32 %v66, %v83
  %v138 = vmul.f32 %v67, %v83
  %v139 = vmul.f32 %v68, %v83
  %v140 = vmul.f32 %v69, %v83
  %v141 = vmul.f32 %v70, %v83
  %v142 = vmul.f32 %v71, %v83
  %v143 = vmul.f32 %v72, %v83
  %v144 = vmul.f32 %v73, %v83
  %v145 = vmul.f32 %v74, %v83
  %v146 = vmul.f32 %v75, %v83
  %v147 = vmul.f32 %v76, %v83
  %v148 = vmul.f32 %v77, %v83
  %v149 = vld [vmem:[%s2] sm:$0x1]
  %v151 = vlaneseq
  %v152 = vshrl.u32 %v151, 7
  %v153 = vsub.s32 0, %v152
  %v154 = vrot.slane %v149, %v153
  %v156 = vadd.f32 %v85, %v154
  %v157 = vadd.f32 %v86, %v154
  %v158 = vadd.f32 %v87, %v154
  %v159 = vadd.f32 %v88, %v154
  %v160 = vadd.f32 %v89, %v154
  %v161 = vadd.f32 %v90, %v154
  %v162 = vadd.f32 %v91, %v154
  %v163 = vadd.f32 %v92, %v154
  %v164 = vadd.f32 %v93, %v154
  %v165 = vadd.f32 %v94, %v154
  %v166 = vadd.f32 %v95, %v154
  %v167 = vadd.f32 %v96, %v154
  %v168 = vadd.f32 %v97, %v154
  %v169 = vadd.f32 %v98, %v154
  %v170 = vadd.f32 %v99, %v154
  %v171 = vadd.f32 %v100, %v154
  %v172 = vadd.f32 %v101, %v154
  %v173 = vadd.f32 %v102, %v154
  %v174 = vadd.f32 %v103, %v154
  %v175 = vadd.f32 %v104, %v154
  %v176 = vadd.f32 %v105, %v154
  %v177 = vadd.f32 %v106, %v154
  %v178 = vadd.f32 %v107, %v154
  %v179 = vadd.f32 %v108, %v154
  %v180 = vadd.f32 %v109, %v154
  %v181 = vadd.f32 %v110, %v154
  %v182 = vadd.f32 %v111, %v154
  %v183 = vadd.f32 %v112, %v154
  %v184 = vadd.f32 %v113, %v154
  %v185 = vadd.f32 %v114, %v154
  %v186 = vadd.f32 %v115, %v154
  %v187 = vadd.f32 %v116, %v154
  %v188 = vadd.f32 %v117, %v154
  %v189 = vadd.f32 %v118, %v154
  %v190 = vadd.f32 %v119, %v154
  %v191 = vadd.f32 %v120, %v154
  %v192 = vadd.f32 %v121, %v154
  %v193 = vadd.f32 %v122, %v154
  %v194 = vadd.f32 %v123, %v154
  %v195 = vadd.f32 %v124, %v154
  %v196 = vadd.f32 %v125, %v154
  %v197 = vadd.f32 %v126, %v154
  %v198 = vadd.f32 %v127, %v154
  %v199 = vadd.f32 %v128, %v154
  %v200 = vadd.f32 %v129, %v154
  %v201 = vadd.f32 %v130, %v154
  %v202 = vadd.f32 %v131, %v154
  %v203 = vadd.f32 %v132, %v154
  %v204 = vadd.f32 %v133, %v154
  %v205 = vadd.f32 %v134, %v154
  %v206 = vadd.f32 %v135, %v154
  %v207 = vadd.f32 %v136, %v154
  %v208 = vadd.f32 %v137, %v154
  %v209 = vadd.f32 %v138, %v154
  %v210 = vadd.f32 %v139, %v154
  %v211 = vadd.f32 %v140, %v154
  %v212 = vadd.f32 %v141, %v154
  %v213 = vadd.f32 %v142, %v154
  %v214 = vadd.f32 %v143, %v154
  %v215 = vadd.f32 %v144, %v154
  %v216 = vadd.f32 %v145, %v154
  %v217 = vadd.f32 %v146, %v154
  %v218 = vadd.f32 %v147, %v154
  %v219 = vadd.f32 %v148, %v154
  %v220 = vmax.f32 %v156, 0.0
  %v221 = vmax.f32 %v157, 0.0
  %v222 = vmax.f32 %v158, 0.0
  %v223 = vmax.f32 %v159, 0.0
  %v224 = vmax.f32 %v160, 0.0
  %v225 = vmax.f32 %v161, 0.0
  %v226 = vmax.f32 %v162, 0.0
  %v227 = vmax.f32 %v163, 0.0
  %v228 = vmax.f32 %v164, 0.0
  %v229 = vmax.f32 %v165, 0.0
  %v230 = vmax.f32 %v166, 0.0
  %v231 = vmax.f32 %v167, 0.0
  %v232 = vmax.f32 %v168, 0.0
  %v233 = vmax.f32 %v169, 0.0
  %v234 = vmax.f32 %v170, 0.0
  %v235 = vmax.f32 %v171, 0.0
  %v236 = vmax.f32 %v172, 0.0
  %v237 = vmax.f32 %v173, 0.0
  %v238 = vmax.f32 %v174, 0.0
  %v239 = vmax.f32 %v175, 0.0
  %v240 = vmax.f32 %v176, 0.0
  %v241 = vmax.f32 %v177, 0.0
  %v242 = vmax.f32 %v178, 0.0
  %v243 = vmax.f32 %v179, 0.0
  %v244 = vmax.f32 %v180, 0.0
  %v245 = vmax.f32 %v181, 0.0
  %v246 = vmax.f32 %v182, 0.0
  %v247 = vmax.f32 %v183, 0.0
  %v248 = vmax.f32 %v184, 0.0
  %v249 = vmax.f32 %v185, 0.0
  %v250 = vmax.f32 %v186, 0.0
  %v251 = vmax.f32 %v187, 0.0
  %v252 = vmax.f32 %v188, 0.0
  %v253 = vmax.f32 %v189, 0.0
  %v254 = vmax.f32 %v190, 0.0
  %v255 = vmax.f32 %v191, 0.0
  %v256 = vmax.f32 %v192, 0.0
  %v257 = vmax.f32 %v193, 0.0
  %v258 = vmax.f32 %v194, 0.0
  %v259 = vmax.f32 %v195, 0.0
  %v260 = vmax.f32 %v196, 0.0
  %v261 = vmax.f32 %v197, 0.0
  %v262 = vmax.f32 %v198, 0.0
  %v263 = vmax.f32 %v199, 0.0
  %v264 = vmax.f32 %v200, 0.0
  %v265 = vmax.f32 %v201, 0.0
  %v266 = vmax.f32 %v202, 0.0
  %v267 = vmax.f32 %v203, 0.0
  %v268 = vmax.f32 %v204, 0.0
  %v269 = vmax.f32 %v205, 0.0
  %v270 = vmax.f32 %v206, 0.0
  %v271 = vmax.f32 %v207, 0.0
  %v272 = vmax.f32 %v208, 0.0
  %v273 = vmax.f32 %v209, 0.0
  %v274 = vmax.f32 %v210, 0.0
  %v275 = vmax.f32 %v211, 0.0
  %v276 = vmax.f32 %v212, 0.0
  %v277 = vmax.f32 %v213, 0.0
  %v278 = vmax.f32 %v214, 0.0
  %v279 = vmax.f32 %v215, 0.0
  %v280 = vmax.f32 %v216, 0.0
  %v281 = vmax.f32 %v217, 0.0
  %v282 = vmax.f32 %v218, 0.0
  %v283 = vmax.f32 %v219, 0.0
  %284 = vst [vmem:[%s3] sm:$0xff] %v220
  %285 = vst [vmem:[%s3 + $0x8] sm:$0xff] %v221
  %286 = vst [vmem:[%s3 + $0x10] sm:$0xff] %v222
  %287 = vst [vmem:[%s3 + $0x18] sm:$0xff] %v223
  %288 = vst [vmem:[%s3 + $0x20] sm:$0xff] %v224
  %289 = vst [vmem:[%s3 + $0x28] sm:$0xff] %v225
  %290 = vst [vmem:[%s3 + $0x30] sm:$0xff] %v226
  %291 = vst [vmem:[%s3 + $0x38] sm:$0xff] %v227
  %292 = vst [vmem:[%s3 + $0x40] sm:$0xff] %v228
  %293 = vst [vmem:[%s3 + $0x48] sm:$0xff] %v229
  %294 = vst [vmem:[%s3 + $0x50] sm:$0xff] %v230
  %295 = vst [vmem:[%s3 + $0x58] sm:$0xff] %v231
  %296 = vst [vmem:[%s3 + $0x60] sm:$0xff] %v232
  %297 = vst [vmem:[%s3 + $0x68] sm:$0xff] %v233
  %298 = vst [vmem:[%s3 + $0x70] sm:$0xff] %v234
  %299 = vst [vmem:[%s3 + $0x78] sm:$0xff] %v235
  %300 = vst [vmem:[%s3 + $0x80] sm:$0xff] %v236
  %301 = vst [vmem:[%s3 + $0x88] sm:$0xff] %v237
  %302 = vst [vmem:[%s3 + $0x90] sm:$0xff] %v238
  %303 = vst [vmem:[%s3 + $0x98] sm:$0xff] %v239
  %304 = vst [vmem:[%s3 + $0xa0] sm:$0xff] %v240
  %305 = vst [vmem:[%s3 + $0xa8] sm:$0xff] %v241
  %306 = vst [vmem:[%s3 + $0xb0] sm:$0xff] %v242
  %307 = vst [vmem:[%s3 + $0xb8] sm:$0xff] %v243
  %308 = vst [vmem:[%s3 + $0xc0] sm:$0xff] %v244
  %309 = vst [vmem:[%s3 + $0xc8] sm:$0xff] %v245
  %310 = vst [vmem:[%s3 + $0xd0] sm:$0xff] %v246
  %311 = vst [vmem:[%s3 + $0xd8] sm:$0xff] %v247
  %312 = vst [vmem:[%s3 + $0xe0] sm:$0xff] %v248
  %313 = vst [vmem:[%s3 + $0xe8] sm:$0xff] %v249
  %314 = vst [vmem:[%s3 + $0xf0] sm:$0xff] %v250
  %315 = vst [vmem:[%s3 + $0xf8] sm:$0xff] %v251
  %316 = vst [vmem:[%s3 + $0x100] sm:$0xff] %v252
  %317 = vst [vmem:[%s3 + $0x108] sm:$0xff] %v253
  %318 = vst [vmem:[%s3 + $0x110] sm:$0xff] %v254
  %319 = vst [vmem:[%s3 + $0x118] sm:$0xff] %v255
  %320 = vst [vmem:[%s3 + $0x120] sm:$0xff] %v256
  %321 = vst [vmem:[%s3 + $0x128] sm:$0xff] %v257
  %322 = vst [vmem:[%s3 + $0x130] sm:$0xff] %v258
  %323 = vst [vmem:[%s3 + $0x138] sm:$0xff] %v259
  %324 = vst [vmem:[%s3 + $0x140] sm:$0xff] %v260
  %325 = vst [vmem:[%s3 + $0x148] sm:$0xff] %v261
  %326 = vst [vmem:[%s3 + $0x150] sm:$0xff] %v262
  %327 = vst [vmem:[%s3 + $0x158] sm:$0xff] %v263
  %328 = vst [vmem:[%s3 + $0x160] sm:$0xff] %v264
  %329 = vst [vmem:[%s3 + $0x168] sm:$0xff] %v265
  %330 = vst [vmem:[%s3 + $0x170] sm:$0xff] %v266
  %331 = vst [vmem:[%s3 + $0x178] sm:$0xff] %v267
  %332 = vst [vmem:[%s3 + $0x180] sm:$0xff] %v268
  %333 = vst [vmem:[%s3 + $0x188] sm:$0xff] %v269
  %334 = vst [vmem:[%s3 + $0x190] sm:$0xff] %v270
  %335 = vst [vmem:[%s3 + $0x198] sm:$0xff] %v271
  %336 = vst [vmem:[%s3 + $0x1a0] sm:$0xff] %v272
  %337 = vst [vmem:[%s3 + $0x1a8] sm:$0xff] %v273
  %338 = vst [vmem:[%s3 + $0x1b0] sm:$0xff] %v274
  %339 = vst [vmem:[%s3 + $0x1b8] sm:$0xff] %v275
  %340 = vst [vmem:[%s3 + $0x1c0] sm:$0xff] %v276
  %341 = vst [vmem:[%s3 + $0x1c8] sm:$0xff] %v277
  %342 = vst [vmem:[%s3 + $0x1d0] sm:$0xff] %v278
  %343 = vst [vmem:[%s3 + $0x1d8] sm:$0xff] %v279
  %344 = vst [vmem:[%s3 + $0x1e0] sm:$0xff] %v280
  %345 = vst [vmem:[%s3 + $0x1e8] sm:$0xff] %v281
  %346 = vst [vmem:[%s3 + $0x1f0] sm:$0xff] %v282
  %347 = vst [vmem:[%s3 + $0x1f8] sm:$0xff] %v283
  // Predicated region
  $region14: #{resblk_forward.5} parent=0 // pred_check
    _
  $region15: #{resblk_forward.5} parent=0 // pred_check_branch
    %349 = sbr.rel (0) target = $region17
  $region16: #{resblk_forward.5} parent=0 // pred_region
    _
  $region17: #{resblk_forward.5} parent=0 // pred_fallthru
    _
  // Predicated region
  $region18: #{resblk_forward.5} parent=0 // pred_check
    _
  $region19: #{resblk_forward.5} parent=0 // pred_check_branch
    %351 = sbr.rel (0) target = $region21
  $region20: #{resblk_forward.5} parent=0 // pred_region
    _
  $region21: #{resblk_forward.5} parent=0 // pred_fallthru
    _

// kernel: resblk_forward.4
$region0: #{resblk_forward.4}
  #allocation0 [shape = 'u32[]', space=smem, size = 0x4, offset = 0x4, fixed_abs, tag = 'smem constant byte address 0x4 - core index']
  #allocation1 [shape = 'u32[144,128]{1,0:T(1,128)}', space=vmem, size = 0x12000, scoped, tag = 'internal scratch']
  %s0 = inlined_call_operand.vmem [shape: bf16[512,36], index: 0, kind: input, shape index: {}]
  %s1 = inlined_call_operand.vmem [shape: bf16[512,4], index: 1, kind: input, shape index: {}]
  %s2 = inlined_call_operand.vmem [shape: bf16[36,128], index: 2, kind: input, shape index: {}]
  %s3 = inlined_call_operand.vmem [shape: bf16[4,128], index: 3, kind: input, shape index: {}]
  %s4 = inlined_call_operand.vmem [shape: f32[512,128], index: 4, kind: output, shape index: {0}]
  %s5 = inlined_call_operand.vmem [shape: f32[512,128], index: 5, kind: output, shape index: {1}]
  %s6 = inlined_call_operand.vmem [shape: f32[1,128], index: 6, kind: output, shape index: {2}]
  %s7 = inlined_call_operand.vmem [shape: f32[1,128], index: 7, kind: output, shape index: {3}]
  %s8 = inlined_call_operand.vmem [shape: f32[1,128], index: 8, kind: output, shape index: {4}]
  %s9 = inlined_call_operand.vmem [shape: f32[1,128], index: 9, kind: output, shape index: {5}]
  %10 = xla_tuple %s4, %s5, %s6, %s7, %s8, %s9
  %s11 = sld [smem:[#allocation0]]
  $region70: #{resblk_forward.4} parent=0
    _
  %s13 = ssub.s32 1, %s11
  %s14 = scalar_select 0, %s13, %s11
  // Predicated region
  $region2: #{resblk_forward.4} parent=0 // pred_check
    _
  $region3: #{resblk_forward.4} parent=0 // pred_check_branch
    %16 = sbr.rel (0) target = $region5
  $region4: #{resblk_forward.4} parent=0 // pred_region
    _
  $region5: #{resblk_forward.4} parent=0 // pred_fallthru
    _
  // Predicated region
  $region6: #{resblk_forward.4} parent=0 // pred_check
    _
  $region7: #{resblk_forward.4} parent=0 // pred_check_branch
    %18 = sbr.rel (0) target = $region9
  $region8: #{resblk_forward.4} parent=0 // pred_region
    _
  $region9: #{resblk_forward.4} parent=0 // pred_fallthru
    _
  // Predicated region
  $region10: #{resblk_forward.4} parent=0 // pred_check
    _
  $region11: #{resblk_forward.4} parent=0 // pred_check_branch
    %20 = sbr.rel (0) target = $region13
  $region12: #{resblk_forward.4} parent=0 // pred_region
    _
  $region13: #{resblk_forward.4} parent=0 // pred_fallthru
    _
  // Predicated region
  $region14: #{resblk_forward.4} parent=0 // pred_check
    _
  $region15: #{resblk_forward.4} parent=0 // pred_check_branch
    %22 = sbr.rel (0) target = $region17
  $region16: #{resblk_forward.4} parent=0 // pred_region
    _
  $region17: #{resblk_forward.4} parent=0 // pred_fallthru
    _
  %p24 = scmp.eq.s32.totalorder 0, 0
  // Predicated region
  $region18: #{resblk_forward.4} parent=0 // pred_check
    %p25 = pneg %p24
  $region19: #{resblk_forward.4} parent=0 // pred_check_branch
    %27 = sbr.rel (%p25) target = $region21
  $region20: #{resblk_forward.4} parent=0 // pred_region
    %28 = vst [vmem:[%s6] sm:$0x1] 0.0
    %29 = vst [vmem:[%s7] sm:$0x1] 0.0
    %30 = vst [vmem:[%s8] sm:$0x1] 0.0
    %31 = vst [vmem:[%s9] sm:$0x1] 0.0
  $region21: #{resblk_forward.4} parent=0 // pred_fallthru
    _
  %v32 = vld [vmem:[%s0] sm:$0xf]
  %v33 = vld [vmem:[%s0 + $0x4] sm:$0xf]
  %v34 = vld [vmem:[%s0 + $0x8] sm:$0xf]
  %v35 = vld [vmem:[%s0 + $0xc] sm:$0xf]
  %v36 = vld [vmem:[%s0 + $0x10] sm:$0xf]
  %v37 = vld [vmem:[%s0 + $0x14] sm:$0xf]
  %v38 = vld [vmem:[%s0 + $0x18] sm:$0xf]
  %v39 = vld [vmem:[%s0 + $0x1c] sm:$0xf]
  %v40 = vld [vmem:[%s0 + $0x20] sm:$0xf]
  %v41 = vld [vmem:[%s0 + $0x24] sm:$0xf]
  %v42 = vld [vmem:[%s0 + $0x28] sm:$0xf]
  %v43 = vld [vmem:[%s0 + $0x2c] sm:$0xf]
  %v44 = vld [vmem:[%s0 + $0x30] sm:$0xf]
  %v45 = vld [vmem:[%s0 + $0x34] sm:$0xf]
  %v46 = vld [vmem:[%s0 + $0x38] sm:$0xf]
  %v47 = vld [vmem:[%s0 + $0x3c] sm:$0xf]
  %v48 = vld [vmem:[%s0 + $0x40] sm:$0xf]
  %v49 = vld [vmem:[%s0 + $0x44] sm:$0xf]
  %v50 = vld [vmem:[%s0 + $0x48] sm:$0xf]
  %v51 = vld [vmem:[%s0 + $0x4c] sm:$0xf]
  %v52 = vld [vmem:[%s0 + $0x50] sm:$0xf]
  %v53 = vld [vmem:[%s0 + $0x54] sm:$0xf]
  %v54 = vld [vmem:[%s0 + $0x58] sm:$0xf]
  %v55 = vld [vmem:[%s0 + $0x5c] sm:$0xf]
  %v56 = vld [vmem:[%s0 + $0x60] sm:$0xf]
  %v57 = vld [vmem:[%s0 + $0x64] sm:$0xf]
  %v58 = vld [vmem:[%s0 + $0x68] sm:$0xf]
  %v59 = vld [vmem:[%s0 + $0x6c] sm:$0xf]
  %v60 = vld [vmem:[%s0 + $0x70] sm:$0xf]
  %v61 = vld [vmem:[%s0 + $0x74] sm:$0xf]
  %v62 = vld [vmem:[%s0 + $0x78] sm:$0xf]
  %v63 = vld [vmem:[%s0 + $0x7c] sm:$0xf]
  %v64 = vld [vmem:[%s0 + $0x80] sm:$0xf]
  %v65 = vld [vmem:[%s0 + $0x84] sm:$0xf]
  %v66 = vld [vmem:[%s0 + $0x88] sm:$0xf]
  %v67 = vld [vmem:[%s0 + $0x8c] sm:$0xf]
  %v68 = vld [vmem:[%s0 + $0x90] sm:$0xf]
  %v69 = vld [vmem:[%s0 + $0x94] sm:$0xf]
  %v70 = vld [vmem:[%s0 + $0x98] sm:$0xf]
  %v71 = vld [vmem:[%s0 + $0x9c] sm:$0xf]
  %v72 = vld [vmem:[%s0 + $0xa0] sm:$0xf]
  %v73 = vld [vmem:[%s0 + $0xa4] sm:$0xf]
  %v74 = vld [vmem:[%s0 + $0xa8] sm:$0xf]
  %v75 = vld [vmem:[%s0 + $0xac] sm:$0xf]
  %v76 = vld [vmem:[%s0 + $0xb0] sm:$0xf]
  %v77 = vld [vmem:[%s0 + $0xb4] sm:$0xf]
  %v78 = vld [vmem:[%s0 + $0xb8] sm:$0xf]
  %v79 = vld [vmem:[%s0 + $0xbc] sm:$0xf]
  %v80 = vld [vmem:[%s0 + $0xc0] sm:$0xf]
  %v81 = vld [vmem:[%s0 + $0xc4] sm:$0xf]
  %v82 = vld [vmem:[%s0 + $0xc8] sm:$0xf]
  %v83 = vld [vmem:[%s0 + $0xcc] sm:$0xf]
  %v84 = vld [vmem:[%s0 + $0xd0] sm:$0xf]
  %v85 = vld [vmem:[%s0 + $0xd4] sm:$0xf]
  %v86 = vld [vmem:[%s0 + $0xd8] sm:$0xf]
  %v87 = vld [vmem:[%s0 + $0xdc] sm:$0xf]
  %v88 = vld [vmem:[%s0 + $0xe0] sm:$0xf]
  %v89 = vld [vmem:[%s0 + $0xe4] sm:$0xf]
  %v90 = vld [vmem:[%s0 + $0xe8] sm:$0xf]
  %v91 = vld [vmem:[%s0 + $0xec] sm:$0xf]
  %v92 = vld [vmem:[%s0 + $0xf0] sm:$0xf]
  %v93 = vld [vmem:[%s0 + $0xf4] sm:$0xf]
  %v94 = vld [vmem:[%s0 + $0xf8] sm:$0xf]
  %v95 = vld [vmem:[%s0 + $0xfc] sm:$0xf]
  %v96 = vld [vmem:[%s2] sm:$0xf]
  %v97 = vld [vmem:[%s2 + $0x4] sm:$0xf]
  %v98 = vld [vmem:[%s2 + $0x8] sm:$0xf]
  %v99 = vld [vmem:[%s2 + $0xc] sm:$0xf]
  %v100 = vld [vmem:[%s2 + $0x10] sm:$0x3]
  %v165 = vunpack.c.l.b16 %v32
  %v166 = vunpack.c.l.b16 %v33
  %v167 = vunpack.c.l.b16 %v34
  %v168 = vunpack.c.l.b16 %v35
  %v169 = vunpack.c.l.b16 %v36
  %v170 = vunpack.c.l.b16 %v37
  %v171 = vunpack.c.l.b16 %v38
  %v172 = vunpack.c.l.b16 %v39
  %v173 = vunpack.c.l.b16 %v40
  %v174 = vunpack.c.l.b16 %v41
  %v175 = vunpack.c.l.b16 %v42
  %v176 = vunpack.c.l.b16 %v43
  %v177 = vunpack.c.l.b16 %v44
  %v178 = vunpack.c.l.b16 %v45
  %v179 = vunpack.c.l.b16 %v46
  %v180 = vunpack.c.l.b16 %v47
  %v181 = vunpack.c.l.b16 %v48
  %v182 = vunpack.c.l.b16 %v49
  %v183 = vunpack.c.l.b16 %v50
  %v184 = vunpack.c.l.b16 %v51
  %v185 = vunpack.c.l.b16 %v52
  %v186 = vunpack.c.l.b16 %v53
  %v187 = vunpack.c.l.b16 %v54
  %v188 = vunpack.c.l.b16 %v55
  %v189 = vunpack.c.l.b16 %v56
  %v190 = vunpack.c.l.b16 %v57
  %v191 = vunpack.c.l.b16 %v58
  %v192 = vunpack.c.l.b16 %v59
  %v193 = vunpack.c.l.b16 %v60
  %v194 = vunpack.c.l.b16 %v61
  %v195 = vunpack.c.l.b16 %v62
  %v196 = vunpack.c.l.b16 %v63
  %v197 = vunpack.c.l.b16 %v64
  %v198 = vunpack.c.l.b16 %v65
  %v199 = vunpack.c.l.b16 %v66
  %v200 = vunpack.c.l.b16 %v67
  %v201 = vunpack.c.l.b16 %v68
  %v202 = vunpack.c.l.b16 %v69
  %v203 = vunpack.c.l.b16 %v70
  %v204 = vunpack.c.l.b16 %v71
  %v205 = vunpack.c.l.b16 %v72
  %v206 = vunpack.c.l.b16 %v73
  %v207 = vunpack.c.l.b16 %v74
  %v208 = vunpack.c.l.b16 %v75
  %v209 = vunpack.c.l.b16 %v76
  %v210 = vunpack.c.l.b16 %v77
  %v211 = vunpack.c.l.b16 %v78
  %v212 = vunpack.c.l.b16 %v79
  %v213 = vunpack.c.l.b16 %v80
  %v214 = vunpack.c.l.b16 %v81
  %v215 = vunpack.c.l.b16 %v82
  %v216 = vunpack.c.l.b16 %v83
  %v217 = vunpack.c.l.b16 %v84
  %v218 = vunpack.c.l.b16 %v85
  %v219 = vunpack.c.l.b16 %v86
  %v220 = vunpack.c.l.b16 %v87
  %v221 = vunpack.c.l.b16 %v88
  %v222 = vunpack.c.l.b16 %v89
  %v223 = vunpack.c.l.b16 %v90
  %v224 = vunpack.c.l.b16 %v91
  %v225 = vunpack.c.l.b16 %v92
  %v226 = vunpack.c.l.b16 %v93
  %v227 = vunpack.c.l.b16 %v94
  %v228 = vunpack.c.l.b16 %v95
  %v229 = vpack.c.b16 %v166, %v165
  %v230 = vpack.c.b16 %v168, %v167
  %v231 = vpack.c.b16 %v170, %v169
  %v232 = vpack.c.b16 %v172, %v171
  %v233 = vpack.c.b16 %v174, %v173
  %v234 = vpack.c.b16 %v176, %v175
  %v235 = vpack.c.b16 %v178, %v177
  %v236 = vpack.c.b16 %v180, %v179
  %v237 = vpack.c.b16 %v182, %v181
  %v238 = vpack.c.b16 %v184, %v183
  %v239 = vpack.c.b16 %v186, %v185
  %v240 = vpack.c.b16 %v188, %v187
  %v241 = vpack.c.b16 %v190, %v189
  %v242 = vpack.c.b16 %v192, %v191
  %v243 = vpack.c.b16 %v194, %v193
  %v244 = vpack.c.b16 %v196, %v195
  %v245 = vpack.c.b16 %v198, %v197
  %v246 = vpack.c.b16 %v200, %v199
  %v247 = vpack.c.b16 %v202, %v201
  %v248 = vpack.c.b16 %v204, %v203
  %v249 = vpack.c.b16 %v206, %v205
  %v250 = vpack.c.b16 %v208, %v207
  %v251 = vpack.c.b16 %v210, %v209
  %v252 = vpack.c.b16 %v212, %v211
  %v253 = vpack.c.b16 %v214, %v213
  %v254 = vpack.c.b16 %v216, %v215
  %v255 = vpack.c.b16 %v218, %v217
  %v256 = vpack.c.b16 %v220, %v219
  %v257 = vpack.c.b16 %v222, %v221
  %v258 = vpack.c.b16 %v224, %v223
  %v259 = vpack.c.b16 %v226, %v225
  %v260 = vpack.c.b16 %v228, %v227
  %v266 = vunpack.c.l.b16 %v96
  %v267 = vunpack.c.l.b16 %v97
  %v268 = vunpack.c.l.b16 %v98
  %v269 = vunpack.c.l.b16 %v99
  %v270 = vunpack.c.l.b16 %v100
  %v271 = vpack.c.b16 %v267, %v266
  %v272 = vpack.c.b16 %v269, %v268
  %v273 = vpack.c.b16 %v270, %v270
  %vm276 = vcmask 293888
  %v278 = vsel %vm276, %v229, 0
  %v281 = vsel %vm276, %v230, 0
  %v284 = vsel %vm276, %v231, 0
  %v287 = vsel %vm276, %v232, 0
  %v290 = vsel %vm276, %v233, 0
  %v293 = vsel %vm276, %v234, 0
  %v296 = vsel %vm276, %v235, 0
  %v299 = vsel %vm276, %v236, 0
  %v302 = vsel %vm276, %v237, 0
  %v305 = vsel %vm276, %v238, 0
  %v308 = vsel %vm276, %v239, 0
  %v311 = vsel %vm276, %v240, 0
  %v314 = vsel %vm276, %v241, 0
  %v317 = vsel %vm276, %v242, 0
  %v320 = vsel %vm276, %v243, 0
  %v323 = vsel %vm276, %v244, 0
  %v326 = vsel %vm276, %v245, 0
  %v329 = vsel %vm276, %v246, 0
  %v332 = vsel %vm276, %v247, 0
  %v335 = vsel %vm276, %v248, 0
  %v338 = vsel %vm276, %v249, 0
  %v341 = vsel %vm276, %v250, 0
  %v344 = vsel %vm276, %v251, 0
  %v347 = vsel %vm276, %v252, 0
  %v350 = vsel %vm276, %v253, 0
  %v353 = vsel %vm276, %v254, 0
  %v356 = vsel %vm276, %v255, 0
  %v359 = vsel %vm276, %v256, 0
  %v362 = vsel %vm276, %v257, 0
  %v365 = vsel %vm276, %v258, 0
  %v368 = vsel %vm276, %v259, 0
  %v371 = vsel %vm276, %v260, 0
  %vm373 = vcmask 1041408
  %v375 = vsel %vm373, %v273, 0
  %377 = vmatprep.subr.bf16.mxu0 0
  %378 = vmatpush1.bf16.msra.mxu0 %v271
  %379 = vmatprep.subr.bf16.mxu0 0
  %380 = vmatpush1.bf16.msra.mxu0 %v272
  %381 = vmatprep.subr.bf16.mxu0 0
  %382 = vmatpush1.bf16.msra.mxu0 %v375
  %383 = vmatprep.subr.bf16.mxu0 0
  %384 = vmatpush1.bf16.msra.mxu0 0
  %385 = vmatprep.subr.bf16.mxu0 0
  %386 = vmatpush1.bf16.msra.mxu0 0
  %387 = vmatprep.subr.bf16.mxu0 0
  %388 = vmatpush1.bf16.msra.mxu0 0
  %389 = vmatprep.subr.bf16.mxu0 0
  %390 = vmatpush1.bf16.msra.mxu0 0
  %391 = vmatprep.subr.bf16.mxu0 0
  %392 = vmatpush1.bf16.msra.mxu0 0
  %393 = vmatprep.subr.bf16.mxu0 0
  %394 = vmatpush1.bf16.msra.mxu0 0
  %395 = vmatprep.subr.bf16.mxu0 0
  %396 = vmatpush1.bf16.msra.mxu0 0
  %397 = vmatprep.subr.bf16.mxu0 0
  %398 = vmatpush1.bf16.msra.mxu0 0
  %399 = vmatprep.subr.bf16.mxu0 0
  %400 = vmatpush1.bf16.msra.mxu0 0
  %401 = vmatprep.subr.bf16.mxu0 0
  %402 = vmatpush1.bf16.msra.mxu0 0
  %403 = vmatprep.subr.bf16.mxu0 0
  %404 = vmatpush1.bf16.msra.mxu0 0
  %405 = vmatprep.subr.bf16.mxu0 0
  %406 = vmatpush1.bf16.msra.mxu0 0
  %407 = vmatprep.subr.bf16.mxu0 0
  %408 = vmatpush1.bf16.msra.mxu0 0
  %409 = vmatprep.mubr.bf16.mxu0 0
  %410 = vmatmul.mubr.bf16.gmra.mrb[0].mxu0 %v278
  %v411 = vpop.f32.mrb[0].mxu0
  %v412 = vadd.f32 0.0, %v411
  %v413 = vpop.f32.mrb[0].mxu0
  %v414 = vpop.f32.mrb[0].mxu0
  %v415 = vadd.f32 0.0, %v414
  %v416 = vpop.f32.mrb[0].mxu0
  %417 = vmatprep.mubr.bf16.mxu0 0
  %418 = vmatmul.mubr.bf16.gmra.mrb[0].mxu0 %v281
  %v419 = vpop.f32.mrb[0].mxu0
  %v420 = vadd.f32 0.0, %v419
  %v421 = vpop.f32.mrb[0].mxu0
  %v422 = vpop.f32.mrb[0].mxu0
  %v423 = vadd.f32 0.0, %v422
  %v424 = vpop.f32.mrb[0].mxu0
  %425 = vmatprep.mubr.bf16.mxu0 0
  %426 = vmatmul.mubr.bf16.gmra.mrb[0].mxu0 %v284
  %v427 = vpop.f32.mrb[0].mxu0
  %v428 = vadd.f32 0.0, %v427
  %v429 = vpop.f32.mrb[0].mxu0
  %v430 = vpop.f32.mrb[0].mxu0
  %v431 = vadd.f32 0.0, %v430
  %v432 = vpop.f32.mrb[0].mxu0
  %433 = vmatprep.mubr.bf16.mxu0 0
  %434 = vmatmul.mubr.bf16.gmra.mrb[0].mxu0 %v287
  %v435 = vpop.f32.mrb[0].mxu0
  %v436 = vadd.f32 0.0, %v435
  %v437 = vpop.f32.mrb[0].mxu0
  %v438 = vpop.f32.mrb[0].mxu0
  %v439 = vadd.f32 0.0, %v438
  %v440 = vpop.f32.mrb[0].mxu0
  %441 = vmatprep.mubr.bf16.mxu0 0
  %442 = vmatmul.mubr.bf16.gmra.mrb[0].mxu0 %v290
  %v443 = vpop.f32.mrb[0].mxu0
  %v444 = vadd.f32 0.0, %v443
  %v445 = vpop.f32.mrb[0].mxu0
  %v446 = vpop.f32.mrb[0].mxu0
  %v447 = vadd.f32 0.0, %v446
  %v448 = vpop.f32.mrb[0].mxu0
  %449 = vmatprep.mubr.bf16.mxu0 0
  %450 = vmatmul.mubr.bf16.gmra.mrb[0].mxu0 %v293
  %v451 = vpop.f32.mrb[0].mxu0
  %v452 = vadd.f32 0.0, %v451
  %v453 = vpop.f32.mrb[0].mxu0
  %v454 = vpop.f32.mrb[0].mxu0
  %v455 = vadd.f32 0.0, %v454
  %v456 = vpop.f32.mrb[0].mxu0
  %457 = vmatprep.mubr.bf16.mxu0 0
  %458 = vmatmul.mubr.bf16.gmra.mrb[0].mxu0 %v296
  %v459 = vpop.f32.mrb[0].mxu0
  %v460 = vadd.f32 0.0, %v459
  %v461 = vpop.f32.mrb[0].mxu0
  %v462 = vpop.f32.mrb[0].mxu0
  %v463 = vadd.f32 0.0, %v462
  %v464 = vpop.f32.mrb[0].mxu0
  %465 = vmatprep.mubr.bf16.mxu0 0
  %466 = vmatmul.mubr.bf16.gmra.mrb[0].mxu0 %v299
  %v467 = vpop.f32.mrb[0].mxu0
  %v468 = vadd.f32 0.0, %v467
  %v469 = vpop.f32.mrb[0].mxu0
  %v470 = vpop.f32.mrb[0].mxu0
  %v471 = vadd.f32 0.0, %v470
  %v472 = vpop.f32.mrb[0].mxu0
  %473 = vmatprep.mubr.bf16.mxu0 0
  %474 = vmatmul.mubr.bf16.gmra.mrb[0].mxu0 %v302
  %v475 = vpop.f32.mrb[0].mxu0
  %v476 = vadd.f32 0.0, %v475
  %v477 = vpop.f32.mrb[0].mxu0
  %v478 = vpop.f32.mrb[0].mxu0
  %v479 = vadd.f32 0.0, %v478
  %v480 = vpop.f32.mrb[0].mxu0
  %481 = vmatprep.mubr.bf16.mxu0 0
  %482 = vmatmul.mubr.bf16.gmra.mrb[0].mxu0 %v305
  %v483 = vpop.f32.mrb[0].mxu0
  %v484 = vadd.f32 0.0, %v483
  %v485 = vpop.f32.mrb[0].mxu0
  %v486 = vpop.f32.mrb[0].mxu0
  %v487 = vadd.f32 0.0, %v486
  %v488 = vpop.f32.mrb[0].mxu0
  %489 = vmatprep.mubr.bf16.mxu0 0
  %490 = vmatmul.mubr.bf16.gmra.mrb[0].mxu0 %v308
  %v491 = vpop.f32.mrb[0].mxu0
  %v492 = vadd.f32 0.0, %v491
  %v493 = vpop.f32.mrb[0].mxu0
  %v494 = vpop.f32.mrb[0].mxu0
  %v495 = vadd.f32 0.0, %v494
  %v496 = vpop.f32.mrb[0].mxu0
  %497 = vmatprep.mubr.bf16.mxu0 0
  %498 = vmatmul.mubr.bf16.gmra.mrb[0].mxu0 %v311
  %v499 = vpop.f32.mrb[0].mxu0
  %v500 = vadd.f32 0.0, %v499
  %v501 = vpop.f32.mrb[0].mxu0
  %v502 = vpop.f32.mrb[0].mxu0
  %v503 = vadd.f32 0.0, %v502
  %v504 = vpop.f32.mrb[0].mxu0
  %505 = vmatprep.mubr.bf16.mxu0 0
  %506 = vmatmul.mubr.bf16.gmra.mrb[0].mxu0 %v314
  %v507 = vpop.f32.mrb[0].mxu0
  %v508 = vadd.f32 0.0, %v507
  %v509 = vpop.f32.mrb[0].mxu0
  %v510 = vpop.f32.mrb[0].mxu0
  %v511 = vadd.f32 0.0, %v510
  %v512 = vpop.f32.mrb[0].mxu0
  %513 = vmatprep.mubr.bf16.mxu0 0
  %514 = vmatmul.mubr.bf16.gmra.mrb[0].mxu0 %v317
  %v515 = vpop.f32.mrb[0].mxu0
  %v516 = vadd.f32 0.0, %v515
  %v517 = vpop.f32.mrb[0].mxu0
  %v518 = vpop.f32.mrb[0].mxu0
  %v519 = vadd.f32 0.0, %v518
  %v520 = vpop.f32.mrb[0].mxu0
  %521 = vmatprep.mubr.bf16.mxu0 0
  %522 = vmatmul.mubr.bf16.gmra.mrb[0].mxu0 %v320
  %v523 = vpop.f32.mrb[0].mxu0
  %v524 = vadd.f32 0.0, %v523
  %v525 = vpop.f32.mrb[0].mxu0
  %v526 = vpop.f32.mrb[0].mxu0
  %v527 = vadd.f32 0.0, %v526
  %v528 = vpop.f32.mrb[0].mxu0
  %529 = vmatprep.mubr.bf16.mxu0 0
  %530 = vmatmul.mubr.bf16.gmra.mrb[0].mxu0 %v323
  %v531 = vpop.f32.mrb[0].mxu0
  %v532 = vadd.f32 0.0, %v531
  %v533 = vpop.f32.mrb[0].mxu0
  %v534 = vpop.f32.mrb[0].mxu0
  %v535 = vadd.f32 0.0, %v534
  %v536 = vpop.f32.mrb[0].mxu0
  %537 = vmatprep.mubr.bf16.mxu0 0
  %538 = vmatmul.mubr.bf16.gmra.mrb[0].mxu0 %v326
  %v539 = vpop.f32.mrb[0].mxu0
  %v540 = vadd.f32 0.0, %v539
  %v541 = vpop.f32.mrb[0].mxu0
  %v542 = vpop.f32.mrb[0].mxu0
  %v543 = vadd.f32 0.0, %v542
  %v544 = vpop.f32.mrb[0].mxu0
  %545 = vmatprep.mubr.bf16.mxu0 0
  %546 = vmatmul.mubr.bf16.gmra.mrb[0].mxu0 %v329
  %v547 = vpop.f32.mrb[0].mxu0
  %v548 = vadd.f32 0.0, %v547
  %v549 = vpop.f32.mrb[0].mxu0
  %v550 = vpop.f32.mrb[0].mxu0
  %v551 = vadd.f32 0.0, %v550
  %v552 = vpop.f32.mrb[0].mxu0
  %553 = vmatprep.mubr.bf16.mxu0 0
  %554 = vmatmul.mubr.bf16.gmra.mrb[0].mxu0 %v332
  %v555 = vpop.f32.mrb[0].mxu0
  %v556 = vadd.f32 0.0, %v555
  %v557 = vpop.f32.mrb[0].mxu0
  %v558 = vpop.f32.mrb[0].mxu0
  %v559 = vadd.f32 0.0, %v558
  %v560 = vpop.f32.mrb[0].mxu0
  %561 = vmatprep.mubr.bf16.mxu0 0
  %562 = vmatmul.mubr.bf16.gmra.mrb[0].mxu0 %v335
  %v563 = vpop.f32.mrb[0].mxu0
  %v564 = vadd.f32 0.0, %v563
  %v565 = vpop.f32.mrb[0].mxu0
  %v566 = vpop.f32.mrb[0].mxu0
  %v567 = vadd.f32 0.0, %v566
  %v568 = vpop.f32.mrb[0].mxu0
  %569 = vmatprep.mubr.bf16.mxu0 0
  %570 = vmatmul.mubr.bf16.gmra.mrb[0].mxu0 %v338
  %v571 = vpop.f32.mrb[0].mxu0
  %v572 = vadd.f32 0.0, %v571
  %v573 = vpop.f32.mrb[0].mxu0
  %v574 = vpop.f32.mrb[0].mxu0
  %v575 = vadd.f32 0.0, %v574
  %v576 = vpop.f32.mrb[0].mxu0
  %577 = vmatprep.mubr.bf16.mxu0 0
  %578 = vmatmul.mubr.bf16.gmra.mrb[0].mxu0 %v341
  %v579 = vpop.f32.mrb[0].mxu0
  %v580 = vadd.f32 0.0, %v579
  %v581 = vpop.f32.mrb[0].mxu0
  %v582 = vpop.f32.mrb[0].mxu0
  %v583 = vadd.f32 0.0, %v582
  %v584 = vpop.f32.mrb[0].mxu0
  %585 = vmatprep.mubr.bf16.mxu0 0
  %586 = vmatmul.mubr.bf16.gmra.mrb[0].mxu0 %v344
  %v587 = vpop.f32.mrb[0].mxu0
  %v588 = vadd.f32 0.0, %v587
  %v589 = vpop.f32.mrb[0].mxu0
  %v590 = vpop.f32.mrb[0].mxu0
  %v591 = vadd.f32 0.0, %v590
  %v592 = vpop.f32.mrb[0].mxu0
  %593 = vmatprep.mubr.bf16.mxu0 0
  %594 = vmatmul.mubr.bf16.gmra.mrb[0].mxu0 %v347
  %v595 = vpop.f32.mrb[0].mxu0
  %v596 = vadd.f32 0.0, %v595
  %v597 = vpop.f32.mrb[0].mxu0
  %v598 = vpop.f32.mrb[0].mxu0
  %v599 = vadd.f32 0.0, %v598
  %v600 = vpop.f32.mrb[0].mxu0
  %601 = vmatprep.mubr.bf16.mxu0 0
  %602 = vmatmul.mubr.bf16.gmra.mrb[0].mxu0 %v350
  %v603 = vpop.f32.mrb[0].mxu0
  %v604 = vadd.f32 0.0, %v603
  %v605 = vpop.f32.mrb[0].mxu0
  %v606 = vpop.f32.mrb[0].mxu0
  %v607 = vadd.f32 0.0, %v606
  %v608 = vpop.f32.mrb[0].mxu0
  %609 = vmatprep.mubr.bf16.mxu0 0
  %610 = vmatmul.mubr.bf16.gmra.mrb[0].mxu0 %v353
  %v611 = vpop.f32.mrb[0].mxu0
  %v612 = vadd.f32 0.0, %v611
  %v613 = vpop.f32.mrb[0].mxu0
  %v614 = vpop.f32.mrb[0].mxu0
  %v615 = vadd.f32 0.0, %v614
  %v616 = vpop.f32.mrb[0].mxu0
  %617 = vmatprep.mubr.bf16.mxu0 0
  %618 = vmatmul.mubr.bf16.gmra.mrb[0].mxu0 %v356
  %v619 = vpop.f32.mrb[0].mxu0
  %v620 = vadd.f32 0.0, %v619
  %v621 = vpop.f32.mrb[0].mxu0
  %v622 = vpop.f32.mrb[0].mxu0
  %v623 = vadd.f32 0.0, %v622
  %v624 = vpop.f32.mrb[0].mxu0
  %625 = vmatprep.mubr.bf16.mxu0 0
  %626 = vmatmul.mubr.bf16.gmra.mrb[0].mxu0 %v359
  %v627 = vpop.f32.mrb[0].mxu0
  %v628 = vadd.f32 0.0, %v627
  %v629 = vpop.f32.mrb[0].mxu0
  %v630 = vpop.f32.mrb[0].mxu0
  %v631 = vadd.f32 0.0, %v630
  %v632 = vpop.f32.mrb[0].mxu0
  %633 = vmatprep.mubr.bf16.mxu0 0
  %634 = vmatmul.mubr.bf16.gmra.mrb[0].mxu0 %v362
  %v635 = vpop.f32.mrb[0].mxu0
  %v636 = vadd.f32 0.0, %v635
  %v637 = vpop.f32.mrb[0].mxu0
  %v638 = vpop.f32.mrb[0].mxu0
  %v639 = vadd.f32 0.0, %v638
  %v640 = vpop.f32.mrb[0].mxu0
  %641 = vmatprep.mubr.bf16.mxu0 0
  %642 = vmatmul.mubr.bf16.gmra.mrb[0].mxu0 %v365
  %v643 = vpop.f32.mrb[0].mxu0
  %v644 = vadd.f32 0.0, %v643
  %v645 = vpop.f32.mrb[0].mxu0
  %v646 = vpop.f32.mrb[0].mxu0
  %v647 = vadd.f32 0.0, %v646
  %v648 = vpop.f32.mrb[0].mxu0
  %649 = vmatprep.mubr.bf16.mxu0 0
  %650 = vmatmul.mubr.bf16.gmra.mrb[0].mxu0 %v368
  %v651 = vpop.f32.mrb[0].mxu0
  %v652 = vadd.f32 0.0, %v651
  %v653 = vpop.f32.mrb[0].mxu0
  %v654 = vpop.f32.mrb[0].mxu0
  %v655 = vadd.f32 0.0, %v654
  %v656 = vpop.f32.mrb[0].mxu0
  %657 = vmatprep.mubr.bf16.mxu0 0
  %658 = vmatmul.mubr.bf16.gmra.mrb[0].mxu0 %v371
  %v659 = vpop.f32.mrb[0].mxu0
  %v660 = vadd.f32 0.0, %v659
  %v661 = vpop.f32.mrb[0].mxu0
  %v662 = vpop.f32.mrb[0].mxu0
  %v663 = vadd.f32 0.0, %v662
  %v664 = vpop.f32.mrb[0].mxu0
  %665 = vdwg.mxu0
  %v666 = vld [vmem:[%s1] sm:$0xf]
  %v667 = vld [vmem:[%s1 + $0x4] sm:$0xf]
  %v668 = vld [vmem:[%s1 + $0x8] sm:$0xf]
  %v669 = vld [vmem:[%s1 + $0xc] sm:$0xf]
  %v670 = vld [vmem:[%s1 + $0x10] sm:$0xf]
  %v671 = vld [vmem:[%s1 + $0x14] sm:$0xf]
  %v672 = vld [vmem:[%s1 + $0x18] sm:$0xf]
  %v673 = vld [vmem:[%s1 + $0x1c] sm:$0xf]
  %v674 = vld [vmem:[%s1 + $0x20] sm:$0xf]
  %v675 = vld [vmem:[%s1 + $0x24] sm:$0xf]
  %v676 = vld [vmem:[%s1 + $0x28] sm:$0xf]
  %v677 = vld [vmem:[%s1 + $0x2c] sm:$0xf]
  %v678 = vld [vmem:[%s1 + $0x30] sm:$0xf]
  %v679 = vld [vmem:[%s1 + $0x34] sm:$0xf]
  %v680 = vld [vmem:[%s1 + $0x38] sm:$0xf]
  %v681 = vld [vmem:[%s1 + $0x3c] sm:$0xf]
  %v682 = vld [vmem:[%s1 + $0x40] sm:$0xf]
  %v683 = vld [vmem:[%s1 + $0x44] sm:$0xf]
  %v684 = vld [vmem:[%s1 + $0x48] sm:$0xf]
  %v685 = vld [vmem:[%s1 + $0x4c] sm:$0xf]
  %v686 = vld [vmem:[%s1 + $0x50] sm:$0xf]
  %v687 = vld [vmem:[%s1 + $0x54] sm:$0xf]
  %v688 = vld [vmem:[%s1 + $0x58] sm:$0xf]
  %v689 = vld [vmem:[%s1 + $0x5c] sm:$0xf]
  %v690 = vld [vmem:[%s1 + $0x60] sm:$0xf]
  %v691 = vld [vmem:[%s1 + $0x64] sm:$0xf]
  %v692 = vld [vmem:[%s1 + $0x68] sm:$0xf]
  %v693 = vld [vmem:[%s1 + $0x6c] sm:$0xf]
  %v694 = vld [vmem:[%s1 + $0x70] sm:$0xf]
  %v695 = vld [vmem:[%s1 + $0x74] sm:$0xf]
  %v696 = vld [vmem:[%s1 + $0x78] sm:$0xf]
  %v697 = vld [vmem:[%s1 + $0x7c] sm:$0xf]
  %v698 = vld [vmem:[%s1 + $0x80] sm:$0xf]
  %v699 = vld [vmem:[%s1 + $0x84] sm:$0xf]
  %v700 = vld [vmem:[%s1 + $0x88] sm:$0xf]
  %v701 = vld [vmem:[%s1 + $0x8c] sm:$0xf]
  %v702 = vld [vmem:[%s1 + $0x90] sm:$0xf]
  %v703 = vld [vmem:[%s1 + $0x94] sm:$0xf]
  %v704 = vld [vmem:[%s1 + $0x98] sm:$0xf]
  %v705 = vld [vmem:[%s1 + $0x9c] sm:$0xf]
  %v706 = vld [vmem:[%s1 + $0xa0] sm:$0xf]
  %v707 = vld [vmem:[%s1 + $0xa4] sm:$0xf]
  %v708 = vld [vmem:[%s1 + $0xa8] sm:$0xf]
  %v709 = vld [vmem:[%s1 + $0xac] sm:$0xf]
  %v710 = vld [vmem:[%s1 + $0xb0] sm:$0xf]
  %v711 = vld [vmem:[%s1 + $0xb4] sm:$0xf]
  %v712 = vld [vmem:[%s1 + $0xb8] sm:$0xf]
  %v713 = vld [vmem:[%s1 + $0xbc] sm:$0xf]
  %v714 = vld [vmem:[%s1 + $0xc0] sm:$0xf]
  %v715 = vld [vmem:[%s1 + $0xc4] sm:$0xf]
  %v716 = vld [vmem:[%s1 + $0xc8] sm:$0xf]
  %v717 = vld [vmem:[%s1 + $0xcc] sm:$0xf]
  %v718 = vld [vmem:[%s1 + $0xd0] sm:$0xf]
  %v719 = vld [vmem:[%s1 + $0xd4] sm:$0xf]
  %v720 = vld [vmem:[%s1 + $0xd8] sm:$0xf]
  %v721 = vld [vmem:[%s1 + $0xdc] sm:$0xf]
  %v722 = vld [vmem:[%s1 + $0xe0] sm:$0xf]
  %v723 = vld [vmem:[%s1 + $0xe4] sm:$0xf]
  %v724 = vld [vmem:[%s1 + $0xe8] sm:$0xf]
  %v725 = vld [vmem:[%s1 + $0xec] sm:$0xf]
  %v726 = vld [vmem:[%s1 + $0xf0] sm:$0xf]
  %v727 = vld [vmem:[%s1 + $0xf4] sm:$0xf]
  %v728 = vld [vmem:[%s1 + $0xf8] sm:$0xf]
  %v729 = vld [vmem:[%s1 + $0xfc] sm:$0xf]
  %v730 = vld [vmem:[%s3] sm:$0x3]
  %v795 = vunpack.c.l.b16 %v666
  %v796 = vunpack.c.l.b16 %v667
  %v797 = vunpack.c.l.b16 %v668
  %v798 = vunpack.c.l.b16 %v669
  %v799 = vunpack.c.l.b16 %v670
  %v800 = vunpack.c.l.b16 %v671
  %v801 = vunpack.c.l.b16 %v672
  %v802 = vunpack.c.l.b16 %v673
  %v803 = vunpack.c.l.b16 %v674
  %v804 = vunpack.c.l.b16 %v675
  %v805 = vunpack.c.l.b16 %v676
  %v806 = vunpack.c.l.b16 %v677
  %v807 = vunpack.c.l.b16 %v678
  %v808 = vunpack.c.l.b16 %v679
  %v809 = vunpack.c.l.b16 %v680
  %v810 = vunpack.c.l.b16 %v681
  %v811 = vunpack.c.l.b16 %v682
  %v812 = vunpack.c.l.b16 %v683
  %v813 = vunpack.c.l.b16 %v684
  %v814 = vunpack.c.l.b16 %v685
  %v815 = vunpack.c.l.b16 %v686
  %v816 = vunpack.c.l.b16 %v687
  %v817 = vunpack.c.l.b16 %v688
  %v818 = vunpack.c.l.b16 %v689
  %v819 = vunpack.c.l.b16 %v690
  %v820 = vunpack.c.l.b16 %v691
  %v821 = vunpack.c.l.b16 %v692
  %v822 = vunpack.c.l.b16 %v693
  %v823 = vunpack.c.l.b16 %v694
  %v824 = vunpack.c.l.b16 %v695
  %v825 = vunpack.c.l.b16 %v696
  %v826 = vunpack.c.l.b16 %v697
  %v827 = vunpack.c.l.b16 %v698
  %v828 = vunpack.c.l.b16 %v699
  %v829 = vunpack.c.l.b16 %v700
  %v830 = vunpack.c.l.b16 %v701
  %v831 = vunpack.c.l.b16 %v702
  %v832 = vunpack.c.l.b16 %v703
  %v833 = vunpack.c.l.b16 %v704
  %v834 = vunpack.c.l.b16 %v705
  %v835 = vunpack.c.l.b16 %v706
  %v836 = vunpack.c.l.b16 %v707
  %v837 = vunpack.c.l.b16 %v708
  %v838 = vunpack.c.l.b16 %v709
  %v839 = vunpack.c.l.b16 %v710
  %v840 = vunpack.c.l.b16 %v711
  %v841 = vunpack.c.l.b16 %v712
  %v842 = vunpack.c.l.b16 %v713
  %v843 = vunpack.c.l.b16 %v714
  %v844 = vunpack.c.l.b16 %v715
  %v845 = vunpack.c.l.b16 %v716
  %v846 = vunpack.c.l.b16 %v717
  %v847 = vunpack.c.l.b16 %v718
  %v848 = vunpack.c.l.b16 %v719
  %v849 = vunpack.c.l.b16 %v720
  %v850 = vunpack.c.l.b16 %v721
  %v851 = vunpack.c.l.b16 %v722
  %v852 = vunpack.c.l.b16 %v723
  %v853 = vunpack.c.l.b16 %v724
  %v854 = vunpack.c.l.b16 %v725
  %v855 = vunpack.c.l.b16 %v726
  %v856 = vunpack.c.l.b16 %v727
  %v857 = vunpack.c.l.b16 %v728
  %v858 = vunpack.c.l.b16 %v729
  %v859 = vpack.c.b16 %v796, %v795
  %v860 = vpack.c.b16 %v798, %v797
  %v861 = vpack.c.b16 %v800, %v799
  %v862 = vpack.c.b16 %v802, %v801
  %v863 = vpack.c.b16 %v804, %v803
  %v864 = vpack.c.b16 %v806, %v805
  %v865 = vpack.c.b16 %v808, %v807
  %v866 = vpack.c.b16 %v810, %v809
  %v867 = vpack.c.b16 %v812, %v811
  %v868 = vpack.c.b16 %v814, %v813
  %v869 = vpack.c.b16 %v816, %v815
  %v870 = vpack.c.b16 %v818, %v817
  %v871 = vpack.c.b16 %v820, %v819
  %v872 = vpack.c.b16 %v822, %v821
  %v873 = vpack.c.b16 %v824, %v823
  %v874 = vpack.c.b16 %v826, %v825
  %v875 = vpack.c.b16 %v828, %v827
  %v876 = vpack.c.b16 %v830, %v829
  %v877 = vpack.c.b16 %v832, %v831
  %v878 = vpack.c.b16 %v834, %v833
  %v879 = vpack.c.b16 %v836, %v835
  %v880 = vpack.c.b16 %v838, %v837
  %v881 = vpack.c.b16 %v840, %v839
  %v882 = vpack.c.b16 %v842, %v841
  %v883 = vpack.c.b16 %v844, %v843
  %v884 = vpack.c.b16 %v846, %v845
  %v885 = vpack.c.b16 %v848, %v847
  %v886 = vpack.c.b16 %v850, %v849
  %v887 = vpack.c.b16 %v852, %v851
  %v888 = vpack.c.b16 %v854, %v853
  %v889 = vpack.c.b16 %v856, %v855
  %v890 = vpack.c.b16 %v858, %v857
  %vm891 = vcmask 31744
  %v893 = vsel %vm891, %v859, 0
  %v896 = vsel %vm891, %v860, 0
  %v899 = vsel %vm891, %v861, 0
  %v902 = vsel %vm891, %v862, 0
  %v905 = vsel %vm891, %v863, 0
  %v908 = vsel %vm891, %v864, 0
  %v911 = vsel %vm891, %v865, 0
  %v914 = vsel %vm891, %v866, 0
  %v917 = vsel %vm891, %v867, 0
  %v920 = vsel %vm891, %v868, 0
  %v923 = vsel %vm891, %v869, 0
  %v926 = vsel %vm891, %v870, 0
  %v929 = vsel %vm891, %v871, 0
  %v932 = vsel %vm891, %v872, 0
  %v935 = vsel %vm891, %v873, 0
  %v938 = vsel %vm891, %v874, 0
  %v941 = vsel %vm891, %v875, 0
  %v944 = vsel %vm891, %v876, 0
  %v947 = vsel %vm891, %v877, 0
  %v950 = vsel %vm891, %v878, 0
  %v953 = vsel %vm891, %v879, 0
  %v956 = vsel %vm891, %v880, 0
  %v959 = vsel %vm891, %v881, 0
  %v962 = vsel %vm891, %v882, 0
  %v965 = vsel %vm891, %v883, 0
  %v968 = vsel %vm891, %v884, 0
  %v971 = vsel %vm891, %v885, 0
  %v974 = vsel %vm891, %v886, 0
  %v977 = vsel %vm891, %v887, 0
  %v980 = vsel %vm891, %v888, 0
  %v983 = vsel %vm891, %v889, 0
  %v986 = vsel %vm891, %v890, 0
  %v989 = vsel %vm373, %v730, 0
  %991 = vmatprep.subr.bf16.mxu0 0
  %992 = vmatpush1.bf16.msra.mxu0 %v989
  %993 = vmatprep.subr.bf16.mxu0 0
  %994 = vmatpush1.bf16.msra.mxu0 0
  %995 = vmatprep.subr.bf16.mxu0 0
  %996 = vmatpush1.bf16.msra.mxu0 0
  %997 = vmatprep.subr.bf16.mxu0 0
  %998 = vmatpush1.bf16.msra.mxu0 0
  %999 = vmatprep.subr.bf16.mxu0 0
  %1000 = vmatpush1.bf16.msra.mxu0 0
  %1001 = vmatprep.subr.bf16.mxu0 0
  %1002 = vmatpush1.bf16.msra.mxu0 0
  %1003 = vmatprep.subr.bf16.mxu0 0
  %1004 = vmatpush1.bf16.msra.mxu0 0
  %1005 = vmatprep.subr.bf16.mxu0 0
  %1006 = vmatpush1.bf16.msra.mxu0 0
  %1007 = vmatprep.subr.bf16.mxu0 0
  %1008 = vmatpush1.bf16.msra.mxu0 0
  %1009 = vmatprep.subr.bf16.mxu0 0
  %1010 = vmatpush1.bf16.msra.mxu0 0
  %1011 = vmatprep.subr.bf16.mxu0 0
  %1012 = vmatpush1.bf16.msra.mxu0 0
  %1013 = vmatprep.subr.bf16.mxu0 0
  %1014 = vmatpush1.bf16.msra.mxu0 0
  %1015 = vmatprep.subr.bf16.mxu0 0
  %1016 = vmatpush1.bf16.msra.mxu0 0
  %1017 = vmatprep.subr.bf16.mxu0 0
  %1018 = vmatpush1.bf16.msra.mxu0 0
  %1019 = vmatprep.subr.bf16.mxu0 0
  %1020 = vmatpush1.bf16.msra.mxu0 0
  %1021 = vmatprep.subr.bf16.mxu0 0
  %1022 = vmatpush1.bf16.msra.mxu0 0
  %1023 = vmatprep.mubr.bf16.mxu0 0
  %1024 = vmatmul.mubr.bf16.gmra.mrb[0].mxu0 %v893
  %v1025 = vpop.f32.mrb[0].mxu0
  %v1026 = vadd.f32 0.0, %v1025
  %v1027 = vpop.f32.mrb[0].mxu0
  %v1028 = vpop.f32.mrb[0].mxu0
  %v1029 = vadd.f32 0.0, %v1028
  %v1030 = vpop.f32.mrb[0].mxu0
  %1031 = vmatprep.mubr.bf16.mxu0 0
  %1032 = vmatmul.mubr.bf16.gmra.mrb[0].mxu0 %v896
  %v1033 = vpop.f32.mrb[0].mxu0
  %v1034 = vadd.f32 0.0, %v1033
  %v1035 = vpop.f32.mrb[0].mxu0
  %v1036 = vpop.f32.mrb[0].mxu0
  %v1037 = vadd.f32 0.0, %v1036
  %v1038 = vpop.f32.mrb[0].mxu0
  %1039 = vmatprep.mubr.bf16.mxu0 0
  %1040 = vmatmul.mubr.bf16.gmra.mrb[0].mxu0 %v899
  %v1041 = vpop.f32.mrb[0].mxu0
  %v1042 = vadd.f32 0.0, %v1041
  %v1043 = vpop.f32.mrb[0].mxu0
  %v1044 = vpop.f32.mrb[0].mxu0
  %v1045 = vadd.f32 0.0, %v1044
  %v1046 = vpop.f32.mrb[0].mxu0
  %1047 = vmatprep.mubr.bf16.mxu0 0
  %1048 = vmatmul.mubr.bf16.gmra.mrb[0].mxu0 %v902
  %v1049 = vpop.f32.mrb[0].mxu0
  %v1050 = vadd.f32 0.0, %v1049
  %v1051 = vpop.f32.mrb[0].mxu0
  %v1052 = vpop.f32.mrb[0].mxu0
  %v1053 = vadd.f32 0.0, %v1052
  %v1054 = vpop.f32.mrb[0].mxu0
  %1055 = vmatprep.mubr.bf16.mxu0 0
  %1056 = vmatmul.mubr.bf16.gmra.mrb[0].mxu0 %v905
  %v1057 = vpop.f32.mrb[0].mxu0
  %v1058 = vadd.f32 0.0, %v1057
  %v1059 = vpop.f32.mrb[0].mxu0
  %v1060 = vpop.f32.mrb[0].mxu0
  %v1061 = vadd.f32 0.0, %v1060
  %v1062 = vpop.f32.mrb[0].mxu0
  %1063 = vmatprep.mubr.bf16.mxu0 0
  %1064 = vmatmul.mubr.bf16.gmra.mrb[0].mxu0 %v908
  %v1065 = vpop.f32.mrb[0].mxu0
  %v1066 = vadd.f32 0.0, %v1065
  %v1067 = vpop.f32.mrb[0].mxu0
  %v1068 = vpop.f32.mrb[0].mxu0
  %v1069 = vadd.f32 0.0, %v1068
  %v1070 = vpop.f32.mrb[0].mxu0
  %1071 = vmatprep.mubr.bf16.mxu0 0
  %1072 = vmatmul.mubr.bf16.gmra.mrb[0].mxu0 %v911
  %v1073 = vpop.f32.mrb[0].mxu0
  %v1074 = vadd.f32 0.0, %v1073
  %v1075 = vpop.f32.mrb[0].mxu0
  %v1076 = vpop.f32.mrb[0].mxu0
  %v1077 = vadd.f32 0.0, %v1076
  %v1078 = vpop.f32.mrb[0].mxu0
  %1079 = vmatprep.mubr.bf16.mxu0 0
  %1080 = vmatmul.mubr.bf16.gmra.mrb[0].mxu0 %v914
  %v1081 = vpop.f32.mrb[0].mxu0
  %v1082 = vadd.f32 0.0, %v1081
  %v1083 = vpop.f32.mrb[0].mxu0
  %v1084 = vpop.f32.mrb[0].mxu0
  %v1085 = vadd.f32 0.0, %v1084
  %v1086 = vpop.f32.mrb[0].mxu0
  %1087 = vmatprep.mubr.bf16.mxu0 0
  %1088 = vmatmul.mubr.bf16.gmra.mrb[0].mxu0 %v917
  %v1089 = vpop.f32.mrb[0].mxu0
  %v1090 = vadd.f32 0.0, %v1089
  %v1091 = vpop.f32.mrb[0].mxu0
  %v1092 = vpop.f32.mrb[0].mxu0
  %v1093 = vadd.f32 0.0, %v1092
  %v1094 = vpop.f32.mrb[0].mxu0
  %1095 = vmatprep.mubr.bf16.mxu0 0
  %1096 = vmatmul.mubr.bf16.gmra.mrb[0].mxu0 %v920
  %v1097 = vpop.f32.mrb[0].mxu0
  %v1098 = vadd.f32 0.0, %v1097
  %v1099 = vpop.f32.mrb[0].mxu0
  %v1100 = vpop.f32.mrb[0].mxu0
  %v1101 = vadd.f32 0.0, %v1100
  %v1102 = vpop.f32.mrb[0].mxu0
  %1103 = vmatprep.mubr.bf16.mxu0 0
  %1104 = vmatmul.mubr.bf16.gmra.mrb[0].mxu0 %v923
  %v1105 = vpop.f32.mrb[0].mxu0
  %v1106 = vadd.f32 0.0, %v1105
  %v1107 = vpop.f32.mrb[0].mxu0
  %v1108 = vpop.f32.mrb[0].mxu0
  %v1109 = vadd.f32 0.0, %v1108
  %v1110 = vpop.f32.mrb[0].mxu0
  %1111 = vmatprep.mubr.bf16.mxu0 0
  %1112 = vmatmul.mubr.bf16.gmra.mrb[0].mxu0 %v926
  %v1113 = vpop.f32.mrb[0].mxu0
  %v1114 = vadd.f32 0.0, %v1113
  %v1115 = vpop.f32.mrb[0].mxu0
  %v1116 = vpop.f32.mrb[0].mxu0
  %v1117 = vadd.f32 0.0, %v1116
  %v1118 = vpop.f32.mrb[0].mxu0
  %1119 = vmatprep.mubr.bf16.mxu0 0
  %1120 = vmatmul.mubr.bf16.gmra.mrb[0].mxu0 %v929
  %v1121 = vpop.f32.mrb[0].mxu0
  %v1122 = vadd.f32 0.0, %v1121
  %v1123 = vpop.f32.mrb[0].mxu0
  %v1124 = vpop.f32.mrb[0].mxu0
  %v1125 = vadd.f32 0.0, %v1124
  %v1126 = vpop.f32.mrb[0].mxu0
  %1127 = vmatprep.mubr.bf16.mxu0 0
  %1128 = vmatmul.mubr.bf16.gmra.mrb[0].mxu0 %v932
  %v1129 = vpop.f32.mrb[0].mxu0
  %v1130 = vadd.f32 0.0, %v1129
  %v1131 = vpop.f32.mrb[0].mxu0
  %v1132 = vpop.f32.mrb[0].mxu0
  %v1133 = vadd.f32 0.0, %v1132
  %v1134 = vpop.f32.mrb[0].mxu0
  %1135 = vmatprep.mubr.bf16.mxu0 0
  %1136 = vmatmul.mubr.bf16.gmra.mrb[0].mxu0 %v935
  %v1137 = vpop.f32.mrb[0].mxu0
  %v1138 = vadd.f32 0.0, %v1137
  %v1139 = vpop.f32.mrb[0].mxu0
  %v1140 = vpop.f32.mrb[0].mxu0
  %v1141 = vadd.f32 0.0, %v1140
  %v1142 = vpop.f32.mrb[0].mxu0
  %1143 = vmatprep.mubr.bf16.mxu0 0
  %1144 = vmatmul.mubr.bf16.gmra.mrb[0].mxu0 %v938
  %v1145 = vpop.f32.mrb[0].mxu0
  %v1146 = vadd.f32 0.0, %v1145
  %v1147 = vpop.f32.mrb[0].mxu0
  %v1148 = vpop.f32.mrb[0].mxu0
  %v1149 = vadd.f32 0.0, %v1148
  %v1150 = vpop.f32.mrb[0].mxu0
  %1151 = vmatprep.mubr.bf16.mxu0 0
  %1152 = vmatmul.mubr.bf16.gmra.mrb[0].mxu0 %v941
  %v1153 = vpop.f32.mrb[0].mxu0
  %v1154 = vadd.f32 0.0, %v1153
  %v1155 = vpop.f32.mrb[0].mxu0
  %v1156 = vpop.f32.mrb[0].mxu0
  %v1157 = vadd.f32 0.0, %v1156
  %v1158 = vpop.f32.mrb[0].mxu0
  %1159 = vmatprep.mubr.bf16.mxu0 0
  %1160 = vmatmul.mubr.bf16.gmra.mrb[0].mxu0 %v944
  %v1161 = vpop.f32.mrb[0].mxu0
  %v1162 = vadd.f32 0.0, %v1161
  %v1163 = vpop.f32.mrb[0].mxu0
  %v1164 = vpop.f32.mrb[0].mxu0
  %v1165 = vadd.f32 0.0, %v1164
  %v1166 = vpop.f32.mrb[0].mxu0
  %1167 = vmatprep.mubr.bf16.mxu0 0
  %1168 = vmatmul.mubr.bf16.gmra.mrb[0].mxu0 %v947
  %v1169 = vpop.f32.mrb[0].mxu0
  %v1170 = vadd.f32 0.0, %v1169
  %v1171 = vpop.f32.mrb[0].mxu0
  %v1172 = vpop.f32.mrb[0].mxu0
  %v1173 = vadd.f32 0.0, %v1172
  %v1174 = vpop.f32.mrb[0].mxu0
  %1175 = vmatprep.mubr.bf16.mxu0 0
  %1176 = vmatmul.mubr.bf16.gmra.mrb[0].mxu0 %v950
  %v1177 = vpop.f32.mrb[0].mxu0
  %v1178 = vadd.f32 0.0, %v1177
  %v1179 = vpop.f32.mrb[0].mxu0
  %v1180 = vpop.f32.mrb[0].mxu0
  %v1181 = vadd.f32 0.0, %v1180
  %v1182 = vpop.f32.mrb[0].mxu0
  %1183 = vmatprep.mubr.bf16.mxu0 0
  %1184 = vmatmul.mubr.bf16.gmra.mrb[0].mxu0 %v953
  %v1185 = vpop.f32.mrb[0].mxu0
  %v1186 = vadd.f32 0.0, %v1185
  %v1187 = vpop.f32.mrb[0].mxu0
  %v1188 = vpop.f32.mrb[0].mxu0
  %v1189 = vadd.f32 0.0, %v1188
  %v1190 = vpop.f32.mrb[0].mxu0
  %1191 = vmatprep.mubr.bf16.mxu0 0
  %1192 = vmatmul.mubr.bf16.gmra.mrb[0].mxu0 %v956
  %v1193 = vpop.f32.mrb[0].mxu0
  %v1194 = vadd.f32 0.0, %v1193
  %v1195 = vpop.f32.mrb[0].mxu0
  %v1196 = vpop.f32.mrb[0].mxu0
  %v1197 = vadd.f32 0.0, %v1196
  %v1198 = vpop.f32.mrb[0].mxu0
  %1199 = vmatprep.mubr.bf16.mxu0 0
  %1200 = vmatmul.mubr.bf16.gmra.mrb[0].mxu0 %v959
  %v1201 = vpop.f32.mrb[0].mxu0
  %v1202 = vadd.f32 0.0, %v1201
  %v1203 = vpop.f32.mrb[0].mxu0
  %v1204 = vpop.f32.mrb[0].mxu0
  %v1205 = vadd.f32 0.0, %v1204
  %v1206 = vpop.f32.mrb[0].mxu0
  %1207 = vmatprep.mubr.bf16.mxu0 0
  %1208 = vmatmul.mubr.bf16.gmra.mrb[0].mxu0 %v962
  %v1209 = vpop.f32.mrb[0].mxu0
  %v1210 = vadd.f32 0.0, %v1209
  %v1211 = vpop.f32.mrb[0].mxu0
  %v1212 = vpop.f32.mrb[0].mxu0
  %v1213 = vadd.f32 0.0, %v1212
  %v1214 = vpop.f32.mrb[0].mxu0
  %1215 = vmatprep.mubr.bf16.mxu0 0
  %1216 = vmatmul.mubr.bf16.gmra.mrb[0].mxu0 %v965
  %v1217 = vpop.f32.mrb[0].mxu0
  %v1218 = vadd.f32 0.0, %v1217
  %v1219 = vpop.f32.mrb[0].mxu0
  %v1220 = vpop.f32.mrb[0].mxu0
  %v1221 = vadd.f32 0.0, %v1220
  %v1222 = vpop.f32.mrb[0].mxu0
  %1223 = vmatprep.mubr.bf16.mxu0 0
  %1224 = vmatmul.mubr.bf16.gmra.mrb[0].mxu0 %v968
  %v1225 = vpop.f32.mrb[0].mxu0
  %v1226 = vadd.f32 0.0, %v1225
  %v1227 = vpop.f32.mrb[0].mxu0
  %v1228 = vpop.f32.mrb[0].mxu0
  %v1229 = vadd.f32 0.0, %v1228
  %v1230 = vpop.f32.mrb[0].mxu0
  %1231 = vmatprep.mubr.bf16.mxu0 0
  %1232 = vmatmul.mubr.bf16.gmra.mrb[0].mxu0 %v971
  %v1233 = vpop.f32.mrb[0].mxu0
  %v1234 = vadd.f32 0.0, %v1233
  %v1235 = vpop.f32.mrb[0].mxu0
  %v1236 = vpop.f32.mrb[0].mxu0
  %v1237 = vadd.f32 0.0, %v1236
  %v1238 = vpop.f32.mrb[0].mxu0
  %1239 = vmatprep.mubr.bf16.mxu0 0
  %1240 = vmatmul.mubr.bf16.gmra.mrb[0].mxu0 %v974
  %v1241 = vpop.f32.mrb[0].mxu0
  %v1242 = vadd.f32 0.0, %v1241
  %v1243 = vpop.f32.mrb[0].mxu0
  %v1244 = vpop.f32.mrb[0].mxu0
  %v1245 = vadd.f32 0.0, %v1244
  %v1246 = vpop.f32.mrb[0].mxu0
  %1247 = vmatprep.mubr.bf16.mxu0 0
  %1248 = vmatmul.mubr.bf16.gmra.mrb[0].mxu0 %v977
  %v1249 = vpop.f32.mrb[0].mxu0
  %v1250 = vadd.f32 0.0, %v1249
  %v1251 = vpop.f32.mrb[0].mxu0
  %v1252 = vpop.f32.mrb[0].mxu0
  %v1253 = vadd.f32 0.0, %v1252
  %v1254 = vpop.f32.mrb[0].mxu0
  %1255 = vmatprep.mubr.bf16.mxu0 0
  %1256 = vmatmul.mubr.bf16.gmra.mrb[0].mxu0 %v980
  %v1257 = vpop.f32.mrb[0].mxu0
  %v1258 = vadd.f32 0.0, %v1257
  %v1259 = vpop.f32.mrb[0].mxu0
  %v1260 = vpop.f32.mrb[0].mxu0
  %v1261 = vadd.f32 0.0, %v1260
  %v1262 = vpop.f32.mrb[0].mxu0
  %1263 = vmatprep.mubr.bf16.mxu0 0
  %1264 = vmatmul.mubr.bf16.gmra.mrb[0].mxu0 %v983
  %v1265 = vpop.f32.mrb[0].mxu0
  %v1266 = vadd.f32 0.0, %v1265
  %v1267 = vpop.f32.mrb[0].mxu0
  %v1268 = vpop.f32.mrb[0].mxu0
  %v1269 = vadd.f32 0.0, %v1268
  %v1270 = vpop.f32.mrb[0].mxu0
  %1271 = vmatprep.mubr.bf16.mxu0 0
  %1272 = vmatmul.mubr.bf16.gmra.mrb[0].mxu0 %v986
  %v1273 = vpop.f32.mrb[0].mxu0
  %v1274 = vadd.f32 0.0, %v1273
  %v1275 = vpop.f32.mrb[0].mxu0
  %v1276 = vpop.f32.mrb[0].mxu0
  %v1277 = vadd.f32 0.0, %v1276
  %v1278 = vpop.f32.mrb[0].mxu0
  %1279 = vdwg.mxu0
  %1280 = vst [vmem:[%s4] sm:$0xff] %v412
  %1281 = vst [vmem:[%s4 + $0x8] sm:$0xff] %v415
  %1282 = vst [vmem:[%s4 + $0x10] sm:$0xff] %v420
  %1283 = vst [vmem:[%s4 + $0x18] sm:$0xff] %v423
  %1284 = vst [vmem:[%s4 + $0x20] sm:$0xff] %v428
  %1285 = vst [vmem:[%s4 + $0x28] sm:$0xff] %v431
  %1286 = vst [vmem:[%s4 + $0x30] sm:$0xff] %v436
  %1287 = vst [vmem:[%s4 + $0x38] sm:$0xff] %v439
  %1288 = vst [vmem:[%s4 + $0x40] sm:$0xff] %v444
  %1289 = vst [vmem:[%s4 + $0x48] sm:$0xff] %v447
  %1290 = vst [vmem:[%s4 + $0x50] sm:$0xff] %v452
  %1291 = vst [vmem:[%s4 + $0x58] sm:$0xff] %v455
  %1292 = vst [vmem:[%s4 + $0x60] sm:$0xff] %v460
  %1293 = vst [vmem:[%s4 + $0x68] sm:$0xff] %v463
  %1294 = vst [vmem:[%s4 + $0x70] sm:$0xff] %v468
  %1295 = vst [vmem:[%s4 + $0x78] sm:$0xff] %v471
  %1296 = vst [vmem:[%s4 + $0x80] sm:$0xff] %v476
  %1297 = vst [vmem:[%s4 + $0x88] sm:$0xff] %v479
  %1298 = vst [vmem:[%s4 + $0x90] sm:$0xff] %v484
  %1299 = vst [vmem:[%s4 + $0x98] sm:$0xff] %v487
  %1300 = vst [vmem:[%s4 + $0xa0] sm:$0xff] %v492
  %1301 = vst [vmem:[%s4 + $0xa8] sm:$0xff] %v495
  %1302 = vst [vmem:[%s4 + $0xb0] sm:$0xff] %v500
  %1303 = vst [vmem:[%s4 + $0xb8] sm:$0xff] %v503
  %1304 = vst [vmem:[%s4 + $0xc0] sm:$0xff] %v508
  %1305 = vst [vmem:[%s4 + $0xc8] sm:$0xff] %v511
  %1306 = vst [vmem:[%s4 + $0xd0] sm:$0xff] %v516
  %1307 = vst [vmem:[%s4 + $0xd8] sm:$0xff] %v519
  %1308 = vst [vmem:[%s4 + $0xe0] sm:$0xff] %v524
  %1309 = vst [vmem:[%s4 + $0xe8] sm:$0xff] %v527
  %1310 = vst [vmem:[%s4 + $0xf0] sm:$0xff] %v532
  %1311 = vst [vmem:[%s4 + $0xf8] sm:$0xff] %v535
  %1312 = vst [vmem:[%s4 + $0x100] sm:$0xff] %v540
  %1313 = vst [vmem:[%s4 + $0x108] sm:$0xff] %v543
  %1314 = vst [vmem:[%s4 + $0x110] sm:$0xff] %v548
  %1315 = vst [vmem:[%s4 + $0x118] sm:$0xff] %v551
  %1316 = vst [vmem:[%s4 + $0x120] sm:$0xff] %v556
  %1317 = vst [vmem:[%s4 + $0x128] sm:$0xff] %v559
  %1318 = vst [vmem:[%s4 + $0x130] sm:$0xff] %v564
  %1319 = vst [vmem:[%s4 + $0x138] sm:$0xff] %v567
  %1320 = vst [vmem:[%s4 + $0x140] sm:$0xff] %v572
  %1321 = vst [vmem:[%s4 + $0x148] sm:$0xff] %v575
  %1322 = vst [vmem:[%s4 + $0x150] sm:$0xff] %v580
  %1323 = vst [vmem:[%s4 + $0x158] sm:$0xff] %v583
  %1324 = vst [vmem:[%s4 + $0x160] sm:$0xff] %v588
  %1325 = vst [vmem:[%s4 + $0x168] sm:$0xff] %v591
  %1326 = vst [vmem:[%s4 + $0x170] sm:$0xff] %v596
  %1327 = vst [vmem:[%s4 + $0x178] sm:$0xff] %v599
  %1328 = vst [vmem:[%s4 + $0x180] sm:$0xff] %v604
  %1329 = vst [vmem:[%s4 + $0x188] sm:$0xff] %v607
  %1330 = vst [vmem:[%s4 + $0x190] sm:$0xff] %v612
  %1331 = vst [vmem:[%s4 + $0x198] sm:$0xff] %v615
  %1332 = vst [vmem:[%s4 + $0x1a0] sm:$0xff] %v620
  %1333 = vst [vmem:[%s4 + $0x1a8] sm:$0xff] %v623
  %1334 = vst [vmem:[%s4 + $0x1b0] sm:$0xff] %v628
  %1335 = vst [vmem:[%s4 + $0x1b8] sm:$0xff] %v631
  %1336 = vst [vmem:[%s4 + $0x1c0] sm:$0xff] %v636
  %1337 = vst [vmem:[%s4 + $0x1c8] sm:$0xff] %v639
  %1338 = vst [vmem:[%s4 + $0x1d0] sm:$0xff] %v644
  %1339 = vst [vmem:[%s4 + $0x1d8] sm:$0xff] %v647
  %1340 = vst [vmem:[%s4 + $0x1e0] sm:$0xff] %v652
  %1341 = vst [vmem:[%s4 + $0x1e8] sm:$0xff] %v655
  %1342 = vst [vmem:[%s4 + $0x1f0] sm:$0xff] %v660
  %1343 = vst [vmem:[%s4 + $0x1f8] sm:$0xff] %v663
  %1344 = vst [vmem:[%s5] sm:$0xff] %v1026
  %1345 = vst [vmem:[%s5 + $0x8] sm:$0xff] %v1029
  %1346 = vst [vmem:[%s5 + $0x10] sm:$0xff] %v1034
  %1347 = vst [vmem:[%s5 + $0x18] sm:$0xff] %v1037
  %1348 = vst [vmem:[%s5 + $0x20] sm:$0xff] %v1042
  %1349 = vst [vmem:[%s5 + $0x28] sm:$0xff] %v1045
  %1350 = vst [vmem:[%s5 + $0x30] sm:$0xff] %v1050
  %1351 = vst [vmem:[%s5 + $0x38] sm:$0xff] %v1053
  %1352 = vst [vmem:[%s5 + $0x40] sm:$0xff] %v1058
  %1353 = vst [vmem:[%s5 + $0x48] sm:$0xff] %v1061
  %1354 = vst [vmem:[%s5 + $0x50] sm:$0xff] %v1066
  %1355 = vst [vmem:[%s5 + $0x58] sm:$0xff] %v1069
  %1356 = vst [vmem:[%s5 + $0x60] sm:$0xff] %v1074
  %1357 = vst [vmem:[%s5 + $0x68] sm:$0xff] %v1077
  %1358 = vst [vmem:[%s5 + $0x70] sm:$0xff] %v1082
  %1359 = vst [vmem:[%s5 + $0x78] sm:$0xff] %v1085
  %1360 = vst [vmem:[%s5 + $0x80] sm:$0xff] %v1090
  %1361 = vst [vmem:[%s5 + $0x88] sm:$0xff] %v1093
  %1362 = vst [vmem:[%s5 + $0x90] sm:$0xff] %v1098
  %1363 = vst [vmem:[%s5 + $0x98] sm:$0xff] %v1101
  %1364 = vst [vmem:[%s5 + $0xa0] sm:$0xff] %v1106
  %1365 = vst [vmem:[%s5 + $0xa8] sm:$0xff] %v1109
  %1366 = vst [vmem:[%s5 + $0xb0] sm:$0xff] %v1114
  %1367 = vst [vmem:[%s5 + $0xb8] sm:$0xff] %v1117
  %1368 = vst [vmem:[%s5 + $0xc0] sm:$0xff] %v1122
  %1369 = vst [vmem:[%s5 + $0xc8] sm:$0xff] %v1125
  %1370 = vst [vmem:[%s5 + $0xd0] sm:$0xff] %v1130
  %1371 = vst [vmem:[%s5 + $0xd8] sm:$0xff] %v1133
  %1372 = vst [vmem:[%s5 + $0xe0] sm:$0xff] %v1138
  %1373 = vst [vmem:[%s5 + $0xe8] sm:$0xff] %v1141
  %1374 = vst [vmem:[%s5 + $0xf0] sm:$0xff] %v1146
  %1375 = vst [vmem:[%s5 + $0xf8] sm:$0xff] %v1149
  %1376 = vst [vmem:[%s5 + $0x100] sm:$0xff] %v1154
  %1377 = vst [vmem:[%s5 + $0x108] sm:$0xff] %v1157
  %1378 = vst [vmem:[%s5 + $0x110] sm:$0xff] %v1162
  %1379 = vst [vmem:[%s5 + $0x118] sm:$0xff] %v1165
  %1380 = vst [vmem:[%s5 + $0x120] sm:$0xff] %v1170
  %1381 = vst [vmem:[%s5 + $0x128] sm:$0xff] %v1173
  %1382 = vst [vmem:[%s5 + $0x130] sm:$0xff] %v1178
  %1383 = vst [vmem:[%s5 + $0x138] sm:$0xff] %v1181
  %1384 = vst [vmem:[%s5 + $0x140] sm:$0xff] %v1186
  %1385 = vst [vmem:[%s5 + $0x148] sm:$0xff] %v1189
  %1386 = vst [vmem:[%s5 + $0x150] sm:$0xff] %v1194
  %1387 = vst [vmem:[%s5 + $0x158] sm:$0xff] %v1197
  %1388 = vst [vmem:[%s5 + $0x160] sm:$0xff] %v1202
  %1389 = vst [vmem:[%s5 + $0x168] sm:$0xff] %v1205
  %1390 = vst [vmem:[%s5 + $0x170] sm:$0xff] %v1210
  %1391 = vst [vmem:[%s5 + $0x178] sm:$0xff] %v1213
  %1392 = vst [vmem:[%s5 + $0x180] sm:$0xff] %v1218
  %1393 = vst [vmem:[%s5 + $0x188] sm:$0xff] %v1221
  %1394 = vst [vmem:[%s5 + $0x190] sm:$0xff] %v1226
  %1395 = vst [vmem:[%s5 + $0x198] sm:$0xff] %v1229
  %1396 = vst [vmem:[%s5 + $0x1a0] sm:$0xff] %v1234
  %1397 = vst [vmem:[%s5 + $0x1a8] sm:$0xff] %v1237
  %1398 = vst [vmem:[%s5 + $0x1b0] sm:$0xff] %v1242
  %1399 = vst [vmem:[%s5 + $0x1b8] sm:$0xff] %v1245
  %1400 = vst [vmem:[%s5 + $0x1c0] sm:$0xff] %v1250
  %1401 = vst [vmem:[%s5 + $0x1c8] sm:$0xff] %v1253
  %1402 = vst [vmem:[%s5 + $0x1d0] sm:$0xff] %v1258
  %1403 = vst [vmem:[%s5 + $0x1d8] sm:$0xff] %v1261
  %1404 = vst [vmem:[%s5 + $0x1e0] sm:$0xff] %v1266
  %1405 = vst [vmem:[%s5 + $0x1e8] sm:$0xff] %v1269
  %1406 = vst [vmem:[%s5 + $0x1f0] sm:$0xff] %v1274
  %1407 = vst [vmem:[%s5 + $0x1f8] sm:$0xff] %v1277
  %v1408 = vld [vmem:[%s6] sm:$0x1]
  %v1409 = vadd.f32 %v412, %v415
  %v1410 = vadd.f32 %v1409, %v420
  %v1411 = vadd.f32 %v1410, %v423
  %v1412 = vadd.f32 %v1411, %v428
  %v1413 = vadd.f32 %v1412, %v431
  %v1414 = vadd.f32 %v1413, %v436
  %v1415 = vadd.f32 %v1414, %v439
  %v1416 = vadd.f32 %v1415, %v444
  %v1417 = vadd.f32 %v1416, %v447
  %v1418 = vadd.f32 %v1417, %v452
  %v1419 = vadd.f32 %v1418, %v455
  %v1420 = vadd.f32 %v1419, %v460
  %v1421 = vadd.f32 %v1420, %v463
  %v1422 = vadd.f32 %v1421, %v468
  %v1423 = vadd.f32 %v1422, %v471
  %v1424 = vadd.f32 %v1423, %v476
  %v1425 = vadd.f32 %v1424, %v479
  %v1426 = vadd.f32 %v1425, %v484
  %v1427 = vadd.f32 %v1426, %v487
  %v1428 = vadd.f32 %v1427, %v492
  %v1429 = vadd.f32 %v1428, %v495
  %v1430 = vadd.f32 %v1429, %v500
  %v1431 = vadd.f32 %v1430, %v503
  %v1432 = vadd.f32 %v1431, %v508
  %v1433 = vadd.f32 %v1432, %v511
  %v1434 = vadd.f32 %v1433, %v516
  %v1435 = vadd.f32 %v1434, %v519
  %v1436 = vadd.f32 %v1435, %v524
  %v1437 = vadd.f32 %v1436, %v527
  %v1438 = vadd.f32 %v1437, %v532
  %v1439 = vadd.f32 %v1438, %v535
  %v1440 = vadd.f32 %v1439, %v540
  %v1441 = vadd.f32 %v1440, %v543
  %v1442 = vadd.f32 %v1441, %v548
  %v1443 = vadd.f32 %v1442, %v551
  %v1444 = vadd.f32 %v1443, %v556
  %v1445 = vadd.f32 %v1444, %v559
  %v1446 = vadd.f32 %v1445, %v564
  %v1447 = vadd.f32 %v1446, %v567
  %v1448 = vadd.f32 %v1447, %v572
  %v1449 = vadd.f32 %v1448, %v575
  %v1450 = vadd.f32 %v1449, %v580
  %v1451 = vadd.f32 %v1450, %v583
  %v1452 = vadd.f32 %v1451, %v588
  %v1453 = vadd.f32 %v1452, %v591
  %v1454 = vadd.f32 %v1453, %v596
  %v1455 = vadd.f32 %v1454, %v599
  %v1456 = vadd.f32 %v1455, %v604
  %v1457 = vadd.f32 %v1456, %v607
  %v1458 = vadd.f32 %v1457, %v612
  %v1459 = vadd.f32 %v1458, %v615
  %v1460 = vadd.f32 %v1459, %v620
  %v1461 = vadd.f32 %v1460, %v623
  %v1462 = vadd.f32 %v1461, %v628
  %v1463 = vadd.f32 %v1462, %v631
  %v1464 = vadd.f32 %v1463, %v636
  %v1465 = vadd.f32 %v1464, %v639
  %v1466 = vadd.f32 %v1465, %v644
  %v1467 = vadd.f32 %v1466, %v647
  %v1468 = vadd.f32 %v1467, %v652
  %v1469 = vadd.f32 %v1468, %v655
  %v1470 = vadd.f32 %v1469, %v660
  %v1471 = vadd.f32 %v1470, %v663
  %v1472 = vrot.slane %v1471, 4
  %v1473 = vadd.f32 %v1471, %v1472
  %v1474 = vrot.slane %v1473, 2
  %v1475 = vadd.f32 %v1473, %v1474
  %v1476 = vrot.slane %v1475, 1
  %v1477 = vadd.f32 %v1475, %v1476
  %v1478 = vadd.f32 %v1408, %v1477
  %1479 = vst [vmem:[%s6] sm:$0x1] %v1478
  %v1480 = vld [vmem:[%s7] sm:$0x1]
  %v1481 = vmul.f32 %v412, %v412
  %v1482 = vmul.f32 %v415, %v415
  %v1483 = vmul.f32 %v420, %v420
  %v1484 = vmul.f32 %v423, %v423
  %v1485 = vmul.f32 %v428, %v428
  %v1486 = vmul.f32 %v431, %v431
  %v1487 = vmul.f32 %v436, %v436
  %v1488 = vmul.f32 %v439, %v439
  %v1489 = vmul.f32 %v444, %v444
  %v1490 = vmul.f32 %v447, %v447
  %v1491 = vmul.f32 %v452, %v452
  %v1492 = vmul.f32 %v455, %v455
  %v1493 = vmul.f32 %v460, %v460
  %v1494 = vmul.f32 %v463, %v463
  %v1495 = vmul.f32 %v468, %v468
  %v1496 = vmul.f32 %v471, %v471
  %v1497 = vmul.f32 %v476, %v476
  %v1498 = vmul.f32 %v479, %v479
  %v1499 = vmul.f32 %v484, %v484
  %v1500 = vmul.f32 %v487, %v487
  %v1501 = vmul.f32 %v492, %v492
  %v1502 = vmul.f32 %v495, %v495
  %v1503 = vmul.f32 %v500, %v500
  %v1504 = vmul.f32 %v503, %v503
  %v1505 = vmul.f32 %v508, %v508
  %v1506 = vmul.f32 %v511, %v511
  %v1507 = vmul.f32 %v516, %v516
  %v1508 = vmul.f32 %v519, %v519
  %v1509 = vmul.f32 %v524, %v524
  %v1510 = vmul.f32 %v527, %v527
  %v1511 = vmul.f32 %v532, %v532
  %v1512 = vmul.f32 %v535, %v535
  %v1513 = vmul.f32 %v540, %v540
  %v1514 = vmul.f32 %v543, %v543
  %v1515 = vmul.f32 %v548, %v548
  %v1516 = vmul.f32 %v551, %v551
  %v1517 = vmul.f32 %v556, %v556
  %v1518 = vmul.f32 %v559, %v559
  %v1519 = vmul.f32 %v564, %v564
  %v1520 = vmul.f32 %v567, %v567
  %v1521 = vmul.f32 %v572, %v572
  %v1522 = vmul.f32 %v575, %v575
  %v1523 = vmul.f32 %v580, %v580
  %v1524 = vmul.f32 %v583, %v583
  %v1525 = vmul.f32 %v588, %v588
  %v1526 = vmul.f32 %v591, %v591
  %v1527 = vmul.f32 %v596, %v596
  %v1528 = vmul.f32 %v599, %v599
  %v1529 = vmul.f32 %v604, %v604
  %v1530 = vmul.f32 %v607, %v607
  %v1531 = vmul.f32 %v612, %v612
  %v1532 = vmul.f32 %v615, %v615
  %v1533 = vmul.f32 %v620, %v620
  %v1534 = vmul.f32 %v623, %v623
  %v1535 = vmul.f32 %v628, %v628
  %v1536 = vmul.f32 %v631, %v631
  %v1537 = vmul.f32 %v636, %v636
  %v1538 = vmul.f32 %v639, %v639
  %v1539 = vmul.f32 %v644, %v644
  %v1540 = vmul.f32 %v647, %v647
  %v1541 = vmul.f32 %v652, %v652
  %v1542 = vmul.f32 %v655, %v655
  %v1543 = vmul.f32 %v660, %v660
  %v1544 = vmul.f32 %v663, %v663
  %v1545 = vadd.f32 %v1481, %v1482
  %v1546 = vadd.f32 %v1545, %v1483
  %v1547 = vadd.f32 %v1546, %v1484
  %v1548 = vadd.f32 %v1547, %v1485
  %v1549 = vadd.f32 %v1548, %v1486
  %v1550 = vadd.f32 %v1549, %v1487
  %v1551 = vadd.f32 %v1550, %v1488
  %v1552 = vadd.f32 %v1551, %v1489
  %v1553 = vadd.f32 %v1552, %v1490
  %v1554 = vadd.f32 %v1553, %v1491
  %v1555 = vadd.f32 %v1554, %v1492
  %v1556 = vadd.f32 %v1555, %v1493
  %v1557 = vadd.f32 %v1556, %v1494
  %v1558 = vadd.f32 %v1557, %v1495
  %v1559 = vadd.f32 %v1558, %v1496
  %v1560 = vadd.f32 %v1559, %v1497
  %v1561 = vadd.f32 %v1560, %v1498
  %v1562 = vadd.f32 %v1561, %v1499
  %v1563 = vadd.f32 %v1562, %v1500
  %v1564 = vadd.f32 %v1563, %v1501
  %v1565 = vadd.f32 %v1564, %v1502
  %v1566 = vadd.f32 %v1565, %v1503
  %v1567 = vadd.f32 %v1566, %v1504
  %v1568 = vadd.f32 %v1567, %v1505
  %v1569 = vadd.f32 %v1568, %v1506
  %v1570 = vadd.f32 %v1569, %v1507
  %v1571 = vadd.f32 %v1570, %v1508
  %v1572 = vadd.f32 %v1571, %v1509
  %v1573 = vadd.f32 %v1572, %v1510
  %v1574 = vadd.f32 %v1573, %v1511
  %v1575 = vadd.f32 %v1574, %v1512
  %v1576 = vadd.f32 %v1575, %v1513
  %v1577 = vadd.f32 %v1576, %v1514
  %v1578 = vadd.f32 %v1577, %v1515
  %v1579 = vadd.f32 %v1578, %v1516
  %v1580 = vadd.f32 %v1579, %v1517
  %v1581 = vadd.f32 %v1580, %v1518
  %v1582 = vadd.f32 %v1581, %v1519
  %v1583 = vadd.f32 %v1582, %v1520
  %v1584 = vadd.f32 %v1583, %v1521
  %v1585 = vadd.f32 %v1584, %v1522
  %v1586 = vadd.f32 %v1585, %v1523
  %v1587 = vadd.f32 %v1586, %v1524
  %v1588 = vadd.f32 %v1587, %v1525
  %v1589 = vadd.f32 %v1588, %v1526
  %v1590 = vadd.f32 %v1589, %v1527
  %v1591 = vadd.f32 %v1590, %v1528
  %v1592 = vadd.f32 %v1591, %v1529
  %v1593 = vadd.f32 %v1592, %v1530
  %v1594 = vadd.f32 %v1593, %v1531
  %v1595 = vadd.f32 %v1594, %v1532
  %v1596 = vadd.f32 %v1595, %v1533
  %v1597 = vadd.f32 %v1596, %v1534
  %v1598 = vadd.f32 %v1597, %v1535
  %v1599 = vadd.f32 %v1598, %v1536
  %v1600 = vadd.f32 %v1599, %v1537
  %v1601 = vadd.f32 %v1600, %v1538
  %v1602 = vadd.f32 %v1601, %v1539
  %v1603 = vadd.f32 %v1602, %v1540
  %v1604 = vadd.f32 %v1603, %v1541
  %v1605 = vadd.f32 %v1604, %v1542
  %v1606 = vadd.f32 %v1605, %v1543
  %v1607 = vadd.f32 %v1606, %v1544
  %v1608 = vrot.slane %v1607, 4
  %v1609 = vadd.f32 %v1607, %v1608
  %v1610 = vrot.slane %v1609, 2
  %v1611 = vadd.f32 %v1609, %v1610
  %v1612 = vrot.slane %v1611, 1
  %v1613 = vadd.f32 %v1611, %v1612
  %v1614 = vadd.f32 %v1480, %v1613
  %1615 = vst [vmem:[%s7] sm:$0x1] %v1614
  %v1616 = vld [vmem:[%s8] sm:$0x1]
  %v1617 = vadd.f32 %v1026, %v1029
  %v1618 = vadd.f32 %v1617, %v1034
  %v1619 = vadd.f32 %v1618, %v1037
  %v1620 = vadd.f32 %v1619, %v1042
  %v1621 = vadd.f32 %v1620, %v1045
  %v1622 = vadd.f32 %v1621, %v1050
  %v1623 = vadd.f32 %v1622, %v1053
  %v1624 = vadd.f32 %v1623, %v1058
  %v1625 = vadd.f32 %v1624, %v1061
  %v1626 = vadd.f32 %v1625, %v1066
  %v1627 = vadd.f32 %v1626, %v1069
  %v1628 = vadd.f32 %v1627, %v1074
  %v1629 = vadd.f32 %v1628, %v1077
  %v1630 = vadd.f32 %v1629, %v1082
  %v1631 = vadd.f32 %v1630, %v1085
  %v1632 = vadd.f32 %v1631, %v1090
  %v1633 = vadd.f32 %v1632, %v1093
  %v1634 = vadd.f32 %v1633, %v1098
  %v1635 = vadd.f32 %v1634, %v1101
  %v1636 = vadd.f32 %v1635, %v1106
  %v1637 = vadd.f32 %v1636, %v1109
  %v1638 = vadd.f32 %v1637, %v1114
  %v1639 = vadd.f32 %v1638, %v1117
  %v1640 = vadd.f32 %v1639, %v1122
  %v1641 = vadd.f32 %v1640, %v1125
  %v1642 = vadd.f32 %v1641, %v1130
  %v1643 = vadd.f32 %v1642, %v1133
  %v1644 = vadd.f32 %v1643, %v1138
  %v1645 = vadd.f32 %v1644, %v1141
  %v1646 = vadd.f32 %v1645, %v1146
  %v1647 = vadd.f32 %v1646, %v1149
  %v1648 = vadd.f32 %v1647, %v1154
  %v1649 = vadd.f32 %v1648, %v1157
  %v1650 = vadd.f32 %v1649, %v1162
  %v1651 = vadd.f32 %v1650, %v1165
  %v1652 = vadd.f32 %v1651, %v1170
  %v1653 = vadd.f32 %v1652, %v1173
  %v1654 = vadd.f32 %v1653, %v1178
  %v1655 = vadd.f32 %v1654, %v1181
  %v1656 = vadd.f32 %v1655, %v1186
  %v1657 = vadd.f32 %v1656, %v1189
  %v1658 = vadd.f32 %v1657, %v1194
  %v1659 = vadd.f32 %v1658, %v1197
  %v1660 = vadd.f32 %v1659, %v1202
  %v1661 = vadd.f32 %v1660, %v1205
  %v1662 = vadd.f32 %v1661, %v1210
  %v1663 = vadd.f32 %v1662, %v1213
  %v1664 = vadd.f32 %v1663, %v1218
  %v1665 = vadd.f32 %v1664, %v1221
  %v1666 = vadd.f32 %v1665, %v1226
  %v1667 = vadd.f32 %v1666, %v1229
  %v1668 = vadd.f32 %v1667, %v1234
  %v1669 = vadd.f32 %v1668, %v1237
  %v1670 = vadd.f32 %v1669, %v1242
  %v1671 = vadd.f32 %v1670, %v1245
  %v1672 = vadd.f32 %v1671, %v1250
  %v1673 = vadd.f32 %v1672, %v1253
  %v1674 = vadd.f32 %v1673, %v1258
  %v1675 = vadd.f32 %v1674, %v1261
  %v1676 = vadd.f32 %v1675, %v1266
  %v1677 = vadd.f32 %v1676, %v1269
  %v1678 = vadd.f32 %v1677, %v1274
  %v1679 = vadd.f32 %v1678, %v1277
  %v1680 = vrot.slane %v1679, 4
  %v1681 = vadd.f32 %v1679, %v1680
  %v1682 = vrot.slane %v1681, 2
  %v1683 = vadd.f32 %v1681, %v1682
  %v1684 = vrot.slane %v1683, 1
  %v1685 = vadd.f32 %v1683, %v1684
  %v1686 = vadd.f32 %v1616, %v1685
  %1687 = vst [vmem:[%s8] sm:$0x1] %v1686
  %v1688 = vld [vmem:[%s9] sm:$0x1]
  %v1689 = vmul.f32 %v1026, %v1026
  %v1690 = vmul.f32 %v1029, %v1029
  %v1691 = vmul.f32 %v1034, %v1034
  %v1692 = vmul.f32 %v1037, %v1037
  %v1693 = vmul.f32 %v1042, %v1042
  %v1694 = vmul.f32 %v1045, %v1045
  %v1695 = vmul.f32 %v1050, %v1050
  %v1696 = vmul.f32 %v1053, %v1053
  %v1697 = vmul.f32 %v1058, %v1058
  %v1698 = vmul.f32 %v1061, %v1061
  %v1699 = vmul.f32 %v1066, %v1066
  %v1700 = vmul.f32 %v1069, %v1069
  %v1701 = vmul.f32 %v1074, %v1074
  %v1702 = vmul.f32 %v1077, %v1077
  %v1703 = vmul.f32 %v1082, %v1082
  %v1704 = vmul.f32 %v1085, %v1085
  %v1705 = vmul.f32 %v1090, %v1090
  %v1706 = vmul.f32 %v1093, %v1093
  %v1707 = vmul.f32 %v1098, %v1098
  %v1708 = vmul.f32 %v1101, %v1101
  %v1709 = vmul.f32 %v1106, %v1106
  %v1710 = vmul.f32 %v1109, %v1109
  %v1711 = vmul.f32 %v1114, %v1114
  %v1712 = vmul.f32 %v1117, %v1117
  %v1713 = vmul.f32 %v1122, %v1122
  %v1714 = vmul.f32 %v1125, %v1125
  %v1715 = vmul.f32 %v1130, %v1130
  %v1716 = vmul.f32 %v1133, %v1133
  %v1717 = vmul.f32 %v1138, %v1138
  %v1718 = vmul.f32 %v1141, %v1141
  %v1719 = vmul.f32 %v1146, %v1146
  %v1720 = vmul.f32 %v1149, %v1149
  %v1721 = vmul.f32 %v1154, %v1154
  %v1722 = vmul.f32 %v1157, %v1157
  %v1723 = vmul.f32 %v1162, %v1162
  %v1724 = vmul.f32 %v1165, %v1165
  %v1725 = vmul.f32 %v1170, %v1170
  %v1726 = vmul.f32 %v1173, %v1173
  %v1727 = vmul.f32 %v1178, %v1178
  %v1728 = vmul.f32 %v1181, %v1181
  %v1729 = vmul.f32 %v1186, %v1186
  %v1730 = vmul.f32 %v1189, %v1189
  %v1731 = vmul.f32 %v1194, %v1194
  %v1732 = vmul.f32 %v1197, %v1197
  %v1733 = vmul.f32 %v1202, %v1202
  %v1734 = vmul.f32 %v1205, %v1205
  %v1735 = vmul.f32 %v1210, %v1210
  %v1736 = vmul.f32 %v1213, %v1213
  %v1737 = vmul.f32 %v1218, %v1218
  %v1738 = vmul.f32 %v1221, %v1221
  %v1739 = vmul.f32 %v1226, %v1226
  %v1740 = vmul.f32 %v1229, %v1229
  %v1741 = vmul.f32 %v1234, %v1234
  %v1742 = vmul.f32 %v1237, %v1237
  %v1743 = vmul.f32 %v1242, %v1242
  %v1744 = vmul.f32 %v1245, %v1245
  %v1745 = vmul.f32 %v1250, %v1250
  %v1746 = vmul.f32 %v1253, %v1253
  %v1747 = vmul.f32 %v1258, %v1258
  %v1748 = vmul.f32 %v1261, %v1261
  %v1749 = vmul.f32 %v1266, %v1266
  %v1750 = vmul.f32 %v1269, %v1269
  %v1751 = vmul.f32 %v1274, %v1274
  %v1752 = vmul.f32 %v1277, %v1277
  %v1753 = vadd.f32 %v1689, %v1690
  %v1754 = vadd.f32 %v1753, %v1691
  %v1755 = vadd.f32 %v1754, %v1692
  %v1756 = vadd.f32 %v1755, %v1693
  %v1757 = vadd.f32 %v1756, %v1694
  %v1758 = vadd.f32 %v1757, %v1695
  %v1759 = vadd.f32 %v1758, %v1696
  %v1760 = vadd.f32 %v1759, %v1697
  %v1761 = vadd.f32 %v1760, %v1698
  %v1762 = vadd.f32 %v1761, %v1699
  %v1763 = vadd.f32 %v1762, %v1700
  %v1764 = vadd.f32 %v1763, %v1701
  %v1765 = vadd.f32 %v1764, %v1702
  %v1766 = vadd.f32 %v1765, %v1703
  %v1767 = vadd.f32 %v1766, %v1704
  %v1768 = vadd.f32 %v1767, %v1705
  %v1769 = vadd.f32 %v1768, %v1706
  %v1770 = vadd.f32 %v1769, %v1707
  %v1771 = vadd.f32 %v1770, %v1708
  %v1772 = vadd.f32 %v1771, %v1709
  %v1773 = vadd.f32 %v1772, %v1710
  %v1774 = vadd.f32 %v1773, %v1711
  %v1775 = vadd.f32 %v1774, %v1712
  %v1776 = vadd.f32 %v1775, %v1713
  %v1777 = vadd.f32 %v1776, %v1714
  %v1778 = vadd.f32 %v1777, %v1715
  %v1779 = vadd.f32 %v1778, %v1716
  %v1780 = vadd.f32 %v1779, %v1717
  %v1781 = vadd.f32 %v1780, %v1718
  %v1782 = vadd.f32 %v1781, %v1719
  %v1783 = vadd.f32 %v1782, %v1720
  %v1784 = vadd.f32 %v1783, %v1721
  %v1785 = vadd.f32 %v1784, %v1722
  %v1786 = vadd.f32 %v1785, %v1723
  %v1787 = vadd.f32 %v1786, %v1724
  %v1788 = vadd.f32 %v1787, %v1725
  %v1789 = vadd.f32 %v1788, %v1726
  %v1790 = vadd.f32 %v1789, %v1727
  %v1791 = vadd.f32 %v1790, %v1728
  %v1792 = vadd.f32 %v1791, %v1729
  %v1793 = vadd.f32 %v1792, %v1730
  %v1794 = vadd.f32 %v1793, %v1731
  %v1795 = vadd.f32 %v1794, %v1732
  %v1796 = vadd.f32 %v1795, %v1733
  %v1797 = vadd.f32 %v1796, %v1734
  %v1798 = vadd.f32 %v1797, %v1735
  %v1799 = vadd.f32 %v1798, %v1736
  %v1800 = vadd.f32 %v1799, %v1737
  %v1801 = vadd.f32 %v1800, %v1738
  %v1802 = vadd.f32 %v1801, %v1739
  %v1803 = vadd.f32 %v1802, %v1740
  %v1804 = vadd.f32 %v1803, %v1741
  %v1805 = vadd.f32 %v1804, %v1742
  %v1806 = vadd.f32 %v1805, %v1743
  %v1807 = vadd.f32 %v1806, %v1744
  %v1808 = vadd.f32 %v1807, %v1745
  %v1809 = vadd.f32 %v1808, %v1746
  %v1810 = vadd.f32 %v1809, %v1747
  %v1811 = vadd.f32 %v1810, %v1748
  %v1812 = vadd.f32 %v1811, %v1749
  %v1813 = vadd.f32 %v1812, %v1750
  %v1814 = vadd.f32 %v1813, %v1751
  %v1815 = vadd.f32 %v1814, %v1752
  %v1816 = vrot.slane %v1815, 4
  %v1817 = vadd.f32 %v1815, %v1816
  %v1818 = vrot.slane %v1817, 2
  %v1819 = vadd.f32 %v1817, %v1818
  %v1820 = vrot.slane %v1819, 1
  %v1821 = vadd.f32 %v1819, %v1820
  %v1822 = vadd.f32 %v1688, %v1821
  %1823 = vst [vmem:[%s9] sm:$0x1] %v1822
  // Predicated region
  $region22: #{resblk_forward.4} parent=0 // pred_check
    _
  $region23: #{resblk_forward.4} parent=0 // pred_check_branch
    %1825 = sbr.rel (0) target = $region25
  $region24: #{resblk_forward.4} parent=0 // pred_region
    _
  $region25: #{resblk_forward.4} parent=0 // pred_fallthru
    _
  // Predicated region
  $region26: #{resblk_forward.4} parent=0 // pred_check
    _
  $region27: #{resblk_forward.4} parent=0 // pred_check_branch
    %1827 = sbr.rel (0) target = $region29
  $region28: #{resblk_forward.4} parent=0 // pred_region
    _
  $region29: #{resblk_forward.4} parent=0 // pred_fallthru
    _
  // Predicated region
  $region30: #{resblk_forward.4} parent=0 // pred_check
    _
  $region31: #{resblk_forward.4} parent=0 // pred_check_branch
    %1829 = sbr.rel (0) target = $region33
  $region32: #{resblk_forward.4} parent=0 // pred_region
    _
  $region33: #{resblk_forward.4} parent=0 // pred_fallthru
    _
  // Predicated region
  $region34: #{resblk_forward.4} parent=0 // pred_check
    _
  $region35: #{resblk_forward.4} parent=0 // pred_check_branch
    %1831 = sbr.rel (0) target = $region37
  $region36: #{resblk_forward.4} parent=0 // pred_region
    _
  $region37: #{resblk_forward.4} parent=0 // pred_fallthru
    _
  // Predicated region
  $region38: #{resblk_forward.4} parent=0 // pred_check
    _
  $region39: #{resblk_forward.4} parent=0 // pred_check_branch
    %1833 = sbr.rel (0) target = $region41
  $region40: #{resblk_forward.4} parent=0 // pred_region
    _
  $region41: #{resblk_forward.4} parent=0 // pred_fallthru
    _
  // Predicated region
  $region42: #{resblk_forward.4} parent=0 // pred_check
    _
  $region43: #{resblk_forward.4} parent=0 // pred_check_branch
    %1835 = sbr.rel (0) target = $region45
  $region44: #{resblk_forward.4} parent=0 // pred_region
    _
  $region45: #{resblk_forward.4} parent=0 // pred_fallthru
    _
  // Predicated region
  $region46: #{resblk_forward.4} parent=0 // pred_check
    _
  $region47: #{resblk_forward.4} parent=0 // pred_check_branch
    %1837 = sbr.rel (0) target = $region49
  $region48: #{resblk_forward.4} parent=0 // pred_region
    _
  $region49: #{resblk_forward.4} parent=0 // pred_fallthru
    _
  // Predicated region
  $region50: #{resblk_forward.4} parent=0 // pred_check
    _
  $region51: #{resblk_forward.4} parent=0 // pred_check_branch
    %1839 = sbr.rel (0) target = $region53
  $region52: #{resblk_forward.4} parent=0 // pred_region
    _
  $region53: #{resblk_forward.4} parent=0 // pred_fallthru
    _
  // Predicated region
  $region54: #{resblk_forward.4} parent=0 // pred_check
    _
  $region55: #{resblk_forward.4} parent=0 // pred_check_branch
    %1841 = sbr.rel (0) target = $region57
  $region56: #{resblk_forward.4} parent=0 // pred_region
    _
  $region57: #{resblk_forward.4} parent=0 // pred_fallthru
    _
  // Predicated region
  $region58: #{resblk_forward.4} parent=0 // pred_check
    _
  $region59: #{resblk_forward.4} parent=0 // pred_check_branch
    %1843 = sbr.rel (0) target = $region61
  $region60: #{resblk_forward.4} parent=0 // pred_region
    _
  $region61: #{resblk_forward.4} parent=0 // pred_fallthru
    _
  // Predicated region
  $region62: #{resblk_forward.4} parent=0 // pred_check
    _
  $region63: #{resblk_forward.4} parent=0 // pred_check_branch
    %1845 = sbr.rel (0) target = $region65
  $region64: #{resblk_forward.4} parent=0 // pred_region
    _
  $region65: #{resblk_forward.4} parent=0 // pred_fallthru
    _
  // Predicated region
  $region66: #{resblk_forward.4} parent=0 // pred_check
    _
  $region67: #{resblk_forward.4} parent=0 // pred_check_branch
    %1847 = sbr.rel (0) target = $region69
  $region68: #{resblk_forward.4} parent=0 // pred_region
    _
  $region69: #{resblk_forward.4} parent=0 // pred_fallthru
    _

// kernel: resblk_forward.6
$region0: #{resblk_forward.6}
  #allocation0 [shape = 'u32[]', space=smem, size = 0x4, offset = 0x4, fixed_abs, tag = 'smem constant byte address 0x4 - core index']
  #allocation1 [shape = 'u32[144,128]{1,0:T(1,128)}', space=vmem, size = 0x12000, scoped, tag = 'internal scratch']
  %s0 = inlined_call_operand.vmem [shape: bf16[512,72], index: 0, kind: input, shape index: {}]
  %s1 = inlined_call_operand.vmem [shape: bf16[72,128], index: 1, kind: input, shape index: {}]
  %s2 = inlined_call_operand.vmem [shape: f32[512,128], index: 2, kind: output, shape index: {0}]
  %s3 = inlined_call_operand.vmem [shape: f32[1,128], index: 3, kind: output, shape index: {1}]
  %s4 = inlined_call_operand.vmem [shape: f32[1,128], index: 4, kind: output, shape index: {2}]
  %5 = xla_tuple %s2, %s3, %s4
  %s6 = sld [smem:[#allocation0]]
  $region38: #{resblk_forward.6} parent=0
    _
  %s8 = ssub.s32 1, %s6
  %s9 = scalar_select 0, %s8, %s6
  // Predicated region
  $region2: #{resblk_forward.6} parent=0 // pred_check
    _
  $region3: #{resblk_forward.6} parent=0 // pred_check_branch
    %11 = sbr.rel (0) target = $region5
  $region4: #{resblk_forward.6} parent=0 // pred_region
    _
  $region5: #{resblk_forward.6} parent=0 // pred_fallthru
    _
  // Predicated region
  $region6: #{resblk_forward.6} parent=0 // pred_check
    _
  $region7: #{resblk_forward.6} parent=0 // pred_check_branch
    %13 = sbr.rel (0) target = $region9
  $region8: #{resblk_forward.6} parent=0 // pred_region
    _
  $region9: #{resblk_forward.6} parent=0 // pred_fallthru
    _
  %p15 = scmp.eq.s32.totalorder 0, 0
  // Predicated region
  $region10: #{resblk_forward.6} parent=0 // pred_check
    %p16 = pneg %p15
  $region11: #{resblk_forward.6} parent=0 // pred_check_branch
    %18 = sbr.rel (%p16) target = $region13
  $region12: #{resblk_forward.6} parent=0 // pred_region
    %19 = vst [vmem:[%s3] sm:$0x1] 0.0
    %20 = vst [vmem:[%s4] sm:$0x1] 0.0
  $region13: #{resblk_forward.6} parent=0 // pred_fallthru
    _
  %v21 = vld [vmem:[%s0] sm:$0xf]
  %v22 = vld [vmem:[%s0 + $0x4] sm:$0xf]
  %v23 = vld [vmem:[%s0 + $0x8] sm:$0xf]
  %v24 = vld [vmem:[%s0 + $0xc] sm:$0xf]
  %v25 = vld [vmem:[%s0 + $0x10] sm:$0xf]
  %v26 = vld [vmem:[%s0 + $0x14] sm:$0xf]
  %v27 = vld [vmem:[%s0 + $0x18] sm:$0xf]
  %v28 = vld [vmem:[%s0 + $0x1c] sm:$0xf]
  %v29 = vld [vmem:[%s0 + $0x20] sm:$0xf]
  %v30 = vld [vmem:[%s0 + $0x24] sm:$0xf]
  %v31 = vld [vmem:[%s0 + $0x28] sm:$0xf]
  %v32 = vld [vmem:[%s0 + $0x2c] sm:$0xf]
  %v33 = vld [vmem:[%s0 + $0x30] sm:$0xf]
  %v34 = vld [vmem:[%s0 + $0x34] sm:$0xf]
  %v35 = vld [vmem:[%s0 + $0x38] sm:$0xf]
  %v36 = vld [vmem:[%s0 + $0x3c] sm:$0xf]
  %v37 = vld [vmem:[%s0 + $0x40] sm:$0xf]
  %v38 = vld [vmem:[%s0 + $0x44] sm:$0xf]
  %v39 = vld [vmem:[%s0 + $0x48] sm:$0xf]
  %v40 = vld [vmem:[%s0 + $0x4c] sm:$0xf]
  %v41 = vld [vmem:[%s0 + $0x50] sm:$0xf]
  %v42 = vld [vmem:[%s0 + $0x54] sm:$0xf]
  %v43 = vld [vmem:[%s0 + $0x58] sm:$0xf]
  %v44 = vld [vmem:[%s0 + $0x5c] sm:$0xf]
  %v45 = vld [vmem:[%s0 + $0x60] sm:$0xf]
  %v46 = vld [vmem:[%s0 + $0x64] sm:$0xf]
  %v47 = vld [vmem:[%s0 + $0x68] sm:$0xf]
  %v48 = vld [vmem:[%s0 + $0x6c] sm:$0xf]
  %v49 = vld [vmem:[%s0 + $0x70] sm:$0xf]
  %v50 = vld [vmem:[%s0 + $0x74] sm:$0xf]
  %v51 = vld [vmem:[%s0 + $0x78] sm:$0xf]
  %v52 = vld [vmem:[%s0 + $0x7c] sm:$0xf]
  %v53 = vld [vmem:[%s0 + $0x80] sm:$0xf]
  %v54 = vld [vmem:[%s0 + $0x84] sm:$0xf]
  %v55 = vld [vmem:[%s0 + $0x88] sm:$0xf]
  %v56 = vld [vmem:[%s0 + $0x8c] sm:$0xf]
  %v57 = vld [vmem:[%s0 + $0x90] sm:$0xf]
  %v58 = vld [vmem:[%s0 + $0x94] sm:$0xf]
  %v59 = vld [vmem:[%s0 + $0x98] sm:$0xf]
  %v60 = vld [vmem:[%s0 + $0x9c] sm:$0xf]
  %v61 = vld [vmem:[%s0 + $0xa0] sm:$0xf]
  %v62 = vld [vmem:[%s0 + $0xa4] sm:$0xf]
  %v63 = vld [vmem:[%s0 + $0xa8] sm:$0xf]
  %v64 = vld [vmem:[%s0 + $0xac] sm:$0xf]
  %v65 = vld [vmem:[%s0 + $0xb0] sm:$0xf]
  %v66 = vld [vmem:[%s0 + $0xb4] sm:$0xf]
  %v67 = vld [vmem:[%s0 + $0xb8] sm:$0xf]
  %v68 = vld [vmem:[%s0 + $0xbc] sm:$0xf]
  %v69 = vld [vmem:[%s0 + $0xc0] sm:$0xf]
  %v70 = vld [vmem:[%s0 + $0xc4] sm:$0xf]
  %v71 = vld [vmem:[%s0 + $0xc8] sm:$0xf]
  %v72 = vld [vmem:[%s0 + $0xcc] sm:$0xf]
  %v73 = vld [vmem:[%s0 + $0xd0] sm:$0xf]
  %v74 = vld [vmem:[%s0 + $0xd4] sm:$0xf]
  %v75 = vld [vmem:[%s0 + $0xd8] sm:$0xf]
  %v76 = vld [vmem:[%s0 + $0xdc] sm:$0xf]
  %v77 = vld [vmem:[%s0 + $0xe0] sm:$0xf]
  %v78 = vld [vmem:[%s0 + $0xe4] sm:$0xf]
  %v79 = vld [vmem:[%s0 + $0xe8] sm:$0xf]
  %v80 = vld [vmem:[%s0 + $0xec] sm:$0xf]
  %v81 = vld [vmem:[%s0 + $0xf0] sm:$0xf]
  %v82 = vld [vmem:[%s0 + $0xf4] sm:$0xf]
  %v83 = vld [vmem:[%s0 + $0xf8] sm:$0xf]
  %v84 = vld [vmem:[%s0 + $0xfc] sm:$0xf]
  %v85 = vld [vmem:[%s1] sm:$0xf]
  %v86 = vld [vmem:[%s1 + $0x4] sm:$0xf]
  %v87 = vld [vmem:[%s1 + $0x8] sm:$0xf]
  %v88 = vld [vmem:[%s1 + $0xc] sm:$0xf]
  %v89 = vld [vmem:[%s1 + $0x10] sm:$0xf]
  %v90 = vld [vmem:[%s1 + $0x14] sm:$0xf]
  %v91 = vld [vmem:[%s1 + $0x18] sm:$0xf]
  %v92 = vld [vmem:[%s1 + $0x1c] sm:$0xf]
  %v93 = vld [vmem:[%s1 + $0x20] sm:$0xf]
  %v158 = vunpack.c.l.b16 %v21
  %v159 = vunpack.c.l.b16 %v22
  %v160 = vunpack.c.l.b16 %v23
  %v161 = vunpack.c.l.b16 %v24
  %v162 = vunpack.c.l.b16 %v25
  %v163 = vunpack.c.l.b16 %v26
  %v164 = vunpack.c.l.b16 %v27
  %v165 = vunpack.c.l.b16 %v28
  %v166 = vunpack.c.l.b16 %v29
  %v167 = vunpack.c.l.b16 %v30
  %v168 = vunpack.c.l.b16 %v31
  %v169 = vunpack.c.l.b16 %v32
  %v170 = vunpack.c.l.b16 %v33
  %v171 = vunpack.c.l.b16 %v34
  %v172 = vunpack.c.l.b16 %v35
  %v173 = vunpack.c.l.b16 %v36
  %v174 = vunpack.c.l.b16 %v37
  %v175 = vunpack.c.l.b16 %v38
  %v176 = vunpack.c.l.b16 %v39
  %v177 = vunpack.c.l.b16 %v40
  %v178 = vunpack.c.l.b16 %v41
  %v179 = vunpack.c.l.b16 %v42
  %v180 = vunpack.c.l.b16 %v43
  %v181 = vunpack.c.l.b16 %v44
  %v182 = vunpack.c.l.b16 %v45
  %v183 = vunpack.c.l.b16 %v46
  %v184 = vunpack.c.l.b16 %v47
  %v185 = vunpack.c.l.b16 %v48
  %v186 = vunpack.c.l.b16 %v49
  %v187 = vunpack.c.l.b16 %v50
  %v188 = vunpack.c.l.b16 %v51
  %v189 = vunpack.c.l.b16 %v52
  %v190 = vunpack.c.l.b16 %v53
  %v191 = vunpack.c.l.b16 %v54
  %v192 = vunpack.c.l.b16 %v55
  %v193 = vunpack.c.l.b16 %v56
  %v194 = vunpack.c.l.b16 %v57
  %v195 = vunpack.c.l.b16 %v58
  %v196 = vunpack.c.l.b16 %v59
  %v197 = vunpack.c.l.b16 %v60
  %v198 = vunpack.c.l.b16 %v61
  %v199 = vunpack.c.l.b16 %v62
  %v200 = vunpack.c.l.b16 %v63
  %v201 = vunpack.c.l.b16 %v64
  %v202 = vunpack.c.l.b16 %v65
  %v203 = vunpack.c.l.b16 %v66
  %v204 = vunpack.c.l.b16 %v67
  %v205 = vunpack.c.l.b16 %v68
  %v206 = vunpack.c.l.b16 %v69
  %v207 = vunpack.c.l.b16 %v70
  %v208 = vunpack.c.l.b16 %v71
  %v209 = vunpack.c.l.b16 %v72
  %v210 = vunpack.c.l.b16 %v73
  %v211 = vunpack.c.l.b16 %v74
  %v212 = vunpack.c.l.b16 %v75
  %v213 = vunpack.c.l.b16 %v76
  %v214 = vunpack.c.l.b16 %v77
  %v215 = vunpack.c.l.b16 %v78
  %v216 = vunpack.c.l.b16 %v79
  %v217 = vunpack.c.l.b16 %v80
  %v218 = vunpack.c.l.b16 %v81
  %v219 = vunpack.c.l.b16 %v82
  %v220 = vunpack.c.l.b16 %v83
  %v221 = vunpack.c.l.b16 %v84
  %v222 = vpack.c.b16 %v159, %v158
  %v223 = vpack.c.b16 %v161, %v160
  %v224 = vpack.c.b16 %v163, %v162
  %v225 = vpack.c.b16 %v165, %v164
  %v226 = vpack.c.b16 %v167, %v166
  %v227 = vpack.c.b16 %v169, %v168
  %v228 = vpack.c.b16 %v171, %v170
  %v229 = vpack.c.b16 %v173, %v172
  %v230 = vpack.c.b16 %v175, %v174
  %v231 = vpack.c.b16 %v177, %v176
  %v232 = vpack.c.b16 %v179, %v178
  %v233 = vpack.c.b16 %v181, %v180
  %v234 = vpack.c.b16 %v183, %v182
  %v235 = vpack.c.b16 %v185, %v184
  %v236 = vpack.c.b16 %v187, %v186
  %v237 = vpack.c.b16 %v189, %v188
  %v238 = vpack.c.b16 %v191, %v190
  %v239 = vpack.c.b16 %v193, %v192
  %v240 = vpack.c.b16 %v195, %v194
  %v241 = vpack.c.b16 %v197, %v196
  %v242 = vpack.c.b16 %v199, %v198
  %v243 = vpack.c.b16 %v201, %v200
  %v244 = vpack.c.b16 %v203, %v202
  %v245 = vpack.c.b16 %v205, %v204
  %v246 = vpack.c.b16 %v207, %v206
  %v247 = vpack.c.b16 %v209, %v208
  %v248 = vpack.c.b16 %v211, %v210
  %v249 = vpack.c.b16 %v213, %v212
  %v250 = vpack.c.b16 %v215, %v214
  %v251 = vpack.c.b16 %v217, %v216
  %v252 = vpack.c.b16 %v219, %v218
  %v253 = vpack.c.b16 %v221, %v220
  %v263 = vunpack.c.l.b16 %v85
  %v264 = vunpack.c.l.b16 %v86
  %v265 = vunpack.c.l.b16 %v87
  %v266 = vunpack.c.l.b16 %v88
  %v267 = vunpack.c.l.b16 %v89
  %v268 = vunpack.c.l.b16 %v90
  %v269 = vunpack.c.l.b16 %v91
  %v270 = vunpack.c.l.b16 %v92
  %v271 = vunpack.c.l.b16 %v93
  %v272 = vpack.c.b16 %v264, %v263
  %v273 = vpack.c.b16 %v266, %v265
  %v274 = vpack.c.b16 %v268, %v267
  %v275 = vpack.c.b16 %v270, %v269
  %v276 = vpack.c.b16 %v271, %v271
  %vm281 = vcmask 588800
  %v283 = vsel %vm281, %v222, 0
  %v286 = vsel %vm281, %v223, 0
  %v289 = vsel %vm281, %v224, 0
  %v292 = vsel %vm281, %v225, 0
  %v295 = vsel %vm281, %v226, 0
  %v298 = vsel %vm281, %v227, 0
  %v301 = vsel %vm281, %v228, 0
  %v304 = vsel %vm281, %v229, 0
  %v307 = vsel %vm281, %v230, 0
  %v310 = vsel %vm281, %v231, 0
  %v313 = vsel %vm281, %v232, 0
  %v316 = vsel %vm281, %v233, 0
  %v319 = vsel %vm281, %v234, 0
  %v322 = vsel %vm281, %v235, 0
  %v325 = vsel %vm281, %v236, 0
  %v328 = vsel %vm281, %v237, 0
  %v331 = vsel %vm281, %v238, 0
  %v334 = vsel %vm281, %v239, 0
  %v337 = vsel %vm281, %v240, 0
  %v340 = vsel %vm281, %v241, 0
  %v343 = vsel %vm281, %v242, 0
  %v346 = vsel %vm281, %v243, 0
  %v349 = vsel %vm281, %v244, 0
  %v352 = vsel %vm281, %v245, 0
  %v355 = vsel %vm281, %v246, 0
  %v358 = vsel %vm281, %v247, 0
  %v361 = vsel %vm281, %v248, 0
  %v364 = vsel %vm281, %v249, 0
  %v367 = vsel %vm281, %v250, 0
  %v370 = vsel %vm281, %v251, 0
  %v373 = vsel %vm281, %v252, 0
  %v376 = vsel %vm281, %v253, 0
  %vm378 = vcmask 1043456
  %v380 = vsel %vm378, %v276, 0
  %382 = vmatprep.subr.bf16.mxu0 0
  %383 = vmatpush1.bf16.msra.mxu0 %v272
  %384 = vmatprep.subr.bf16.mxu0 0
  %385 = vmatpush1.bf16.msra.mxu0 %v273
  %386 = vmatprep.subr.bf16.mxu0 0
  %387 = vmatpush1.bf16.msra.mxu0 %v274
  %388 = vmatprep.subr.bf16.mxu0 0
  %389 = vmatpush1.bf16.msra.mxu0 %v275
  %390 = vmatprep.subr.bf16.mxu0 0
  %391 = vmatpush1.bf16.msra.mxu0 %v380
  %392 = vmatprep.subr.bf16.mxu0 0
  %393 = vmatpush1.bf16.msra.mxu0 0
  %394 = vmatprep.subr.bf16.mxu0 0
  %395 = vmatpush1.bf16.msra.mxu0 0
  %396 = vmatprep.subr.bf16.mxu0 0
  %397 = vmatpush1.bf16.msra.mxu0 0
  %398 = vmatprep.subr.bf16.mxu0 0
  %399 = vmatpush1.bf16.msra.mxu0 0
  %400 = vmatprep.subr.bf16.mxu0 0
  %401 = vmatpush1.bf16.msra.mxu0 0
  %402 = vmatprep.subr.bf16.mxu0 0
  %403 = vmatpush1.bf16.msra.mxu0 0
  %404 = vmatprep.subr.bf16.mxu0 0
  %405 = vmatpush1.bf16.msra.mxu0 0
  %406 = vmatprep.subr.bf16.mxu0 0
  %407 = vmatpush1.bf16.msra.mxu0 0
  %408 = vmatprep.subr.bf16.mxu0 0
  %409 = vmatpush1.bf16.msra.mxu0 0
  %410 = vmatprep.subr.bf16.mxu0 0
  %411 = vmatpush1.bf16.msra.mxu0 0
  %412 = vmatprep.subr.bf16.mxu0 0
  %413 = vmatpush1.bf16.msra.mxu0 0
  %414 = vmatprep.mubr.bf16.mxu0 0
  %415 = vmatmul.mubr.bf16.gmra.mrb[0].mxu0 %v283
  %v416 = vpop.f32.mrb[0].mxu0
  %v417 = vadd.f32 0.0, %v416
  %v418 = vpop.f32.mrb[0].mxu0
  %v419 = vpop.f32.mrb[0].mxu0
  %v420 = vadd.f32 0.0, %v419
  %v421 = vpop.f32.mrb[0].mxu0
  %422 = vmatprep.mubr.bf16.mxu0 0
  %423 = vmatmul.mubr.bf16.gmra.mrb[0].mxu0 %v286
  %v424 = vpop.f32.mrb[0].mxu0
  %v425 = vadd.f32 0.0, %v424
  %v426 = vpop.f32.mrb[0].mxu0
  %v427 = vpop.f32.mrb[0].mxu0
  %v428 = vadd.f32 0.0, %v427
  %v429 = vpop.f32.mrb[0].mxu0
  %430 = vmatprep.mubr.bf16.mxu0 0
  %431 = vmatmul.mubr.bf16.gmra.mrb[0].mxu0 %v289
  %v432 = vpop.f32.mrb[0].mxu0
  %v433 = vadd.f32 0.0, %v432
  %v434 = vpop.f32.mrb[0].mxu0
  %v435 = vpop.f32.mrb[0].mxu0
  %v436 = vadd.f32 0.0, %v435
  %v437 = vpop.f32.mrb[0].mxu0
  %438 = vmatprep.mubr.bf16.mxu0 0
  %439 = vmatmul.mubr.bf16.gmra.mrb[0].mxu0 %v292
  %v440 = vpop.f32.mrb[0].mxu0
  %v441 = vadd.f32 0.0, %v440
  %v442 = vpop.f32.mrb[0].mxu0
  %v443 = vpop.f32.mrb[0].mxu0
  %v444 = vadd.f32 0.0, %v443
  %v445 = vpop.f32.mrb[0].mxu0
  %446 = vmatprep.mubr.bf16.mxu0 0
  %447 = vmatmul.mubr.bf16.gmra.mrb[0].mxu0 %v295
  %v448 = vpop.f32.mrb[0].mxu0
  %v449 = vadd.f32 0.0, %v448
  %v450 = vpop.f32.mrb[0].mxu0
  %v451 = vpop.f32.mrb[0].mxu0
  %v452 = vadd.f32 0.0, %v451
  %v453 = vpop.f32.mrb[0].mxu0
  %454 = vmatprep.mubr.bf16.mxu0 0
  %455 = vmatmul.mubr.bf16.gmra.mrb[0].mxu0 %v298
  %v456 = vpop.f32.mrb[0].mxu0
  %v457 = vadd.f32 0.0, %v456
  %v458 = vpop.f32.mrb[0].mxu0
  %v459 = vpop.f32.mrb[0].mxu0
  %v460 = vadd.f32 0.0, %v459
  %v461 = vpop.f32.mrb[0].mxu0
  %462 = vmatprep.mubr.bf16.mxu0 0
  %463 = vmatmul.mubr.bf16.gmra.mrb[0].mxu0 %v301
  %v464 = vpop.f32.mrb[0].mxu0
  %v465 = vadd.f32 0.0, %v464
  %v466 = vpop.f32.mrb[0].mxu0
  %v467 = vpop.f32.mrb[0].mxu0
  %v468 = vadd.f32 0.0, %v467
  %v469 = vpop.f32.mrb[0].mxu0
  %470 = vmatprep.mubr.bf16.mxu0 0
  %471 = vmatmul.mubr.bf16.gmra.mrb[0].mxu0 %v304
  %v472 = vpop.f32.mrb[0].mxu0
  %v473 = vadd.f32 0.0, %v472
  %v474 = vpop.f32.mrb[0].mxu0
  %v475 = vpop.f32.mrb[0].mxu0
  %v476 = vadd.f32 0.0, %v475
  %v477 = vpop.f32.mrb[0].mxu0
  %478 = vmatprep.mubr.bf16.mxu0 0
  %479 = vmatmul.mubr.bf16.gmra.mrb[0].mxu0 %v307
  %v480 = vpop.f32.mrb[0].mxu0
  %v481 = vadd.f32 0.0, %v480
  %v482 = vpop.f32.mrb[0].mxu0
  %v483 = vpop.f32.mrb[0].mxu0
  %v484 = vadd.f32 0.0, %v483
  %v485 = vpop.f32.mrb[0].mxu0
  %486 = vmatprep.mubr.bf16.mxu0 0
  %487 = vmatmul.mubr.bf16.gmra.mrb[0].mxu0 %v310
  %v488 = vpop.f32.mrb[0].mxu0
  %v489 = vadd.f32 0.0, %v488
  %v490 = vpop.f32.mrb[0].mxu0
  %v491 = vpop.f32.mrb[0].mxu0
  %v492 = vadd.f32 0.0, %v491
  %v493 = vpop.f32.mrb[0].mxu0
  %494 = vmatprep.mubr.bf16.mxu0 0
  %495 = vmatmul.mubr.bf16.gmra.mrb[0].mxu0 %v313
  %v496 = vpop.f32.mrb[0].mxu0
  %v497 = vadd.f32 0.0, %v496
  %v498 = vpop.f32.mrb[0].mxu0
  %v499 = vpop.f32.mrb[0].mxu0
  %v500 = vadd.f32 0.0, %v499
  %v501 = vpop.f32.mrb[0].mxu0
  %502 = vmatprep.mubr.bf16.mxu0 0
  %503 = vmatmul.mubr.bf16.gmra.mrb[0].mxu0 %v316
  %v504 = vpop.f32.mrb[0].mxu0
  %v505 = vadd.f32 0.0, %v504
  %v506 = vpop.f32.mrb[0].mxu0
  %v507 = vpop.f32.mrb[0].mxu0
  %v508 = vadd.f32 0.0, %v507
  %v509 = vpop.f32.mrb[0].mxu0
  %510 = vmatprep.mubr.bf16.mxu0 0
  %511 = vmatmul.mubr.bf16.gmra.mrb[0].mxu0 %v319
  %v512 = vpop.f32.mrb[0].mxu0
  %v513 = vadd.f32 0.0, %v512
  %v514 = vpop.f32.mrb[0].mxu0
  %v515 = vpop.f32.mrb[0].mxu0
  %v516 = vadd.f32 0.0, %v515
  %v517 = vpop.f32.mrb[0].mxu0
  %518 = vmatprep.mubr.bf16.mxu0 0
  %519 = vmatmul.mubr.bf16.gmra.mrb[0].mxu0 %v322
  %v520 = vpop.f32.mrb[0].mxu0
  %v521 = vadd.f32 0.0, %v520
  %v522 = vpop.f32.mrb[0].mxu0
  %v523 = vpop.f32.mrb[0].mxu0
  %v524 = vadd.f32 0.0, %v523
  %v525 = vpop.f32.mrb[0].mxu0
  %526 = vmatprep.mubr.bf16.mxu0 0
  %527 = vmatmul.mubr.bf16.gmra.mrb[0].mxu0 %v325
  %v528 = vpop.f32.mrb[0].mxu0
  %v529 = vadd.f32 0.0, %v528
  %v530 = vpop.f32.mrb[0].mxu0
  %v531 = vpop.f32.mrb[0].mxu0
  %v532 = vadd.f32 0.0, %v531
  %v533 = vpop.f32.mrb[0].mxu0
  %534 = vmatprep.mubr.bf16.mxu0 0
  %535 = vmatmul.mubr.bf16.gmra.mrb[0].mxu0 %v328
  %v536 = vpop.f32.mrb[0].mxu0
  %v537 = vadd.f32 0.0, %v536
  %v538 = vpop.f32.mrb[0].mxu0
  %v539 = vpop.f32.mrb[0].mxu0
  %v540 = vadd.f32 0.0, %v539
  %v541 = vpop.f32.mrb[0].mxu0
  %542 = vmatprep.mubr.bf16.mxu0 0
  %543 = vmatmul.mubr.bf16.gmra.mrb[0].mxu0 %v331
  %v544 = vpop.f32.mrb[0].mxu0
  %v545 = vadd.f32 0.0, %v544
  %v546 = vpop.f32.mrb[0].mxu0
  %v547 = vpop.f32.mrb[0].mxu0
  %v548 = vadd.f32 0.0, %v547
  %v549 = vpop.f32.mrb[0].mxu0
  %550 = vmatprep.mubr.bf16.mxu0 0
  %551 = vmatmul.mubr.bf16.gmra.mrb[0].mxu0 %v334
  %v552 = vpop.f32.mrb[0].mxu0
  %v553 = vadd.f32 0.0, %v552
  %v554 = vpop.f32.mrb[0].mxu0
  %v555 = vpop.f32.mrb[0].mxu0
  %v556 = vadd.f32 0.0, %v555
  %v557 = vpop.f32.mrb[0].mxu0
  %558 = vmatprep.mubr.bf16.mxu0 0
  %559 = vmatmul.mubr.bf16.gmra.mrb[0].mxu0 %v337
  %v560 = vpop.f32.mrb[0].mxu0
  %v561 = vadd.f32 0.0, %v560
  %v562 = vpop.f32.mrb[0].mxu0
  %v563 = vpop.f32.mrb[0].mxu0
  %v564 = vadd.f32 0.0, %v563
  %v565 = vpop.f32.mrb[0].mxu0
  %566 = vmatprep.mubr.bf16.mxu0 0
  %567 = vmatmul.mubr.bf16.gmra.mrb[0].mxu0 %v340
  %v568 = vpop.f32.mrb[0].mxu0
  %v569 = vadd.f32 0.0, %v568
  %v570 = vpop.f32.mrb[0].mxu0
  %v571 = vpop.f32.mrb[0].mxu0
  %v572 = vadd.f32 0.0, %v571
  %v573 = vpop.f32.mrb[0].mxu0
  %574 = vmatprep.mubr.bf16.mxu0 0
  %575 = vmatmul.mubr.bf16.gmra.mrb[0].mxu0 %v343
  %v576 = vpop.f32.mrb[0].mxu0
  %v577 = vadd.f32 0.0, %v576
  %v578 = vpop.f32.mrb[0].mxu0
  %v579 = vpop.f32.mrb[0].mxu0
  %v580 = vadd.f32 0.0, %v579
  %v581 = vpop.f32.mrb[0].mxu0
  %582 = vmatprep.mubr.bf16.mxu0 0
  %583 = vmatmul.mubr.bf16.gmra.mrb[0].mxu0 %v346
  %v584 = vpop.f32.mrb[0].mxu0
  %v585 = vadd.f32 0.0, %v584
  %v586 = vpop.f32.mrb[0].mxu0
  %v587 = vpop.f32.mrb[0].mxu0
  %v588 = vadd.f32 0.0, %v587
  %v589 = vpop.f32.mrb[0].mxu0
  %590 = vmatprep.mubr.bf16.mxu0 0
  %591 = vmatmul.mubr.bf16.gmra.mrb[0].mxu0 %v349
  %v592 = vpop.f32.mrb[0].mxu0
  %v593 = vadd.f32 0.0, %v592
  %v594 = vpop.f32.mrb[0].mxu0
  %v595 = vpop.f32.mrb[0].mxu0
  %v596 = vadd.f32 0.0, %v595
  %v597 = vpop.f32.mrb[0].mxu0
  %598 = vmatprep.mubr.bf16.mxu0 0
  %599 = vmatmul.mubr.bf16.gmra.mrb[0].mxu0 %v352
  %v600 = vpop.f32.mrb[0].mxu0
  %v601 = vadd.f32 0.0, %v600
  %v602 = vpop.f32.mrb[0].mxu0
  %v603 = vpop.f32.mrb[0].mxu0
  %v604 = vadd.f32 0.0, %v603
  %v605 = vpop.f32.mrb[0].mxu0
  %606 = vmatprep.mubr.bf16.mxu0 0
  %607 = vmatmul.mubr.bf16.gmra.mrb[0].mxu0 %v355
  %v608 = vpop.f32.mrb[0].mxu0
  %v609 = vadd.f32 0.0, %v608
  %v610 = vpop.f32.mrb[0].mxu0
  %v611 = vpop.f32.mrb[0].mxu0
  %v612 = vadd.f32 0.0, %v611
  %v613 = vpop.f32.mrb[0].mxu0
  %614 = vmatprep.mubr.bf16.mxu0 0
  %615 = vmatmul.mubr.bf16.gmra.mrb[0].mxu0 %v358
  %v616 = vpop.f32.mrb[0].mxu0
  %v617 = vadd.f32 0.0, %v616
  %v618 = vpop.f32.mrb[0].mxu0
  %v619 = vpop.f32.mrb[0].mxu0
  %v620 = vadd.f32 0.0, %v619
  %v621 = vpop.f32.mrb[0].mxu0
  %622 = vmatprep.mubr.bf16.mxu0 0
  %623 = vmatmul.mubr.bf16.gmra.mrb[0].mxu0 %v361
  %v624 = vpop.f32.mrb[0].mxu0
  %v625 = vadd.f32 0.0, %v624
  %v626 = vpop.f32.mrb[0].mxu0
  %v627 = vpop.f32.mrb[0].mxu0
  %v628 = vadd.f32 0.0, %v627
  %v629 = vpop.f32.mrb[0].mxu0
  %630 = vmatprep.mubr.bf16.mxu0 0
  %631 = vmatmul.mubr.bf16.gmra.mrb[0].mxu0 %v364
  %v632 = vpop.f32.mrb[0].mxu0
  %v633 = vadd.f32 0.0, %v632
  %v634 = vpop.f32.mrb[0].mxu0
  %v635 = vpop.f32.mrb[0].mxu0
  %v636 = vadd.f32 0.0, %v635
  %v637 = vpop.f32.mrb[0].mxu0
  %638 = vmatprep.mubr.bf16.mxu0 0
  %639 = vmatmul.mubr.bf16.gmra.mrb[0].mxu0 %v367
  %v640 = vpop.f32.mrb[0].mxu0
  %v641 = vadd.f32 0.0, %v640
  %v642 = vpop.f32.mrb[0].mxu0
  %v643 = vpop.f32.mrb[0].mxu0
  %v644 = vadd.f32 0.0, %v643
  %v645 = vpop.f32.mrb[0].mxu0
  %646 = vmatprep.mubr.bf16.mxu0 0
  %647 = vmatmul.mubr.bf16.gmra.mrb[0].mxu0 %v370
  %v648 = vpop.f32.mrb[0].mxu0
  %v649 = vadd.f32 0.0, %v648
  %v650 = vpop.f32.mrb[0].mxu0
  %v651 = vpop.f32.mrb[0].mxu0
  %v652 = vadd.f32 0.0, %v651
  %v653 = vpop.f32.mrb[0].mxu0
  %654 = vmatprep.mubr.bf16.mxu0 0
  %655 = vmatmul.mubr.bf16.gmra.mrb[0].mxu0 %v373
  %v656 = vpop.f32.mrb[0].mxu0
  %v657 = vadd.f32 0.0, %v656
  %v658 = vpop.f32.mrb[0].mxu0
  %v659 = vpop.f32.mrb[0].mxu0
  %v660 = vadd.f32 0.0, %v659
  %v661 = vpop.f32.mrb[0].mxu0
  %662 = vmatprep.mubr.bf16.mxu0 0
  %663 = vmatmul.mubr.bf16.gmra.mrb[0].mxu0 %v376
  %v664 = vpop.f32.mrb[0].mxu0
  %v665 = vadd.f32 0.0, %v664
  %v666 = vpop.f32.mrb[0].mxu0
  %v667 = vpop.f32.mrb[0].mxu0
  %v668 = vadd.f32 0.0, %v667
  %v669 = vpop.f32.mrb[0].mxu0
  %670 = vdwg.mxu0
  %671 = vst [vmem:[%s2] sm:$0xff] %v417
  %672 = vst [vmem:[%s2 + $0x8] sm:$0xff] %v420
  %673 = vst [vmem:[%s2 + $0x10] sm:$0xff] %v425
  %674 = vst [vmem:[%s2 + $0x18] sm:$0xff] %v428
  %675 = vst [vmem:[%s2 + $0x20] sm:$0xff] %v433
  %676 = vst [vmem:[%s2 + $0x28] sm:$0xff] %v436
  %677 = vst [vmem:[%s2 + $0x30] sm:$0xff] %v441
  %678 = vst [vmem:[%s2 + $0x38] sm:$0xff] %v444
  %679 = vst [vmem:[%s2 + $0x40] sm:$0xff] %v449
  %680 = vst [vmem:[%s2 + $0x48] sm:$0xff] %v452
  %681 = vst [vmem:[%s2 + $0x50] sm:$0xff] %v457
  %682 = vst [vmem:[%s2 + $0x58] sm:$0xff] %v460
  %683 = vst [vmem:[%s2 + $0x60] sm:$0xff] %v465
  %684 = vst [vmem:[%s2 + $0x68] sm:$0xff] %v468
  %685 = vst [vmem:[%s2 + $0x70] sm:$0xff] %v473
  %686 = vst [vmem:[%s2 + $0x78] sm:$0xff] %v476
  %687 = vst [vmem:[%s2 + $0x80] sm:$0xff] %v481
  %688 = vst [vmem:[%s2 + $0x88] sm:$0xff] %v484
  %689 = vst [vmem:[%s2 + $0x90] sm:$0xff] %v489
  %690 = vst [vmem:[%s2 + $0x98] sm:$0xff] %v492
  %691 = vst [vmem:[%s2 + $0xa0] sm:$0xff] %v497
  %692 = vst [vmem:[%s2 + $0xa8] sm:$0xff] %v500
  %693 = vst [vmem:[%s2 + $0xb0] sm:$0xff] %v505
  %694 = vst [vmem:[%s2 + $0xb8] sm:$0xff] %v508
  %695 = vst [vmem:[%s2 + $0xc0] sm:$0xff] %v513
  %696 = vst [vmem:[%s2 + $0xc8] sm:$0xff] %v516
  %697 = vst [vmem:[%s2 + $0xd0] sm:$0xff] %v521
  %698 = vst [vmem:[%s2 + $0xd8] sm:$0xff] %v524
  %699 = vst [vmem:[%s2 + $0xe0] sm:$0xff] %v529
  %700 = vst [vmem:[%s2 + $0xe8] sm:$0xff] %v532
  %701 = vst [vmem:[%s2 + $0xf0] sm:$0xff] %v537
  %702 = vst [vmem:[%s2 + $0xf8] sm:$0xff] %v540
  %703 = vst [vmem:[%s2 + $0x100] sm:$0xff] %v545
  %704 = vst [vmem:[%s2 + $0x108] sm:$0xff] %v548
  %705 = vst [vmem:[%s2 + $0x110] sm:$0xff] %v553
  %706 = vst [vmem:[%s2 + $0x118] sm:$0xff] %v556
  %707 = vst [vmem:[%s2 + $0x120] sm:$0xff] %v561
  %708 = vst [vmem:[%s2 + $0x128] sm:$0xff] %v564
  %709 = vst [vmem:[%s2 + $0x130] sm:$0xff] %v569
  %710 = vst [vmem:[%s2 + $0x138] sm:$0xff] %v572
  %711 = vst [vmem:[%s2 + $0x140] sm:$0xff] %v577
  %712 = vst [vmem:[%s2 + $0x148] sm:$0xff] %v580
  %713 = vst [vmem:[%s2 + $0x150] sm:$0xff] %v585
  %714 = vst [vmem:[%s2 + $0x158] sm:$0xff] %v588
  %715 = vst [vmem:[%s2 + $0x160] sm:$0xff] %v593
  %716 = vst [vmem:[%s2 + $0x168] sm:$0xff] %v596
  %717 = vst [vmem:[%s2 + $0x170] sm:$0xff] %v601
  %718 = vst [vmem:[%s2 + $0x178] sm:$0xff] %v604
  %719 = vst [vmem:[%s2 + $0x180] sm:$0xff] %v609
  %720 = vst [vmem:[%s2 + $0x188] sm:$0xff] %v612
  %721 = vst [vmem:[%s2 + $0x190] sm:$0xff] %v617
  %722 = vst [vmem:[%s2 + $0x198] sm:$0xff] %v620
  %723 = vst [vmem:[%s2 + $0x1a0] sm:$0xff] %v625
  %724 = vst [vmem:[%s2 + $0x1a8] sm:$0xff] %v628
  %725 = vst [vmem:[%s2 + $0x1b0] sm:$0xff] %v633
  %726 = vst [vmem:[%s2 + $0x1b8] sm:$0xff] %v636
  %727 = vst [vmem:[%s2 + $0x1c0] sm:$0xff] %v641
  %728 = vst [vmem:[%s2 + $0x1c8] sm:$0xff] %v644
  %729 = vst [vmem:[%s2 + $0x1d0] sm:$0xff] %v649
  %730 = vst [vmem:[%s2 + $0x1d8] sm:$0xff] %v652
  %731 = vst [vmem:[%s2 + $0x1e0] sm:$0xff] %v657
  %732 = vst [vmem:[%s2 + $0x1e8] sm:$0xff] %v660
  %733 = vst [vmem:[%s2 + $0x1f0] sm:$0xff] %v665
  %734 = vst [vmem:[%s2 + $0x1f8] sm:$0xff] %v668
  %v735 = vld [vmem:[%s3] sm:$0x1]
  %v736 = vadd.f32 %v417, %v420
  %v737 = vadd.f32 %v736, %v425
  %v738 = vadd.f32 %v737, %v428
  %v739 = vadd.f32 %v738, %v433
  %v740 = vadd.f32 %v739, %v436
  %v741 = vadd.f32 %v740, %v441
  %v742 = vadd.f32 %v741, %v444
  %v743 = vadd.f32 %v742, %v449
  %v744 = vadd.f32 %v743, %v452
  %v745 = vadd.f32 %v744, %v457
  %v746 = vadd.f32 %v745, %v460
  %v747 = vadd.f32 %v746, %v465
  %v748 = vadd.f32 %v747, %v468
  %v749 = vadd.f32 %v748, %v473
  %v750 = vadd.f32 %v749, %v476
  %v751 = vadd.f32 %v750, %v481
  %v752 = vadd.f32 %v751, %v484
  %v753 = vadd.f32 %v752, %v489
  %v754 = vadd.f32 %v753, %v492
  %v755 = vadd.f32 %v754, %v497
  %v756 = vadd.f32 %v755, %v500
  %v757 = vadd.f32 %v756, %v505
  %v758 = vadd.f32 %v757, %v508
  %v759 = vadd.f32 %v758, %v513
  %v760 = vadd.f32 %v759, %v516
  %v761 = vadd.f32 %v760, %v521
  %v762 = vadd.f32 %v761, %v524
  %v763 = vadd.f32 %v762, %v529
  %v764 = vadd.f32 %v763, %v532
  %v765 = vadd.f32 %v764, %v537
  %v766 = vadd.f32 %v765, %v540
  %v767 = vadd.f32 %v766, %v545
  %v768 = vadd.f32 %v767, %v548
  %v769 = vadd.f32 %v768, %v553
  %v770 = vadd.f32 %v769, %v556
  %v771 = vadd.f32 %v770, %v561
  %v772 = vadd.f32 %v771, %v564
  %v773 = vadd.f32 %v772, %v569
  %v774 = vadd.f32 %v773, %v572
  %v775 = vadd.f32 %v774, %v577
  %v776 = vadd.f32 %v775, %v580
  %v777 = vadd.f32 %v776, %v585
  %v778 = vadd.f32 %v777, %v588
  %v779 = vadd.f32 %v778, %v593
  %v780 = vadd.f32 %v779, %v596
  %v781 = vadd.f32 %v780, %v601
  %v782 = vadd.f32 %v781, %v604
  %v783 = vadd.f32 %v782, %v609
  %v784 = vadd.f32 %v783, %v612
  %v785 = vadd.f32 %v784, %v617
  %v786 = vadd.f32 %v785, %v620
  %v787 = vadd.f32 %v786, %v625
  %v788 = vadd.f32 %v787, %v628
  %v789 = vadd.f32 %v788, %v633
  %v790 = vadd.f32 %v789, %v636
  %v791 = vadd.f32 %v790, %v641
  %v792 = vadd.f32 %v791, %v644
  %v793 = vadd.f32 %v792, %v649
  %v794 = vadd.f32 %v793, %v652
  %v795 = vadd.f32 %v794, %v657
  %v796 = vadd.f32 %v795, %v660
  %v797 = vadd.f32 %v796, %v665
  %v798 = vadd.f32 %v797, %v668
  %v799 = vrot.slane %v798, 4
  %v800 = vadd.f32 %v798, %v799
  %v801 = vrot.slane %v800, 2
  %v802 = vadd.f32 %v800, %v801
  %v803 = vrot.slane %v802, 1
  %v804 = vadd.f32 %v802, %v803
  %v805 = vadd.f32 %v735, %v804
  %806 = vst [vmem:[%s3] sm:$0x1] %v805
  %v807 = vld [vmem:[%s4] sm:$0x1]
  %v808 = vmul.f32 %v417, %v417
  %v809 = vmul.f32 %v420, %v420
  %v810 = vmul.f32 %v425, %v425
  %v811 = vmul.f32 %v428, %v428
  %v812 = vmul.f32 %v433, %v433
  %v813 = vmul.f32 %v436, %v436
  %v814 = vmul.f32 %v441, %v441
  %v815 = vmul.f32 %v444, %v444
  %v816 = vmul.f32 %v449, %v449
  %v817 = vmul.f32 %v452, %v452
  %v818 = vmul.f32 %v457, %v457
  %v819 = vmul.f32 %v460, %v460
  %v820 = vmul.f32 %v465, %v465
  %v821 = vmul.f32 %v468, %v468
  %v822 = vmul.f32 %v473, %v473
  %v823 = vmul.f32 %v476, %v476
  %v824 = vmul.f32 %v481, %v481
  %v825 = vmul.f32 %v484, %v484
  %v826 = vmul.f32 %v489, %v489
  %v827 = vmul.f32 %v492, %v492
  %v828 = vmul.f32 %v497, %v497
  %v829 = vmul.f32 %v500, %v500
  %v830 = vmul.f32 %v505, %v505
  %v831 = vmul.f32 %v508, %v508
  %v832 = vmul.f32 %v513, %v513
  %v833 = vmul.f32 %v516, %v516
  %v834 = vmul.f32 %v521, %v521
  %v835 = vmul.f32 %v524, %v524
  %v836 = vmul.f32 %v529, %v529
  %v837 = vmul.f32 %v532, %v532
  %v838 = vmul.f32 %v537, %v537
  %v839 = vmul.f32 %v540, %v540
  %v840 = vmul.f32 %v545, %v545
  %v841 = vmul.f32 %v548, %v548
  %v842 = vmul.f32 %v553, %v553
  %v843 = vmul.f32 %v556, %v556
  %v844 = vmul.f32 %v561, %v561
  %v845 = vmul.f32 %v564, %v564
  %v846 = vmul.f32 %v569, %v569
  %v847 = vmul.f32 %v572, %v572
  %v848 = vmul.f32 %v577, %v577
  %v849 = vmul.f32 %v580, %v580
  %v850 = vmul.f32 %v585, %v585
  %v851 = vmul.f32 %v588, %v588
  %v852 = vmul.f32 %v593, %v593
  %v853 = vmul.f32 %v596, %v596
  %v854 = vmul.f32 %v601, %v601
  %v855 = vmul.f32 %v604, %v604
  %v856 = vmul.f32 %v609, %v609
  %v857 = vmul.f32 %v612, %v612
  %v858 = vmul.f32 %v617, %v617
  %v859 = vmul.f32 %v620, %v620
  %v860 = vmul.f32 %v625, %v625
  %v861 = vmul.f32 %v628, %v628
  %v862 = vmul.f32 %v633, %v633
  %v863 = vmul.f32 %v636, %v636
  %v864 = vmul.f32 %v641, %v641
  %v865 = vmul.f32 %v644, %v644
  %v866 = vmul.f32 %v649, %v649
  %v867 = vmul.f32 %v652, %v652
  %v868 = vmul.f32 %v657, %v657
  %v869 = vmul.f32 %v660, %v660
  %v870 = vmul.f32 %v665, %v665
  %v871 = vmul.f32 %v668, %v668
  %v872 = vadd.f32 %v808, %v809
  %v873 = vadd.f32 %v872, %v810
  %v874 = vadd.f32 %v873, %v811
  %v875 = vadd.f32 %v874, %v812
  %v876 = vadd.f32 %v875, %v813
  %v877 = vadd.f32 %v876, %v814
  %v878 = vadd.f32 %v877, %v815
  %v879 = vadd.f32 %v878, %v816
  %v880 = vadd.f32 %v879, %v817
  %v881 = vadd.f32 %v880, %v818
  %v882 = vadd.f32 %v881, %v819
  %v883 = vadd.f32 %v882, %v820
  %v884 = vadd.f32 %v883, %v821
  %v885 = vadd.f32 %v884, %v822
  %v886 = vadd.f32 %v885, %v823
  %v887 = vadd.f32 %v886, %v824
  %v888 = vadd.f32 %v887, %v825
  %v889 = vadd.f32 %v888, %v826
  %v890 = vadd.f32 %v889, %v827
  %v891 = vadd.f32 %v890, %v828
  %v892 = vadd.f32 %v891, %v829
  %v893 = vadd.f32 %v892, %v830
  %v894 = vadd.f32 %v893, %v831
  %v895 = vadd.f32 %v894, %v832
  %v896 = vadd.f32 %v895, %v833
  %v897 = vadd.f32 %v896, %v834
  %v898 = vadd.f32 %v897, %v835
  %v899 = vadd.f32 %v898, %v836
  %v900 = vadd.f32 %v899, %v837
  %v901 = vadd.f32 %v900, %v838
  %v902 = vadd.f32 %v901, %v839
  %v903 = vadd.f32 %v902, %v840
  %v904 = vadd.f32 %v903, %v841
  %v905 = vadd.f32 %v904, %v842
  %v906 = vadd.f32 %v905, %v843
  %v907 = vadd.f32 %v906, %v844
  %v908 = vadd.f32 %v907, %v845
  %v909 = vadd.f32 %v908, %v846
  %v910 = vadd.f32 %v909, %v847
  %v911 = vadd.f32 %v910, %v848
  %v912 = vadd.f32 %v911, %v849
  %v913 = vadd.f32 %v912, %v850
  %v914 = vadd.f32 %v913, %v851
  %v915 = vadd.f32 %v914, %v852
  %v916 = vadd.f32 %v915, %v853
  %v917 = vadd.f32 %v916, %v854
  %v918 = vadd.f32 %v917, %v855
  %v919 = vadd.f32 %v918, %v856
  %v920 = vadd.f32 %v919, %v857
  %v921 = vadd.f32 %v920, %v858
  %v922 = vadd.f32 %v921, %v859
  %v923 = vadd.f32 %v922, %v860
  %v924 = vadd.f32 %v923, %v861
  %v925 = vadd.f32 %v924, %v862
  %v926 = vadd.f32 %v925, %v863
  %v927 = vadd.f32 %v926, %v864
  %v928 = vadd.f32 %v927, %v865
  %v929 = vadd.f32 %v928, %v866
  %v930 = vadd.f32 %v929, %v867
  %v931 = vadd.f32 %v930, %v868
  %v932 = vadd.f32 %v931, %v869
  %v933 = vadd.f32 %v932, %v870
  %v934 = vadd.f32 %v933, %v871
  %v935 = vrot.slane %v934, 4
  %v936 = vadd.f32 %v934, %v935
  %v937 = vrot.slane %v936, 2
  %v938 = vadd.f32 %v936, %v937
  %v939 = vrot.slane %v938, 1
  %v940 = vadd.f32 %v938, %v939
  %v941 = vadd.f32 %v807, %v940
  %942 = vst [vmem:[%s4] sm:$0x1] %v941
  // Predicated region
  $region14: #{resblk_forward.6} parent=0 // pred_check
    _
  $region15: #{resblk_forward.6} parent=0 // pred_check_branch
    %944 = sbr.rel (0) target = $region17
  $region16: #{resblk_forward.6} parent=0 // pred_region
    _
  $region17: #{resblk_forward.6} parent=0 // pred_fallthru
    _
  // Predicated region
  $region18: #{resblk_forward.6} parent=0 // pred_check
    _
  $region19: #{resblk_forward.6} parent=0 // pred_check_branch
    %946 = sbr.rel (0) target = $region21
  $region20: #{resblk_forward.6} parent=0 // pred_region
    _
  $region21: #{resblk_forward.6} parent=0 // pred_fallthru
    _
  // Predicated region
  $region22: #{resblk_forward.6} parent=0 // pred_check
    _
  $region23: #{resblk_forward.6} parent=0 // pred_check_branch
    %948 = sbr.rel (0) target = $region25
  $region24: #{resblk_forward.6} parent=0 // pred_region
    _
  $region25: #{resblk_forward.6} parent=0 // pred_fallthru
    _
  // Predicated region
  $region26: #{resblk_forward.6} parent=0 // pred_check
    _
  $region27: #{resblk_forward.6} parent=0 // pred_check_branch
    %950 = sbr.rel (0) target = $region29
  $region28: #{resblk_forward.6} parent=0 // pred_region
    _
  $region29: #{resblk_forward.6} parent=0 // pred_fallthru
    _
  // Predicated region
  $region30: #{resblk_forward.6} parent=0 // pred_check
    _
  $region31: #{resblk_forward.6} parent=0 // pred_check_branch
    %952 = sbr.rel (0) target = $region33
  $region32: #{resblk_forward.6} parent=0 // pred_region
    _
  $region33: #{resblk_forward.6} parent=0 // pred_fallthru
    _
  // Predicated region
  $region34: #{resblk_forward.6} parent=0 // pred_check
    _
  $region35: #{resblk_forward.6} parent=0 // pred_check_branch
    %954 = sbr.rel (0) target = $region37
  $region36: #{resblk_forward.6} parent=0 // pred_region
    _
  $region37: #{resblk_forward.6} parent=0 // pred_fallthru
    _

// kernel: resblk_forward.7
$region0: #{resblk_forward.7}
  #allocation0 [shape = 'u32[]', space=smem, size = 0x4, offset = 0x4, fixed_abs, tag = 'smem constant byte address 0x4 - core index']
  #allocation1 [shape = 'u32[144,128]{1,0:T(1,128)}', space=vmem, size = 0x12000, scoped, tag = 'internal scratch']
  %s0 = inlined_call_operand.vmem [shape: f32[512,128], index: 0, kind: input, shape index: {}]
  %s1 = inlined_call_operand.vmem [shape: f32[1,128], index: 1, kind: input, shape index: {}]
  %s2 = inlined_call_operand.vmem [shape: f32[1,128], index: 2, kind: input, shape index: {}]
  %s3 = inlined_call_operand.vmem [shape: f32[512,128], index: 3, kind: input, shape index: {}]
  %s4 = inlined_call_operand.vmem [shape: f32[1,128], index: 4, kind: input, shape index: {}]
  %s5 = inlined_call_operand.vmem [shape: f32[1,128], index: 5, kind: input, shape index: {}]
  %s6 = inlined_call_operand.vmem [shape: f32[512,128], index: 6, kind: output, shape index: {}]
  %s7 = sld [smem:[#allocation0]]
  $region34: #{resblk_forward.7} parent=0
    _
  %s9 = ssub.s32 1, %s7
  %s10 = scalar_select 0, %s9, %s7
  // Predicated region
  $region2: #{resblk_forward.7} parent=0 // pred_check
    _
  $region3: #{resblk_forward.7} parent=0 // pred_check_branch
    %12 = sbr.rel (0) target = $region5
  $region4: #{resblk_forward.7} parent=0 // pred_region
    _
  $region5: #{resblk_forward.7} parent=0 // pred_fallthru
    _
  // Predicated region
  $region6: #{resblk_forward.7} parent=0 // pred_check
    _
  $region7: #{resblk_forward.7} parent=0 // pred_check_branch
    %14 = sbr.rel (0) target = $region9
  $region8: #{resblk_forward.7} parent=0 // pred_region
    _
  $region9: #{resblk_forward.7} parent=0 // pred_fallthru
    _
  // Predicated region
  $region10: #{resblk_forward.7} parent=0 // pred_check
    _
  $region11: #{resblk_forward.7} parent=0 // pred_check_branch
    %16 = sbr.rel (0) target = $region13
  $region12: #{resblk_forward.7} parent=0 // pred_region
    _
  $region13: #{resblk_forward.7} parent=0 // pred_fallthru
    _
  // Predicated region
  $region14: #{resblk_forward.7} parent=0 // pred_check
    _
  $region15: #{resblk_forward.7} parent=0 // pred_check_branch
    %18 = sbr.rel (0) target = $region17
  $region16: #{resblk_forward.7} parent=0 // pred_region
    _
  $region17: #{resblk_forward.7} parent=0 // pred_fallthru
    _
  // Predicated region
  $region18: #{resblk_forward.7} parent=0 // pred_check
    _
  $region19: #{resblk_forward.7} parent=0 // pred_check_branch
    %20 = sbr.rel (0) target = $region21
  $region20: #{resblk_forward.7} parent=0 // pred_region
    _
  $region21: #{resblk_forward.7} parent=0 // pred_fallthru
    _
  // Predicated region
  $region22: #{resblk_forward.7} parent=0 // pred_check
    _
  $region23: #{resblk_forward.7} parent=0 // pred_check_branch
    %22 = sbr.rel (0) target = $region25
  $region24: #{resblk_forward.7} parent=0 // pred_region
    _
  $region25: #{resblk_forward.7} parent=0 // pred_fallthru
    _
  %v23 = vld [vmem:[%s0] sm:$0xff]
  %v24 = vld [vmem:[%s0 + $0x8] sm:$0xff]
  %v25 = vld [vmem:[%s0 + $0x10] sm:$0xff]
  %v26 = vld [vmem:[%s0 + $0x18] sm:$0xff]
  %v27 = vld [vmem:[%s0 + $0x20] sm:$0xff]
  %v28 = vld [vmem:[%s0 + $0x28] sm:$0xff]
  %v29 = vld [vmem:[%s0 + $0x30] sm:$0xff]
  %v30 = vld [vmem:[%s0 + $0x38] sm:$0xff]
  %v31 = vld [vmem:[%s0 + $0x40] sm:$0xff]
  %v32 = vld [vmem:[%s0 + $0x48] sm:$0xff]
  %v33 = vld [vmem:[%s0 + $0x50] sm:$0xff]
  %v34 = vld [vmem:[%s0 + $0x58] sm:$0xff]
  %v35 = vld [vmem:[%s0 + $0x60] sm:$0xff]
  %v36 = vld [vmem:[%s0 + $0x68] sm:$0xff]
  %v37 = vld [vmem:[%s0 + $0x70] sm:$0xff]
  %v38 = vld [vmem:[%s0 + $0x78] sm:$0xff]
  %v39 = vld [vmem:[%s0 + $0x80] sm:$0xff]
  %v40 = vld [vmem:[%s0 + $0x88] sm:$0xff]
  %v41 = vld [vmem:[%s0 + $0x90] sm:$0xff]
  %v42 = vld [vmem:[%s0 + $0x98] sm:$0xff]
  %v43 = vld [vmem:[%s0 + $0xa0] sm:$0xff]
  %v44 = vld [vmem:[%s0 + $0xa8] sm:$0xff]
  %v45 = vld [vmem:[%s0 + $0xb0] sm:$0xff]
  %v46 = vld [vmem:[%s0 + $0xb8] sm:$0xff]
  %v47 = vld [vmem:[%s0 + $0xc0] sm:$0xff]
  %v48 = vld [vmem:[%s0 + $0xc8] sm:$0xff]
  %v49 = vld [vmem:[%s0 + $0xd0] sm:$0xff]
  %v50 = vld [vmem:[%s0 + $0xd8] sm:$0xff]
  %v51 = vld [vmem:[%s0 + $0xe0] sm:$0xff]
  %v52 = vld [vmem:[%s0 + $0xe8] sm:$0xff]
  %v53 = vld [vmem:[%s0 + $0xf0] sm:$0xff]
  %v54 = vld [vmem:[%s0 + $0xf8] sm:$0xff]
  %v55 = vld [vmem:[%s0 + $0x100] sm:$0xff]
  %v56 = vld [vmem:[%s0 + $0x108] sm:$0xff]
  %v57 = vld [vmem:[%s0 + $0x110] sm:$0xff]
  %v58 = vld [vmem:[%s0 + $0x118] sm:$0xff]
  %v59 = vld [vmem:[%s0 + $0x120] sm:$0xff]
  %v60 = vld [vmem:[%s0 + $0x128] sm:$0xff]
  %v61 = vld [vmem:[%s0 + $0x130] sm:$0xff]
  %v62 = vld [vmem:[%s0 + $0x138] sm:$0xff]
  %v63 = vld [vmem:[%s0 + $0x140] sm:$0xff]
  %v64 = vld [vmem:[%s0 + $0x148] sm:$0xff]
  %v65 = vld [vmem:[%s0 + $0x150] sm:$0xff]
  %v66 = vld [vmem:[%s0 + $0x158] sm:$0xff]
  %v67 = vld [vmem:[%s0 + $0x160] sm:$0xff]
  %v68 = vld [vmem:[%s0 + $0x168] sm:$0xff]
  %v69 = vld [vmem:[%s0 + $0x170] sm:$0xff]
  %v70 = vld [vmem:[%s0 + $0x178] sm:$0xff]
  %v71 = vld [vmem:[%s0 + $0x180] sm:$0xff]
  %v72 = vld [vmem:[%s0 + $0x188] sm:$0xff]
  %v73 = vld [vmem:[%s0 + $0x190] sm:$0xff]
  %v74 = vld [vmem:[%s0 + $0x198] sm:$0xff]
  %v75 = vld [vmem:[%s0 + $0x1a0] sm:$0xff]
  %v76 = vld [vmem:[%s0 + $0x1a8] sm:$0xff]
  %v77 = vld [vmem:[%s0 + $0x1b0] sm:$0xff]
  %v78 = vld [vmem:[%s0 + $0x1b8] sm:$0xff]
  %v79 = vld [vmem:[%s0 + $0x1c0] sm:$0xff]
  %v80 = vld [vmem:[%s0 + $0x1c8] sm:$0xff]
  %v81 = vld [vmem:[%s0 + $0x1d0] sm:$0xff]
  %v82 = vld [vmem:[%s0 + $0x1d8] sm:$0xff]
  %v83 = vld [vmem:[%s0 + $0x1e0] sm:$0xff]
  %v84 = vld [vmem:[%s0 + $0x1e8] sm:$0xff]
  %v85 = vld [vmem:[%s0 + $0x1f0] sm:$0xff]
  %v86 = vld [vmem:[%s0 + $0x1f8] sm:$0xff]
  %v87 = vld [vmem:[%s1] sm:$0x1]
  %v89 = vlaneseq
  %v90 = vshrl.u32 %v89, 7
  %v91 = vsub.s32 0, %v90
  %v92 = vrot.slane %v87, %v91
  %v94 = vmul.f32 %v23, %v92
  %v95 = vmul.f32 %v24, %v92
  %v96 = vmul.f32 %v25, %v92
  %v97 = vmul.f32 %v26, %v92
  %v98 = vmul.f32 %v27, %v92
  %v99 = vmul.f32 %v28, %v92
  %v100 = vmul.f32 %v29, %v92
  %v101 = vmul.f32 %v30, %v92
  %v102 = vmul.f32 %v31, %v92
  %v103 = vmul.f32 %v32, %v92
  %v104 = vmul.f32 %v33, %v92
  %v105 = vmul.f32 %v34, %v92
  %v106 = vmul.f32 %v35, %v92
  %v107 = vmul.f32 %v36, %v92
  %v108 = vmul.f32 %v37, %v92
  %v109 = vmul.f32 %v38, %v92
  %v110 = vmul.f32 %v39, %v92
  %v111 = vmul.f32 %v40, %v92
  %v112 = vmul.f32 %v41, %v92
  %v113 = vmul.f32 %v42, %v92
  %v114 = vmul.f32 %v43, %v92
  %v115 = vmul.f32 %v44, %v92
  %v116 = vmul.f32 %v45, %v92
  %v117 = vmul.f32 %v46, %v92
  %v118 = vmul.f32 %v47, %v92
  %v119 = vmul.f32 %v48, %v92
  %v120 = vmul.f32 %v49, %v92
  %v121 = vmul.f32 %v50, %v92
  %v122 = vmul.f32 %v51, %v92
  %v123 = vmul.f32 %v52, %v92
  %v124 = vmul.f32 %v53, %v92
  %v125 = vmul.f32 %v54, %v92
  %v126 = vmul.f32 %v55, %v92
  %v127 = vmul.f32 %v56, %v92
  %v128 = vmul.f32 %v57, %v92
  %v129 = vmul.f32 %v58, %v92
  %v130 = vmul.f32 %v59, %v92
  %v131 = vmul.f32 %v60, %v92
  %v132 = vmul.f32 %v61, %v92
  %v133 = vmul.f32 %v62, %v92
  %v134 = vmul.f32 %v63, %v92
  %v135 = vmul.f32 %v64, %v92
  %v136 = vmul.f32 %v65, %v92
  %v137 = vmul.f32 %v66, %v92
  %v138 = vmul.f32 %v67, %v92
  %v139 = vmul.f32 %v68, %v92
  %v140 = vmul.f32 %v69, %v92
  %v141 = vmul.f32 %v70, %v92
  %v142 = vmul.f32 %v71, %v92
  %v143 = vmul.f32 %v72, %v92
  %v144 = vmul.f32 %v73, %v92
  %v145 = vmul.f32 %v74, %v92
  %v146 = vmul.f32 %v75, %v92
  %v147 = vmul.f32 %v76, %v92
  %v148 = vmul.f32 %v77, %v92
  %v149 = vmul.f32 %v78, %v92
  %v150 = vmul.f32 %v79, %v92
  %v151 = vmul.f32 %v80, %v92
  %v152 = vmul.f32 %v81, %v92
  %v153 = vmul.f32 %v82, %v92
  %v154 = vmul.f32 %v83, %v92
  %v155 = vmul.f32 %v84, %v92
  %v156 = vmul.f32 %v85, %v92
  %v157 = vmul.f32 %v86, %v92
  %v158 = vld [vmem:[%s2] sm:$0x1]
  %v160 = vlaneseq
  %v161 = vshrl.u32 %v160, 7
  %v162 = vsub.s32 0, %v161
  %v163 = vrot.slane %v158, %v162
  %v165 = vadd.f32 %v94, %v163
  %v166 = vadd.f32 %v95, %v163
  %v167 = vadd.f32 %v96, %v163
  %v168 = vadd.f32 %v97, %v163
  %v169 = vadd.f32 %v98, %v163
  %v170 = vadd.f32 %v99, %v163
  %v171 = vadd.f32 %v100, %v163
  %v172 = vadd.f32 %v101, %v163
  %v173 = vadd.f32 %v102, %v163
  %v174 = vadd.f32 %v103, %v163
  %v175 = vadd.f32 %v104, %v163
  %v176 = vadd.f32 %v105, %v163
  %v177 = vadd.f32 %v106, %v163
  %v178 = vadd.f32 %v107, %v163
  %v179 = vadd.f32 %v108, %v163
  %v180 = vadd.f32 %v109, %v163
  %v181 = vadd.f32 %v110, %v163
  %v182 = vadd.f32 %v111, %v163
  %v183 = vadd.f32 %v112, %v163
  %v184 = vadd.f32 %v113, %v163
  %v185 = vadd.f32 %v114, %v163
  %v186 = vadd.f32 %v115, %v163
  %v187 = vadd.f32 %v116, %v163
  %v188 = vadd.f32 %v117, %v163
  %v189 = vadd.f32 %v118, %v163
  %v190 = vadd.f32 %v119, %v163
  %v191 = vadd.f32 %v120, %v163
  %v192 = vadd.f32 %v121, %v163
  %v193 = vadd.f32 %v122, %v163
  %v194 = vadd.f32 %v123, %v163
  %v195 = vadd.f32 %v124, %v163
  %v196 = vadd.f32 %v125, %v163
  %v197 = vadd.f32 %v126, %v163
  %v198 = vadd.f32 %v127, %v163
  %v199 = vadd.f32 %v128, %v163
  %v200 = vadd.f32 %v129, %v163
  %v201 = vadd.f32 %v130, %v163
  %v202 = vadd.f32 %v131, %v163
  %v203 = vadd.f32 %v132, %v163
  %v204 = vadd.f32 %v133, %v163
  %v205 = vadd.f32 %v134, %v163
  %v206 = vadd.f32 %v135, %v163
  %v207 = vadd.f32 %v136, %v163
  %v208 = vadd.f32 %v137, %v163
  %v209 = vadd.f32 %v138, %v163
  %v210 = vadd.f32 %v139, %v163
  %v211 = vadd.f32 %v140, %v163
  %v212 = vadd.f32 %v141, %v163
  %v213 = vadd.f32 %v142, %v163
  %v214 = vadd.f32 %v143, %v163
  %v215 = vadd.f32 %v144, %v163
  %v216 = vadd.f32 %v145, %v163
  %v217 = vadd.f32 %v146, %v163
  %v218 = vadd.f32 %v147, %v163
  %v219 = vadd.f32 %v148, %v163
  %v220 = vadd.f32 %v149, %v163
  %v221 = vadd.f32 %v150, %v163
  %v222 = vadd.f32 %v151, %v163
  %v223 = vadd.f32 %v152, %v163
  %v224 = vadd.f32 %v153, %v163
  %v225 = vadd.f32 %v154, %v163
  %v226 = vadd.f32 %v155, %v163
  %v227 = vadd.f32 %v156, %v163
  %v228 = vadd.f32 %v157, %v163
  %v229 = vld [vmem:[%s3] sm:$0xff]
  %v230 = vld [vmem:[%s3 + $0x8] sm:$0xff]
  %v231 = vld [vmem:[%s3 + $0x10] sm:$0xff]
  %v232 = vld [vmem:[%s3 + $0x18] sm:$0xff]
  %v233 = vld [vmem:[%s3 + $0x20] sm:$0xff]
  %v234 = vld [vmem:[%s3 + $0x28] sm:$0xff]
  %v235 = vld [vmem:[%s3 + $0x30] sm:$0xff]
  %v236 = vld [vmem:[%s3 + $0x38] sm:$0xff]
  %v237 = vld [vmem:[%s3 + $0x40] sm:$0xff]
  %v238 = vld [vmem:[%s3 + $0x48] sm:$0xff]
  %v239 = vld [vmem:[%s3 + $0x50] sm:$0xff]
  %v240 = vld [vmem:[%s3 + $0x58] sm:$0xff]
  %v241 = vld [vmem:[%s3 + $0x60] sm:$0xff]
  %v242 = vld [vmem:[%s3 + $0x68] sm:$0xff]
  %v243 = vld [vmem:[%s3 + $0x70] sm:$0xff]
  %v244 = vld [vmem:[%s3 + $0x78] sm:$0xff]
  %v245 = vld [vmem:[%s3 + $0x80] sm:$0xff]
  %v246 = vld [vmem:[%s3 + $0x88] sm:$0xff]
  %v247 = vld [vmem:[%s3 + $0x90] sm:$0xff]
  %v248 = vld [vmem:[%s3 + $0x98] sm:$0xff]
  %v249 = vld [vmem:[%s3 + $0xa0] sm:$0xff]
  %v250 = vld [vmem:[%s3 + $0xa8] sm:$0xff]
  %v251 = vld [vmem:[%s3 + $0xb0] sm:$0xff]
  %v252 = vld [vmem:[%s3 + $0xb8] sm:$0xff]
  %v253 = vld [vmem:[%s3 + $0xc0] sm:$0xff]
  %v254 = vld [vmem:[%s3 + $0xc8] sm:$0xff]
  %v255 = vld [vmem:[%s3 + $0xd0] sm:$0xff]
  %v256 = vld [vmem:[%s3 + $0xd8] sm:$0xff]
  %v257 = vld [vmem:[%s3 + $0xe0] sm:$0xff]
  %v258 = vld [vmem:[%s3 + $0xe8] sm:$0xff]
  %v259 = vld [vmem:[%s3 + $0xf0] sm:$0xff]
  %v260 = vld [vmem:[%s3 + $0xf8] sm:$0xff]
  %v261 = vld [vmem:[%s3 + $0x100] sm:$0xff]
  %v262 = vld [vmem:[%s3 + $0x108] sm:$0xff]
  %v263 = vld [vmem:[%s3 + $0x110] sm:$0xff]
  %v264 = vld [vmem:[%s3 + $0x118] sm:$0xff]
  %v265 = vld [vmem:[%s3 + $0x120] sm:$0xff]
  %v266 = vld [vmem:[%s3 + $0x128] sm:$0xff]
  %v267 = vld [vmem:[%s3 + $0x130] sm:$0xff]
  %v268 = vld [vmem:[%s3 + $0x138] sm:$0xff]
  %v269 = vld [vmem:[%s3 + $0x140] sm:$0xff]
  %v270 = vld [vmem:[%s3 + $0x148] sm:$0xff]
  %v271 = vld [vmem:[%s3 + $0x150] sm:$0xff]
  %v272 = vld [vmem:[%s3 + $0x158] sm:$0xff]
  %v273 = vld [vmem:[%s3 + $0x160] sm:$0xff]
  %v274 = vld [vmem:[%s3 + $0x168] sm:$0xff]
  %v275 = vld [vmem:[%s3 + $0x170] sm:$0xff]
  %v276 = vld [vmem:[%s3 + $0x178] sm:$0xff]
  %v277 = vld [vmem:[%s3 + $0x180] sm:$0xff]
  %v278 = vld [vmem:[%s3 + $0x188] sm:$0xff]
  %v279 = vld [vmem:[%s3 + $0x190] sm:$0xff]
  %v280 = vld [vmem:[%s3 + $0x198] sm:$0xff]
  %v281 = vld [vmem:[%s3 + $0x1a0] sm:$0xff]
  %v282 = vld [vmem:[%s3 + $0x1a8] sm:$0xff]
  %v283 = vld [vmem:[%s3 + $0x1b0] sm:$0xff]
  %v284 = vld [vmem:[%s3 + $0x1b8] sm:$0xff]
  %v285 = vld [vmem:[%s3 + $0x1c0] sm:$0xff]
  %v286 = vld [vmem:[%s3 + $0x1c8] sm:$0xff]
  %v287 = vld [vmem:[%s3 + $0x1d0] sm:$0xff]
  %v288 = vld [vmem:[%s3 + $0x1d8] sm:$0xff]
  %v289 = vld [vmem:[%s3 + $0x1e0] sm:$0xff]
  %v290 = vld [vmem:[%s3 + $0x1e8] sm:$0xff]
  %v291 = vld [vmem:[%s3 + $0x1f0] sm:$0xff]
  %v292 = vld [vmem:[%s3 + $0x1f8] sm:$0xff]
  %v293 = vld [vmem:[%s4] sm:$0x1]
  %v295 = vlaneseq
  %v296 = vshrl.u32 %v295, 7
  %v297 = vsub.s32 0, %v296
  %v298 = vrot.slane %v293, %v297
  %v300 = vmul.f32 %v229, %v298
  %v301 = vmul.f32 %v230, %v298
  %v302 = vmul.f32 %v231, %v298
  %v303 = vmul.f32 %v232, %v298
  %v304 = vmul.f32 %v233, %v298
  %v305 = vmul.f32 %v234, %v298
  %v306 = vmul.f32 %v235, %v298
  %v307 = vmul.f32 %v236, %v298
  %v308 = vmul.f32 %v237, %v298
  %v309 = vmul.f32 %v238, %v298
  %v310 = vmul.f32 %v239, %v298
  %v311 = vmul.f32 %v240, %v298
  %v312 = vmul.f32 %v241, %v298
  %v313 = vmul.f32 %v242, %v298
  %v314 = vmul.f32 %v243, %v298
  %v315 = vmul.f32 %v244, %v298
  %v316 = vmul.f32 %v245, %v298
  %v317 = vmul.f32 %v246, %v298
  %v318 = vmul.f32 %v247, %v298
  %v319 = vmul.f32 %v248, %v298
  %v320 = vmul.f32 %v249, %v298
  %v321 = vmul.f32 %v250, %v298
  %v322 = vmul.f32 %v251, %v298
  %v323 = vmul.f32 %v252, %v298
  %v324 = vmul.f32 %v253, %v298
  %v325 = vmul.f32 %v254, %v298
  %v326 = vmul.f32 %v255, %v298
  %v327 = vmul.f32 %v256, %v298
  %v328 = vmul.f32 %v257, %v298
  %v329 = vmul.f32 %v258, %v298
  %v330 = vmul.f32 %v259, %v298
  %v331 = vmul.f32 %v260, %v298
  %v332 = vmul.f32 %v261, %v298
  %v333 = vmul.f32 %v262, %v298
  %v334 = vmul.f32 %v263, %v298
  %v335 = vmul.f32 %v264, %v298
  %v336 = vmul.f32 %v265, %v298
  %v337 = vmul.f32 %v266, %v298
  %v338 = vmul.f32 %v267, %v298
  %v339 = vmul.f32 %v268, %v298
  %v340 = vmul.f32 %v269, %v298
  %v341 = vmul.f32 %v270, %v298
  %v342 = vmul.f32 %v271, %v298
  %v343 = vmul.f32 %v272, %v298
  %v344 = vmul.f32 %v273, %v298
  %v345 = vmul.f32 %v274, %v298
  %v346 = vmul.f32 %v275, %v298
  %v347 = vmul.f32 %v276, %v298
  %v348 = vmul.f32 %v277, %v298
  %v349 = vmul.f32 %v278, %v298
  %v350 = vmul.f32 %v279, %v298
  %v351 = vmul.f32 %v280, %v298
  %v352 = vmul.f32 %v281, %v298
  %v353 = vmul.f32 %v282, %v298
  %v354 = vmul.f32 %v283, %v298
  %v355 = vmul.f32 %v284, %v298
  %v356 = vmul.f32 %v285, %v298
  %v357 = vmul.f32 %v286, %v298
  %v358 = vmul.f32 %v287, %v298
  %v359 = vmul.f32 %v288, %v298
  %v360 = vmul.f32 %v289, %v298
  %v361 = vmul.f32 %v290, %v298
  %v362 = vmul.f32 %v291, %v298
  %v363 = vmul.f32 %v292, %v298
  %v364 = vadd.f32 %v165, %v300
  %v365 = vadd.f32 %v166, %v301
  %v366 = vadd.f32 %v167, %v302
  %v367 = vadd.f32 %v168, %v303
  %v368 = vadd.f32 %v169, %v304
  %v369 = vadd.f32 %v170, %v305
  %v370 = vadd.f32 %v171, %v306
  %v371 = vadd.f32 %v172, %v307
  %v372 = vadd.f32 %v173, %v308
  %v373 = vadd.f32 %v174, %v309
  %v374 = vadd.f32 %v175, %v310
  %v375 = vadd.f32 %v176, %v311
  %v376 = vadd.f32 %v177, %v312
  %v377 = vadd.f32 %v178, %v313
  %v378 = vadd.f32 %v179, %v314
  %v379 = vadd.f32 %v180, %v315
  %v380 = vadd.f32 %v181, %v316
  %v381 = vadd.f32 %v182, %v317
  %v382 = vadd.f32 %v183, %v318
  %v383 = vadd.f32 %v184, %v319
  %v384 = vadd.f32 %v185, %v320
  %v385 = vadd.f32 %v186, %v321
  %v386 = vadd.f32 %v187, %v322
  %v387 = vadd.f32 %v188, %v323
  %v388 = vadd.f32 %v189, %v324
  %v389 = vadd.f32 %v190, %v325
  %v390 = vadd.f32 %v191, %v326
  %v391 = vadd.f32 %v192, %v327
  %v392 = vadd.f32 %v193, %v328
  %v393 = vadd.f32 %v194, %v329
  %v394 = vadd.f32 %v195, %v330
  %v395 = vadd.f32 %v196, %v331
  %v396 = vadd.f32 %v197, %v332
  %v397 = vadd.f32 %v198, %v333
  %v398 = vadd.f32 %v199, %v334
  %v399 = vadd.f32 %v200, %v335
  %v400 = vadd.f32 %v201, %v336
  %v401 = vadd.f32 %v202, %v337
  %v402 = vadd.f32 %v203, %v338
  %v403 = vadd.f32 %v204, %v339
  %v404 = vadd.f32 %v205, %v340
  %v405 = vadd.f32 %v206, %v341
  %v406 = vadd.f32 %v207, %v342
  %v407 = vadd.f32 %v208, %v343
  %v408 = vadd.f32 %v209, %v344
  %v409 = vadd.f32 %v210, %v345
  %v410 = vadd.f32 %v211, %v346
  %v411 = vadd.f32 %v212, %v347
  %v412 = vadd.f32 %v213, %v348
  %v413 = vadd.f32 %v214, %v349
  %v414 = vadd.f32 %v215, %v350
  %v415 = vadd.f32 %v216, %v351
  %v416 = vadd.f32 %v217, %v352
  %v417 = vadd.f32 %v218, %v353
  %v418 = vadd.f32 %v219, %v354
  %v419 = vadd.f32 %v220, %v355
  %v420 = vadd.f32 %v221, %v356
  %v421 = vadd.f32 %v222, %v357
  %v422 = vadd.f32 %v223, %v358
  %v423 = vadd.f32 %v224, %v359
  %v424 = vadd.f32 %v225, %v360
  %v425 = vadd.f32 %v226, %v361
  %v426 = vadd.f32 %v227, %v362
  %v427 = vadd.f32 %v228, %v363
  %v428 = vld [vmem:[%s5] sm:$0x1]
  %v430 = vlaneseq
  %v431 = vshrl.u32 %v430, 7
  %v432 = vsub.s32 0, %v431
  %v433 = vrot.slane %v428, %v432
  %v435 = vadd.f32 %v364, %v433
  %v436 = vadd.f32 %v365, %v433
  %v437 = vadd.f32 %v366, %v433
  %v438 = vadd.f32 %v367, %v433
  %v439 = vadd.f32 %v368, %v433
  %v440 = vadd.f32 %v369, %v433
  %v441 = vadd.f32 %v370, %v433
  %v442 = vadd.f32 %v371, %v433
  %v443 = vadd.f32 %v372, %v433
  %v444 = vadd.f32 %v373, %v433
  %v445 = vadd.f32 %v374, %v433
  %v446 = vadd.f32 %v375, %v433
  %v447 = vadd.f32 %v376, %v433
  %v448 = vadd.f32 %v377, %v433
  %v449 = vadd.f32 %v378, %v433
  %v450 = vadd.f32 %v379, %v433
  %v451 = vadd.f32 %v380, %v433
  %v452 = vadd.f32 %v381, %v433
  %v453 = vadd.f32 %v382, %v433
  %v454 = vadd.f32 %v383, %v433
  %v455 = vadd.f32 %v384, %v433
  %v456 = vadd.f32 %v385, %v433
  %v457 = vadd.f32 %v386, %v433
  %v458 = vadd.f32 %v387, %v433
  %v459 = vadd.f32 %v388, %v433
  %v460 = vadd.f32 %v389, %v433
  %v461 = vadd.f32 %v390, %v433
  %v462 = vadd.f32 %v391, %v433
  %v463 = vadd.f32 %v392, %v433
  %v464 = vadd.f32 %v393, %v433
  %v465 = vadd.f32 %v394, %v433
  %v466 = vadd.f32 %v395, %v433
  %v467 = vadd.f32 %v396, %v433
  %v468 = vadd.f32 %v397, %v433
  %v469 = vadd.f32 %v398, %v433
  %v470 = vadd.f32 %v399, %v433
  %v471 = vadd.f32 %v400, %v433
  %v472 = vadd.f32 %v401, %v433
  %v473 = vadd.f32 %v402, %v433
  %v474 = vadd.f32 %v403, %v433
  %v475 = vadd.f32 %v404, %v433
  %v476 = vadd.f32 %v405, %v433
  %v477 = vadd.f32 %v406, %v433
  %v478 = vadd.f32 %v407, %v433
  %v479 = vadd.f32 %v408, %v433
  %v480 = vadd.f32 %v409, %v433
  %v481 = vadd.f32 %v410, %v433
  %v482 = vadd.f32 %v411, %v433
  %v483 = vadd.f32 %v412, %v433
  %v484 = vadd.f32 %v413, %v433
  %v485 = vadd.f32 %v414, %v433
  %v486 = vadd.f32 %v415, %v433
  %v487 = vadd.f32 %v416, %v433
  %v488 = vadd.f32 %v417, %v433
  %v489 = vadd.f32 %v418, %v433
  %v490 = vadd.f32 %v419, %v433
  %v491 = vadd.f32 %v420, %v433
  %v492 = vadd.f32 %v421, %v433
  %v493 = vadd.f32 %v422, %v433
  %v494 = vadd.f32 %v423, %v433
  %v495 = vadd.f32 %v424, %v433
  %v496 = vadd.f32 %v425, %v433
  %v497 = vadd.f32 %v426, %v433
  %v498 = vadd.f32 %v427, %v433
  %v499 = vmax.f32 %v435, 0.0
  %v500 = vmax.f32 %v436, 0.0
  %v501 = vmax.f32 %v437, 0.0
  %v502 = vmax.f32 %v438, 0.0
  %v503 = vmax.f32 %v439, 0.0
  %v504 = vmax.f32 %v440, 0.0
  %v505 = vmax.f32 %v441, 0.0
  %v506 = vmax.f32 %v442, 0.0
  %v507 = vmax.f32 %v443, 0.0
  %v508 = vmax.f32 %v444, 0.0
  %v509 = vmax.f32 %v445, 0.0
  %v510 = vmax.f32 %v446, 0.0
  %v511 = vmax.f32 %v447, 0.0
  %v512 = vmax.f32 %v448, 0.0
  %v513 = vmax.f32 %v449, 0.0
  %v514 = vmax.f32 %v450, 0.0
  %v515 = vmax.f32 %v451, 0.0
  %v516 = vmax.f32 %v452, 0.0
  %v517 = vmax.f32 %v453, 0.0
  %v518 = vmax.f32 %v454, 0.0
  %v519 = vmax.f32 %v455, 0.0
  %v520 = vmax.f32 %v456, 0.0
  %v521 = vmax.f32 %v457, 0.0
  %v522 = vmax.f32 %v458, 0.0
  %v523 = vmax.f32 %v459, 0.0
  %v524 = vmax.f32 %v460, 0.0
  %v525 = vmax.f32 %v461, 0.0
  %v526 = vmax.f32 %v462, 0.0
  %v527 = vmax.f32 %v463, 0.0
  %v528 = vmax.f32 %v464, 0.0
  %v529 = vmax.f32 %v465, 0.0
  %v530 = vmax.f32 %v466, 0.0
  %v531 = vmax.f32 %v467, 0.0
  %v532 = vmax.f32 %v468, 0.0
  %v533 = vmax.f32 %v469, 0.0
  %v534 = vmax.f32 %v470, 0.0
  %v535 = vmax.f32 %v471, 0.0
  %v536 = vmax.f32 %v472, 0.0
  %v537 = vmax.f32 %v473, 0.0
  %v538 = vmax.f32 %v474, 0.0
  %v539 = vmax.f32 %v475, 0.0
  %v540 = vmax.f32 %v476, 0.0
  %v541 = vmax.f32 %v477, 0.0
  %v542 = vmax.f32 %v478, 0.0
  %v543 = vmax.f32 %v479, 0.0
  %v544 = vmax.f32 %v480, 0.0
  %v545 = vmax.f32 %v481, 0.0
  %v546 = vmax.f32 %v482, 0.0
  %v547 = vmax.f32 %v483, 0.0
  %v548 = vmax.f32 %v484, 0.0
  %v549 = vmax.f32 %v485, 0.0
  %v550 = vmax.f32 %v486, 0.0
  %v551 = vmax.f32 %v487, 0.0
  %v552 = vmax.f32 %v488, 0.0
  %v553 = vmax.f32 %v489, 0.0
  %v554 = vmax.f32 %v490, 0.0
  %v555 = vmax.f32 %v491, 0.0
  %v556 = vmax.f32 %v492, 0.0
  %v557 = vmax.f32 %v493, 0.0
  %v558 = vmax.f32 %v494, 0.0
  %v559 = vmax.f32 %v495, 0.0
  %v560 = vmax.f32 %v496, 0.0
  %v561 = vmax.f32 %v497, 0.0
  %v562 = vmax.f32 %v498, 0.0
  %563 = vst [vmem:[%s6] sm:$0xff] %v499
  %564 = vst [vmem:[%s6 + $0x8] sm:$0xff] %v500
  %565 = vst [vmem:[%s6 + $0x10] sm:$0xff] %v501
  %566 = vst [vmem:[%s6 + $0x18] sm:$0xff] %v502
  %567 = vst [vmem:[%s6 + $0x20] sm:$0xff] %v503
  %568 = vst [vmem:[%s6 + $0x28] sm:$0xff] %v504
  %569 = vst [vmem:[%s6 + $0x30] sm:$0xff] %v505
  %570 = vst [vmem:[%s6 + $0x38] sm:$0xff] %v506
  %571 = vst [vmem:[%s6 + $0x40] sm:$0xff] %v507
  %572 = vst [vmem:[%s6 + $0x48] sm:$0xff] %v508
  %573 = vst [vmem:[%s6 + $0x50] sm:$0xff] %v509
  %574 = vst [vmem:[%s6 + $0x58] sm:$0xff] %v510
  %575 = vst [vmem:[%s6 + $0x60] sm:$0xff] %v511
  %576 = vst [vmem:[%s6 + $0x68] sm:$0xff] %v512
  %577 = vst [vmem:[%s6 + $0x70] sm:$0xff] %v513
  %578 = vst [vmem:[%s6 + $0x78] sm:$0xff] %v514
  %579 = vst [vmem:[%s6 + $0x80] sm:$0xff] %v515
  %580 = vst [vmem:[%s6 + $0x88] sm:$0xff] %v516
  %581 = vst [vmem:[%s6 + $0x90] sm:$0xff] %v517
  %582 = vst [vmem:[%s6 + $0x98] sm:$0xff] %v518
  %583 = vst [vmem:[%s6 + $0xa0] sm:$0xff] %v519
  %584 = vst [vmem:[%s6 + $0xa8] sm:$0xff] %v520
  %585 = vst [vmem:[%s6 + $0xb0] sm:$0xff] %v521
  %586 = vst [vmem:[%s6 + $0xb8] sm:$0xff] %v522
  %587 = vst [vmem:[%s6 + $0xc0] sm:$0xff] %v523
  %588 = vst [vmem:[%s6 + $0xc8] sm:$0xff] %v524
  %589 = vst [vmem:[%s6 + $0xd0] sm:$0xff] %v525
  %590 = vst [vmem:[%s6 + $0xd8] sm:$0xff] %v526
  %591 = vst [vmem:[%s6 + $0xe0] sm:$0xff] %v527
  %592 = vst [vmem:[%s6 + $0xe8] sm:$0xff] %v528
  %593 = vst [vmem:[%s6 + $0xf0] sm:$0xff] %v529
  %594 = vst [vmem:[%s6 + $0xf8] sm:$0xff] %v530
  %595 = vst [vmem:[%s6 + $0x100] sm:$0xff] %v531
  %596 = vst [vmem:[%s6 + $0x108] sm:$0xff] %v532
  %597 = vst [vmem:[%s6 + $0x110] sm:$0xff] %v533
  %598 = vst [vmem:[%s6 + $0x118] sm:$0xff] %v534
  %599 = vst [vmem:[%s6 + $0x120] sm:$0xff] %v535
  %600 = vst [vmem:[%s6 + $0x128] sm:$0xff] %v536
  %601 = vst [vmem:[%s6 + $0x130] sm:$0xff] %v537
  %602 = vst [vmem:[%s6 + $0x138] sm:$0xff] %v538
  %603 = vst [vmem:[%s6 + $0x140] sm:$0xff] %v539
  %604 = vst [vmem:[%s6 + $0x148] sm:$0xff] %v540
  %605 = vst [vmem:[%s6 + $0x150] sm:$0xff] %v541
  %606 = vst [vmem:[%s6 + $0x158] sm:$0xff] %v542
  %607 = vst [vmem:[%s6 + $0x160] sm:$0xff] %v543
  %608 = vst [vmem:[%s6 + $0x168] sm:$0xff] %v544
  %609 = vst [vmem:[%s6 + $0x170] sm:$0xff] %v545
  %610 = vst [vmem:[%s6 + $0x178] sm:$0xff] %v546
  %611 = vst [vmem:[%s6 + $0x180] sm:$0xff] %v547
  %612 = vst [vmem:[%s6 + $0x188] sm:$0xff] %v548
  %613 = vst [vmem:[%s6 + $0x190] sm:$0xff] %v549
  %614 = vst [vmem:[%s6 + $0x198] sm:$0xff] %v550
  %615 = vst [vmem:[%s6 + $0x1a0] sm:$0xff] %v551
  %616 = vst [vmem:[%s6 + $0x1a8] sm:$0xff] %v552
  %617 = vst [vmem:[%s6 + $0x1b0] sm:$0xff] %v553
  %618 = vst [vmem:[%s6 + $0x1b8] sm:$0xff] %v554
  %619 = vst [vmem:[%s6 + $0x1c0] sm:$0xff] %v555
  %620 = vst [vmem:[%s6 + $0x1c8] sm:$0xff] %v556
  %621 = vst [vmem:[%s6 + $0x1d0] sm:$0xff] %v557
  %622 = vst [vmem:[%s6 + $0x1d8] sm:$0xff] %v558
  %623 = vst [vmem:[%s6 + $0x1e0] sm:$0xff] %v559
  %624 = vst [vmem:[%s6 + $0x1e8] sm:$0xff] %v560
  %625 = vst [vmem:[%s6 + $0x1f0] sm:$0xff] %v561
  %626 = vst [vmem:[%s6 + $0x1f8] sm:$0xff] %v562
  // Predicated region
  $region26: #{resblk_forward.7} parent=0 // pred_check
    _
  $region27: #{resblk_forward.7} parent=0 // pred_check_branch
    %628 = sbr.rel (0) target = $region29
  $region28: #{resblk_forward.7} parent=0 // pred_region
    _
  $region29: #{resblk_forward.7} parent=0 // pred_fallthru
    _
  // Predicated region
  $region30: #{resblk_forward.7} parent=0 // pred_check
    _
  $region31: #{resblk_forward.7} parent=0 // pred_check_branch
    %630 = sbr.rel (0) target = $region33
  $region32: #{resblk_forward.7} parent=0 // pred_region
    _
  $region33: #{resblk_forward.7} parent=0 // pred_fallthru
    _

</llo_original>
